<compile_context>
chip_gen: v7x
topology: tpu7x:2x2x1
jax: 0.10.0
libtpu: 0.0.40
codegen_flags: <defaults>
</compile_context>

<pallas_src>
import functools

import jax
import jax.numpy as jnp
from jax.experimental import pallas as pl
from jax.experimental.pallas import tpu as pltpu

LEAKY_SLOPE = 0.2
BN_EPS = 1e-5


def _round_up(x, m):
    return (x + m - 1) // m * m


# ----------------------------------------------------------------------------------
# Kernel 1: single-K-step matmul + fused per-channel affine + optional LeakyReLU
#           (layer 1: bias+leaky; layer 5: bias only; eval-mode BN layers: folded BN)
# ----------------------------------------------------------------------------------
def _matmul_affine_kernel(p_ref, w_ref, s_ref, b_ref, o_ref, *, leaky):
    z = jnp.dot(p_ref[...], w_ref[...], preferred_element_type=jnp.float32)
    y = z * s_ref[...] + b_ref[...]
    if leaky:
        y = jnp.where(y >= 0.0, y, LEAKY_SLOPE * y)
    o_ref[...] = y.astype(o_ref.dtype)


def _matmul_affine(p_pad, wmat, scale_pad, shift_pad, *, leaky, out_dtype):
    mp, kp = p_pad.shape
    np_ = wmat.shape[1]
    # >= 2 parallel M blocks when there is enough work (keeps both v7x cores busy);
    # otherwise one whole-layer block (grid-step overhead dominates at these sizes).
    tm = mp // 2 if (mp >= 512 and (mp // 2) % 8 == 0) else mp
    grid = (mp // tm,)

    return pl.pallas_call(
        functools.partial(_matmul_affine_kernel, leaky=leaky),
        out_shape=jax.ShapeDtypeStruct((mp, np_), out_dtype),
        grid_spec=pltpu.PrefetchScalarGridSpec(
            num_scalar_prefetch=0,
            grid=grid,
            in_specs=[
                pl.BlockSpec((tm, kp), lambda i: (i, 0)),
                pl.BlockSpec((kp, np_), lambda i: (0, 0)),
                pl.BlockSpec((1, np_), lambda i: (0, 0)),
                pl.BlockSpec((1, np_), lambda i: (0, 0)),
            ],
            out_specs=pl.BlockSpec((tm, np_), lambda i: (i, 0)),
        ),
        compiler_params=pltpu.CompilerParams(
            dimension_semantics=("parallel",)),
    )(p_pad, wmat, scale_pad, shift_pad)


# ----------------------------------------------------------------------------------
# Kernel 2: single-K-step matmul + in-kernel train-mode BatchNorm stats +
#           affine + LeakyReLU, all in one block (M <= 128, Cout <= 128 here)
# ----------------------------------------------------------------------------------
def _matmul_bn_lrelu_kernel(p_ref, w_ref, g_ref, b_ref, o_ref, *, inv_m):
    z = jnp.dot(p_ref[...], w_ref[...], preferred_element_type=jnp.float32)
    # Zero-padded M rows of P produce zero rows of z -> contribute nothing to the sums.
    mean = jnp.sum(z, axis=0, keepdims=True) * inv_m
    var = jnp.sum(z * z, axis=0, keepdims=True) * inv_m - mean * mean  # biased (PyTorch)
    inv = jax.lax.rsqrt(var + BN_EPS)
    scale = g_ref[...] * inv
    shift = b_ref[...] - mean * scale
    y = z * scale + shift
    y = jnp.where(y >= 0.0, y, LEAKY_SLOPE * y)
    o_ref[...] = y.astype(o_ref.dtype)


def _matmul_bn_lrelu(p_pad, wmat, gamma_pad, beta_pad, *, m_actual, out_dtype):
    mp, kp = p_pad.shape
    np_ = wmat.shape[1]

    return pl.pallas_call(
        functools.partial(_matmul_bn_lrelu_kernel, inv_m=1.0 / float(m_actual)),
        out_shape=jax.ShapeDtypeStruct((mp, np_), out_dtype),
        grid_spec=pltpu.PrefetchScalarGridSpec(
            num_scalar_prefetch=0,
            grid=(1,),
            in_specs=[
                pl.BlockSpec((mp, kp), lambda i: (0, 0)),
                pl.BlockSpec((kp, np_), lambda i: (0, 0)),
                pl.BlockSpec((1, np_), lambda i: (0, 0)),
                pl.BlockSpec((1, np_), lambda i: (0, 0)),
            ],
            out_specs=pl.BlockSpec((mp, np_), lambda i: (0, 0)),
        ),
        compiler_params=pltpu.CompilerParams(
            dimension_semantics=("arbitrary",)),
    )(p_pad, wmat, gamma_pad, beta_pad)


# ----------------------------------------------------------------------------------
# Host-side glue (NHWC end to end, bf16 activations, no per-layer transposes)
# ----------------------------------------------------------------------------------
def _im2col_nhwc(x, k, stride, pad, kp, mp):
    """x: NHWC -> zero-padded (mp, kp) patch matrix; K-order = (kh, kw, cin)."""
    n, h, w, c = x.shape
    xp = jnp.pad(x, ((0, 0), (pad, pad), (pad, pad), (0, 0)))
    ho = (h + 2 * pad - k) // stride + 1
    wo = (w + 2 * pad - k) // stride + 1
    cols = []
    for kh in range(k):
        for kw in range(k):
            cols.append(xp[:, kh:kh + stride * ho:stride, kw:kw + stride * wo:stride, :])
    patches = jnp.concatenate(cols, axis=-1).reshape(n * ho * wo, k * k * c)
    m = n * ho * wo
    p_pad = jnp.pad(patches, ((0, mp - m), (0, kp - k * k * c)))
    return p_pad, ho, wo, m


def _layer_config(in_nc, ndf, n_layers=3):
    # (cin, cout, stride, has_bias, has_bn, leaky) — mirrors the spec's __init__
    cfg = [(in_nc, ndf, 2, True, False, True)]
    nf_mult = 1
    for ln in range(1, n_layers):
        nf_prev, nf_mult = nf_mult, min(2 ** ln, 8)
        cfg.append((ndf * nf_prev, ndf * nf_mult, 2, False, True, True))
    nf_prev, nf_mult = nf_mult, min(2 ** n_layers, 8)
    cfg.append((ndf * nf_prev, ndf * nf_mult, 1, False, True, True))
    cfg.append((ndf * nf_mult, 1, 1, True, False, False))
    return cfg


def init_params(key, in_nc, ndf, n_layers=3):
    """Raw PyTorch-layout parameters."""
    params = []
    for (cin, cout, stride, has_bias, has_bn, leaky) in _layer_config(in_nc, ndf, n_layers):
        key, kw_, kb, kg, kbt, km, kv = jax.random.split(key, 7)
        layer = {
            "w": 0.02 * jax.random.normal(kw_, (cout, cin, 4, 4), jnp.float32),
            "stride": stride,
            "leaky": leaky,
            "has_bn": has_bn,
        }
        if has_bias:
            layer["b"] = 0.01 * jax.random.normal(kb, (cout,), jnp.float32)
        if has_bn:
            layer["gamma"] = 1.0 + 0.1 * jax.random.normal(kg, (cout,), jnp.float32)
            layer["beta"] = 0.1 * jax.random.normal(kbt, (cout,), jnp.float32)
            layer["mean"] = 0.1 * jax.random.normal(km, (cout,), jnp.float32)
            layer["var"] = jax.random.uniform(kv, (cout,), jnp.float32, 0.5, 1.5)
        params.append(layer)
    return params


def pack_params(params):
    """One-time weight packing: transpose -> (Kp, 128) pad -> bf16 cast, plus padded
    per-channel vectors (and eval-mode BN folded into scale/shift)."""
    packed = []
    for layer in params:
        w = layer["w"]                                    # (Cout, Cin, 4, 4)
        cout, cin, k, _ = w.shape
        kdim = k * k * cin
        kp = _round_up(kdim, 128)
        np_ = _round_up(cout, 128)

        wmat = w.transpose(2, 3, 1, 0).reshape(kdim, cout)   # K-order (kh, kw, cin)
        wmat = jnp.pad(wmat, ((0, kp - kdim), (0, np_ - cout))).astype(jnp.bfloat16)

        def pad1(v):
            return jnp.pad(v.astype(jnp.float32), (0, np_ - cout)).reshape(1, np_)

        entry = {
            "wmat": wmat, "stride": layer["stride"], "leaky": layer["leaky"],
            "has_bn": layer["has_bn"], "cout": cout, "kp": kp, "np": np_, "ksize": k,
        }
        if layer["has_bn"]:
            entry["gamma_pad"] = pad1(layer["gamma"])
            entry["beta_pad"] = pad1(layer["beta"])
            inv = jax.lax.rsqrt(layer["var"] + BN_EPS)
            es = layer["gamma"] * inv
            entry["eval_scale_pad"] = pad1(es)
            entry["eval_shift_pad"] = pad1(layer["beta"] - layer["mean"] * es)
        else:
            entry["scale_pad"] = pad1(jnp.ones((cout,), jnp.float32))
            entry["shift_pad"] = pad1(layer.get("b", jnp.zeros((cout,), jnp.float32)))
        packed.append(entry)
    return packed


def pixel_discriminator_forward(packed, x_nchw, training=True):
    """NCHW in / NCHW out (PyTorch module boundary); bf16 NHWC internally."""
    y = jnp.transpose(x_nchw, (0, 2, 3, 1)).astype(jnp.bfloat16)
    n = x_nchw.shape[0]
    n_layers = len(packed)

    for li, layer in enumerate(packed):
        is_last = li == n_layers - 1
        k, stride, cout = layer["ksize"], layer["stride"], layer["cout"]
        h, w = y.shape[1], y.shape[2]
        ho = (h + 2 - k) // stride + 1
        wo = (w + 2 - k) // stride + 1
        m = n * ho * wo
        mp = _round_up(m, 16)

        p_pad, ho, wo, m = _im2col_nhwc(y, k, stride, 1, layer["kp"], mp)
        out_dtype = jnp.float32 if is_last else jnp.bfloat16

        if layer["has_bn"] and training:
            # Fresh-module semantics: per-batch BN statistics, fused in-kernel.
            z = _matmul_bn_lrelu(p_pad, layer["wmat"], layer["gamma_pad"],
                                 layer["beta_pad"], m_actual=m, out_dtype=out_dtype)
        elif layer["has_bn"]:
            # Eval mode: running stats pre-folded into scale/shift at pack time.
            z = _matmul_affine(p_pad, layer["wmat"], layer["eval_scale_pad"],
                               layer["eval_shift_pad"], leaky=True, out_dtype=out_dtype)
        else:
            z = _matmul_affine(p_pad, layer["wmat"], layer["scale_pad"],
                               layer["shift_pad"], leaky=layer["leaky"],
                               out_dtype=out_dtype)

        # Single slice back to the true (M, Cout); stays NHWC between layers.
        y = z[:m, :cout].reshape(n, ho, wo, cout)

    return jnp.transpose(y, (0, 3, 1, 2))


if __name__ == "__main__":
    in_nc, ndf = 3, 16
    key = jax.random.PRNGKey(0)
    kx, kparam = jax.random.split(key)
    x = jax.random.normal(kx, (2, in_nc, 32, 32), jnp.float32)     # NCHW

    raw_params = init_params(kparam, in_nc, ndf, n_layers=3)
    params = pack_params(raw_params)                               # packed once, reused

    # training=True matches a freshly constructed PyTorch module (BatchNorm batch stats).
    fwd = jax.jit(lambda inp: pixel_discriminator_forward(params, inp, training=True))
    out = fwd(x)
    jax.block_until_ready(out)
    assert out.shape == (2, 1, 2, 2), out.shape    # 32 -> 16 -> 8 -> 4 -> 3 -> 2

    # Eval-mode path: running stats fully folded into the matmul epilogue.
    fwd_eval = jax.jit(lambda inp: pixel_discriminator_forward(params, inp, training=False))
    out_eval = fwd_eval(x)
    jax.block_until_ready(out_eval)
    assert out_eval.shape == (2, 1, 2, 2), out_eval.shape

    print("KERNEL_OK")
</pallas_src>

<mosaic_0001>
module attributes {stable_mosaic.version = 11 : i64} {
  func.func @_matmul_affine_kernel(%arg0: i32, %arg1: memref<256x128xbf16, #tpu.memory_space<vmem>>, %arg2: memref<128x128xbf16, #tpu.memory_space<vmem>>, %arg3: memref<1x128xf32, #tpu.memory_space<vmem>>, %arg4: memref<1x128xf32, #tpu.memory_space<vmem>>, %arg5: memref<256x128xbf16, #tpu.memory_space<vmem>>) attributes {dimension_semantics = [#tpu.dimension_semantics<parallel>], iteration_bounds = array<i64: 2>, scalar_prefetch = 0 : i64, scratch_operands = 0 : i64, tpu.core_type = #tpu.core_type<tc>, window_params = [{transform_indices = @transform_0, window_bounds = array<i64: 256, 128>}, {pipeline_mode = #tpu.pipeline_mode<synchronous>, transform_indices = @transform_1, window_bounds = array<i64: 128, 128>}, {pipeline_mode = #tpu.pipeline_mode<synchronous>, transform_indices = @transform_2, window_bounds = array<i64: 1, 128>}, {pipeline_mode = #tpu.pipeline_mode<synchronous>, transform_indices = @transform_3, window_bounds = array<i64: 1, 128>}, {transform_indices = @transform_4, window_bounds = array<i64: 256, 128>}]} {
    %c0 = arith.constant 0 : index
    %c0_0 = arith.constant 0 : index
    %0 = vector.load %arg1[%c0, %c0_0] : memref<256x128xbf16, #tpu.memory_space<vmem>>, vector<256x128xbf16>
    %c0_1 = arith.constant 0 : index
    %c0_2 = arith.constant 0 : index
    %1 = vector.load %arg2[%c0_1, %c0_2] : memref<128x128xbf16, #tpu.memory_space<vmem>>, vector<128x128xbf16>
    %cst = arith.constant dense<0.000000e+00> : vector<256x128xf32>
    %2 = tpu.matmul %0, %1, %cst {dimension_numbers = #tpu.dot_dimension_numbers<[1], [0], [0], [1], [0, 0, 1, 1], [], []>} : vector<256x128xbf16>, vector<128x128xbf16>, vector<256x128xf32> -> vector<256x128xf32>
    %c0_3 = arith.constant 0 : index
    %c0_4 = arith.constant 0 : index
    %3 = vector.load %arg3[%c0_3, %c0_4] : memref<1x128xf32, #tpu.memory_space<vmem>>, vector<1x128xf32>
    %4 = vector.broadcast %3 : vector<1x128xf32> to vector<256x128xf32>
    %5 = arith.mulf %2, %4 : vector<256x128xf32>
    %c0_5 = arith.constant 0 : index
    %c0_6 = arith.constant 0 : index
    %6 = vector.load %arg4[%c0_5, %c0_6] : memref<1x128xf32, #tpu.memory_space<vmem>>, vector<1x128xf32>
    %7 = vector.broadcast %6 : vector<1x128xf32> to vector<256x128xf32>
    %8 = arith.addf %5, %7 : vector<256x128xf32>
    %cst_7 = arith.constant 0.000000e+00 : f32
    %9 = vector.broadcast %cst_7 : f32 to vector<256x128xf32>
    %10 = arith.cmpf oge, %8, %9 : vector<256x128xf32>
    %cst_8 = arith.constant 2.000000e-01 : f32
    %11 = vector.broadcast %cst_8 : f32 to vector<256x128xf32>
    %12 = arith.mulf %11, %8 : vector<256x128xf32>
    %13 = arith.select %10, %8, %12 : vector<256x128xi1>, vector<256x128xf32>
    %14 = arith.truncf %13 : vector<256x128xf32> to vector<256x128xbf16>
    %c0_9 = arith.constant 0 : index
    %c0_10 = arith.constant 0 : index
    %15 = vector.load %arg5[%c0_9, %c0_10] : memref<256x128xbf16, #tpu.memory_space<vmem>>, vector<256x128xbf16>
    tpu.vector_store %arg5[%c0_9, %c0_10], %14 {strides = array<i32>} : memref<256x128xbf16, #tpu.memory_space<vmem>>, vector<256x128xbf16>,
    return
  }
  func.func @transform_0(%arg0: i32) -> (i32, i32) {
    %c0_i32 = arith.constant 0 : i32
    %c0_i32_0 = arith.constant 0 : i32
    return %arg0, %c0_i32 : i32, i32
  }
  func.func @transform_1(%arg0: i32) -> (i32, i32) {
    %c0_i32 = arith.constant 0 : i32
    %c0_i32_0 = arith.constant 0 : i32
    %c0_i32_1 = arith.constant 0 : i32
    return %c0_i32, %c0_i32_0 : i32, i32
  }
  func.func @transform_2(%arg0: i32) -> (i32, i32) {
    %c0_i32 = arith.constant 0 : i32
    %c0_i32_0 = arith.constant 0 : i32
    %c0_i32_1 = arith.constant 0 : i32
    return %c0_i32, %c0_i32_0 : i32, i32
  }
  func.func @transform_3(%arg0: i32) -> (i32, i32) {
    %c0_i32 = arith.constant 0 : i32
    %c0_i32_0 = arith.constant 0 : i32
    %c0_i32_1 = arith.constant 0 : i32
    return %c0_i32, %c0_i32_0 : i32, i32
  }
  func.func @transform_4(%arg0: i32) -> (i32, i32) {
    %c0_i32 = arith.constant 0 : i32
    %c0_i32_0 = arith.constant 0 : i32
    return %arg0, %c0_i32 : i32, i32
  }
}

module attributes {stable_mosaic.version = 11 : i64} {
  func.func @_matmul_bn_lrelu_kernel(%arg0: i32, %arg1: memref<128x256xbf16, #tpu.memory_space<vmem>>, %arg2: memref<256x128xbf16, #tpu.memory_space<vmem>>, %arg3: memref<1x128xf32, #tpu.memory_space<vmem>>, %arg4: memref<1x128xf32, #tpu.memory_space<vmem>>, %arg5: memref<128x128xbf16, #tpu.memory_space<vmem>>) attributes {dimension_semantics = [#tpu.dimension_semantics<arbitrary>], iteration_bounds = array<i64: 1>, scalar_prefetch = 0 : i64, scratch_operands = 0 : i64, tpu.core_type = #tpu.core_type<tc>, window_params = [{pipeline_mode = #tpu.pipeline_mode<synchronous>, transform_indices = @transform_0, window_bounds = array<i64: 128, 256>}, {pipeline_mode = #tpu.pipeline_mode<synchronous>, transform_indices = @transform_1, window_bounds = array<i64: 256, 128>}, {pipeline_mode = #tpu.pipeline_mode<synchronous>, transform_indices = @transform_2, window_bounds = array<i64: 1, 128>}, {pipeline_mode = #tpu.pipeline_mode<synchronous>, transform_indices = @transform_3, window_bounds = array<i64: 1, 128>}, {pipeline_mode = #tpu.pipeline_mode<synchronous>, transform_indices = @transform_4, window_bounds = array<i64: 128, 128>}]} {
    %c0 = arith.constant 0 : index
    %c0_0 = arith.constant 0 : index
    %0 = vector.load %arg1[%c0, %c0_0] : memref<128x256xbf16, #tpu.memory_space<vmem>>, vector<128x256xbf16>
    %c0_1 = arith.constant 0 : index
    %c0_2 = arith.constant 0 : index
    %1 = vector.load %arg2[%c0_1, %c0_2] : memref<256x128xbf16, #tpu.memory_space<vmem>>, vector<256x128xbf16>
    %cst = arith.constant dense<0.000000e+00> : vector<128x128xf32>
    %2 = tpu.matmul %0, %1, %cst {dimension_numbers = #tpu.dot_dimension_numbers<[1], [0], [0], [1], [0, 0, 1, 1], [], []>} : vector<128x256xbf16>, vector<256x128xbf16>, vector<128x128xf32> -> vector<128x128xf32>
    %cst_3 = arith.constant dense<0.000000e+00> : vector<128xf32>
    %3 = vector.multi_reduction <add>, %2, %cst_3 [0] : vector<128x128xf32> to vector<128xf32>
    %4 = vector.shape_cast %3 : vector<128xf32> to vector<1x128xf32>
    %cst_4 = arith.constant 7.812500e-03 : f32
    %5 = vector.broadcast %cst_4 : f32 to vector<1x128xf32>
    %6 = arith.mulf %4, %5 : vector<1x128xf32>
    %7 = arith.mulf %2, %2 : vector<128x128xf32>
    %cst_5 = arith.constant dense<0.000000e+00> : vector<128xf32>
    %8 = vector.multi_reduction <add>, %7, %cst_5 [0] : vector<128x128xf32> to vector<128xf32>
    %9 = vector.shape_cast %8 : vector<128xf32> to vector<1x128xf32>
    %cst_6 = arith.constant 7.812500e-03 : f32
    %10 = vector.broadcast %cst_6 : f32 to vector<1x128xf32>
    %11 = arith.mulf %9, %10 : vector<1x128xf32>
    %12 = arith.mulf %6, %6 : vector<1x128xf32>
    %13 = arith.subf %11, %12 : vector<1x128xf32>
    %cst_7 = arith.constant 9.99999974E-6 : f32
    %14 = vector.broadcast %cst_7 : f32 to vector<1x128xf32>
    %15 = arith.addf %13, %14 : vector<1x128xf32>
    %16 = math.rsqrt %15 : vector<1x128xf32>
    %c0_8 = arith.constant 0 : index
    %c0_9 = arith.constant 0 : index
    %17 = vector.load %arg3[%c0_8, %c0_9] : memref<1x128xf32, #tpu.memory_space<vmem>>, vector<1x128xf32>
    %18 = arith.mulf %17, %16 : vector<1x128xf32>
    %c0_10 = arith.constant 0 : index
    %c0_11 = arith.constant 0 : index
    %19 = vector.load %arg4[%c0_10, %c0_11] : memref<1x128xf32, #tpu.memory_space<vmem>>, vector<1x128xf32>
    %20 = arith.mulf %6, %18 : vector<1x128xf32>
    %21 = arith.subf %19, %20 : vector<1x128xf32>
    %22 = vector.broadcast %18 : vector<1x128xf32> to vector<128x128xf32>
    %23 = arith.mulf %2, %22 : vector<128x128xf32>
    %24 = vector.broadcast %21 : vector<1x128xf32> to vector<128x128xf32>
    %25 = arith.addf %23, %24 : vector<128x128xf32>
    %cst_12 = arith.constant 0.000000e+00 : f32
    %26 = vector.broadcast %cst_12 : f32 to vector<128x128xf32>
    %27 = arith.cmpf oge, %25, %26 : vector<128x128xf32>
    %cst_13 = arith.constant 2.000000e-01 : f32
    %28 = vector.broadcast %cst_13 : f32 to vector<128x128xf32>
    %29 = arith.mulf %28, %25 : vector<128x128xf32>
    %30 = arith.select %27, %25, %29 : vector<128x128xi1>, vector<128x128xf32>
    %31 = arith.truncf %30 : vector<128x128xf32> to vector<128x128xbf16>
    %c0_14 = arith.constant 0 : index
    %c0_15 = arith.constant 0 : index
    %32 = vector.load %arg5[%c0_14, %c0_15] : memref<128x128xbf16, #tpu.memory_space<vmem>>, vector<128x128xbf16>
    tpu.vector_store %arg5[%c0_14, %c0_15], %31 {strides = array<i32>} : memref<128x128xbf16, #tpu.memory_space<vmem>>, vector<128x128xbf16>,
    return
  }
  func.func @transform_0(%arg0: i32) -> (i32, i32) {
    %c0_i32 = arith.constant 0 : i32
    %c0_i32_0 = arith.constant 0 : i32
    %c0_i32_1 = arith.constant 0 : i32
    return %c0_i32, %c0_i32_0 : i32, i32
  }
  func.func @transform_1(%arg0: i32) -> (i32, i32) {
    %c0_i32 = arith.constant 0 : i32
    %c0_i32_0 = arith.constant 0 : i32
    %c0_i32_1 = arith.constant 0 : i32
    return %c0_i32, %c0_i32_0 : i32, i32
  }
  func.func @transform_2(%arg0: i32) -> (i32, i32) {
    %c0_i32 = arith.constant 0 : i32
    %c0_i32_0 = arith.constant 0 : i32
    %c0_i32_1 = arith.constant 0 : i32
    return %c0_i32, %c0_i32_0 : i32, i32
  }
  func.func @transform_3(%arg0: i32) -> (i32, i32) {
    %c0_i32 = arith.constant 0 : i32
    %c0_i32_0 = arith.constant 0 : i32
    %c0_i32_1 = arith.constant 0 : i32
    return %c0_i32, %c0_i32_0 : i32, i32
  }
  func.func @transform_4(%arg0: i32) -> (i32, i32) {
    %c0_i32 = arith.constant 0 : i32
    %c0_i32_0 = arith.constant 0 : i32
    %c0_i32_1 = arith.constant 0 : i32
    return %c0_i32, %c0_i32_0 : i32, i32
  }
}

module attributes {stable_mosaic.version = 11 : i64} {
  func.func @_matmul_bn_lrelu_kernel(%arg0: i32, %arg1: memref<32x512xbf16, #tpu.memory_space<vmem>>, %arg2: memref<512x128xbf16, #tpu.memory_space<vmem>>, %arg3: memref<1x128xf32, #tpu.memory_space<vmem>>, %arg4: memref<1x128xf32, #tpu.memory_space<vmem>>, %arg5: memref<32x128xbf16, #tpu.memory_space<vmem>>) attributes {dimension_semantics = [#tpu.dimension_semantics<arbitrary>], iteration_bounds = array<i64: 1>, scalar_prefetch = 0 : i64, scratch_operands = 0 : i64, tpu.core_type = #tpu.core_type<tc>, window_params = [{pipeline_mode = #tpu.pipeline_mode<synchronous>, transform_indices = @transform_0, window_bounds = array<i64: 32, 512>}, {pipeline_mode = #tpu.pipeline_mode<synchronous>, transform_indices = @transform_1, window_bounds = array<i64: 512, 128>}, {pipeline_mode = #tpu.pipeline_mode<synchronous>, transform_indices = @transform_2, window_bounds = array<i64: 1, 128>}, {pipeline_mode = #tpu.pipeline_mode<synchronous>, transform_indices = @transform_3, window_bounds = array<i64: 1, 128>}, {pipeline_mode = #tpu.pipeline_mode<synchronous>, transform_indices = @transform_4, window_bounds = array<i64: 32, 128>}]} {
    %c0 = arith.constant 0 : index
    %c0_0 = arith.constant 0 : index
    %0 = vector.load %arg1[%c0, %c0_0] : memref<32x512xbf16, #tpu.memory_space<vmem>>, vector<32x512xbf16>
    %c0_1 = arith.constant 0 : index
    %c0_2 = arith.constant 0 : index
    %1 = vector.load %arg2[%c0_1, %c0_2] : memref<512x128xbf16, #tpu.memory_space<vmem>>, vector<512x128xbf16>
    %cst = arith.constant dense<0.000000e+00> : vector<32x128xf32>
    %2 = tpu.matmul %0, %1, %cst {dimension_numbers = #tpu.dot_dimension_numbers<[1], [0], [0], [1], [0, 0, 1, 1], [], []>} : vector<32x512xbf16>, vector<512x128xbf16>, vector<32x128xf32> -> vector<32x128xf32>
    %cst_3 = arith.constant dense<0.000000e+00> : vector<128xf32>
    %3 = vector.multi_reduction <add>, %2, %cst_3 [0] : vector<32x128xf32> to vector<128xf32>
    %4 = vector.shape_cast %3 : vector<128xf32> to vector<1x128xf32>
    %cst_4 = arith.constant 3.125000e-02 : f32
    %5 = vector.broadcast %cst_4 : f32 to vector<1x128xf32>
    %6 = arith.mulf %4, %5 : vector<1x128xf32>
    %7 = arith.mulf %2, %2 : vector<32x128xf32>
    %cst_5 = arith.constant dense<0.000000e+00> : vector<128xf32>
    %8 = vector.multi_reduction <add>, %7, %cst_5 [0] : vector<32x128xf32> to vector<128xf32>
    %9 = vector.shape_cast %8 : vector<128xf32> to vector<1x128xf32>
    %cst_6 = arith.constant 3.125000e-02 : f32
    %10 = vector.broadcast %cst_6 : f32 to vector<1x128xf32>
    %11 = arith.mulf %9, %10 : vector<1x128xf32>
    %12 = arith.mulf %6, %6 : vector<1x128xf32>
    %13 = arith.subf %11, %12 : vector<1x128xf32>
    %cst_7 = arith.constant 9.99999974E-6 : f32
    %14 = vector.broadcast %cst_7 : f32 to vector<1x128xf32>
    %15 = arith.addf %13, %14 : vector<1x128xf32>
    %16 = math.rsqrt %15 : vector<1x128xf32>
    %c0_8 = arith.constant 0 : index
    %c0_9 = arith.constant 0 : index
    %17 = vector.load %arg3[%c0_8, %c0_9] : memref<1x128xf32, #tpu.memory_space<vmem>>, vector<1x128xf32>
    %18 = arith.mulf %17, %16 : vector<1x128xf32>
    %c0_10 = arith.constant 0 : index
    %c0_11 = arith.constant 0 : index
    %19 = vector.load %arg4[%c0_10, %c0_11] : memref<1x128xf32, #tpu.memory_space<vmem>>, vector<1x128xf32>
    %20 = arith.mulf %6, %18 : vector<1x128xf32>
    %21 = arith.subf %19, %20 : vector<1x128xf32>
    %22 = vector.broadcast %18 : vector<1x128xf32> to vector<32x128xf32>
    %23 = arith.mulf %2, %22 : vector<32x128xf32>
    %24 = vector.broadcast %21 : vector<1x128xf32> to vector<32x128xf32>
    %25 = arith.addf %23, %24 : vector<32x128xf32>
    %cst_12 = arith.constant 0.000000e+00 : f32
    %26 = vector.broadcast %cst_12 : f32 to vector<32x128xf32>
    %27 = arith.cmpf oge, %25, %26 : vector<32x128xf32>
    %cst_13 = arith.constant 2.000000e-01 : f32
    %28 = vector.broadcast %cst_13 : f32 to vector<32x128xf32>
    %29 = arith.mulf %28, %25 : vector<32x128xf32>
    %30 = arith.select %27, %25, %29 : vector<32x128xi1>, vector<32x128xf32>
    %31 = arith.truncf %30 : vector<32x128xf32> to vector<32x128xbf16>
    %c0_14 = arith.constant 0 : index
    %c0_15 = arith.constant 0 : index
    %32 = vector.load %arg5[%c0_14, %c0_15] : memref<32x128xbf16, #tpu.memory_space<vmem>>, vector<32x128xbf16>
    tpu.vector_store %arg5[%c0_14, %c0_15], %31 {strides = array<i32>} : memref<32x128xbf16, #tpu.memory_space<vmem>>, vector<32x128xbf16>,
    return
  }
  func.func @transform_0(%arg0: i32) -> (i32, i32) {
    %c0_i32 = arith.constant 0 : i32
    %c0_i32_0 = arith.constant 0 : i32
    %c0_i32_1 = arith.constant 0 : i32
    return %c0_i32, %c0_i32_0 : i32, i32
  }
  func.func @transform_1(%arg0: i32) -> (i32, i32) {
    %c0_i32 = arith.constant 0 : i32
    %c0_i32_0 = arith.constant 0 : i32
    %c0_i32_1 = arith.constant 0 : i32
    return %c0_i32, %c0_i32_0 : i32, i32
  }
  func.func @transform_2(%arg0: i32) -> (i32, i32) {
    %c0_i32 = arith.constant 0 : i32
    %c0_i32_0 = arith.constant 0 : i32
    %c0_i32_1 = arith.constant 0 : i32
    return %c0_i32, %c0_i32_0 : i32, i32
  }
  func.func @transform_3(%arg0: i32) -> (i32, i32) {
    %c0_i32 = arith.constant 0 : i32
    %c0_i32_0 = arith.constant 0 : i32
    %c0_i32_1 = arith.constant 0 : i32
    return %c0_i32, %c0_i32_0 : i32, i32
  }
  func.func @transform_4(%arg0: i32) -> (i32, i32) {
    %c0_i32 = arith.constant 0 : i32
    %c0_i32_0 = arith.constant 0 : i32
    %c0_i32_1 = arith.constant 0 : i32
    return %c0_i32, %c0_i32_0 : i32, i32
  }
}

module attributes {stable_mosaic.version = 11 : i64} {
  func.func @_matmul_bn_lrelu_kernel(%arg0: i32, %arg1: memref<32x1024xbf16, #tpu.memory_space<vmem>>, %arg2: memref<1024x128xbf16, #tpu.memory_space<vmem>>, %arg3: memref<1x128xf32, #tpu.memory_space<vmem>>, %arg4: memref<1x128xf32, #tpu.memory_space<vmem>>, %arg5: memref<32x128xbf16, #tpu.memory_space<vmem>>) attributes {dimension_semantics = [#tpu.dimension_semantics<arbitrary>], iteration_bounds = array<i64: 1>, scalar_prefetch = 0 : i64, scratch_operands = 0 : i64, tpu.core_type = #tpu.core_type<tc>, window_params = [{pipeline_mode = #tpu.pipeline_mode<synchronous>, transform_indices = @transform_0, window_bounds = array<i64: 32, 1024>}, {pipeline_mode = #tpu.pipeline_mode<synchronous>, transform_indices = @transform_1, window_bounds = array<i64: 1024, 128>}, {pipeline_mode = #tpu.pipeline_mode<synchronous>, transform_indices = @transform_2, window_bounds = array<i64: 1, 128>}, {pipeline_mode = #tpu.pipeline_mode<synchronous>, transform_indices = @transform_3, window_bounds = array<i64: 1, 128>}, {pipeline_mode = #tpu.pipeline_mode<synchronous>, transform_indices = @transform_4, window_bounds = array<i64: 32, 128>}]} {
    %c0 = arith.constant 0 : index
    %c0_0 = arith.constant 0 : index
    %0 = vector.load %arg1[%c0, %c0_0] : memref<32x1024xbf16, #tpu.memory_space<vmem>>, vector<32x1024xbf16>
    %c0_1 = arith.constant 0 : index
    %c0_2 = arith.constant 0 : index
    %1 = vector.load %arg2[%c0_1, %c0_2] : memref<1024x128xbf16, #tpu.memory_space<vmem>>, vector<1024x128xbf16>
    %cst = arith.constant dense<0.000000e+00> : vector<32x128xf32>
    %2 = tpu.matmul %0, %1, %cst {dimension_numbers = #tpu.dot_dimension_numbers<[1], [0], [0], [1], [0, 0, 1, 1], [], []>} : vector<32x1024xbf16>, vector<1024x128xbf16>, vector<32x128xf32> -> vector<32x128xf32>
    %cst_3 = arith.constant dense<0.000000e+00> : vector<128xf32>
    %3 = vector.multi_reduction <add>, %2, %cst_3 [0] : vector<32x128xf32> to vector<128xf32>
    %4 = vector.shape_cast %3 : vector<128xf32> to vector<1x128xf32>
    %cst_4 = arith.constant 0.055555556 : f32
    %5 = vector.broadcast %cst_4 : f32 to vector<1x128xf32>
    %6 = arith.mulf %4, %5 : vector<1x128xf32>
    %7 = arith.mulf %2, %2 : vector<32x128xf32>
    %cst_5 = arith.constant dense<0.000000e+00> : vector<128xf32>
    %8 = vector.multi_reduction <add>, %7, %cst_5 [0] : vector<32x128xf32> to vector<128xf32>
    %9 = vector.shape_cast %8 : vector<128xf32> to vector<1x128xf32>
    %cst_6 = arith.constant 0.055555556 : f32
    %10 = vector.broadcast %cst_6 : f32 to vector<1x128xf32>
    %11 = arith.mulf %9, %10 : vector<1x128xf32>
    %12 = arith.mulf %6, %6 : vector<1x128xf32>
    %13 = arith.subf %11, %12 : vector<1x128xf32>
    %cst_7 = arith.constant 9.99999974E-6 : f32
    %14 = vector.broadcast %cst_7 : f32 to vector<1x128xf32>
    %15 = arith.addf %13, %14 : vector<1x128xf32>
    %16 = math.rsqrt %15 : vector<1x128xf32>
    %c0_8 = arith.constant 0 : index
    %c0_9 = arith.constant 0 : index
    %17 = vector.load %arg3[%c0_8, %c0_9] : memref<1x128xf32, #tpu.memory_space<vmem>>, vector<1x128xf32>
    %18 = arith.mulf %17, %16 : vector<1x128xf32>
    %c0_10 = arith.constant 0 : index
    %c0_11 = arith.constant 0 : index
    %19 = vector.load %arg4[%c0_10, %c0_11] : memref<1x128xf32, #tpu.memory_space<vmem>>, vector<1x128xf32>
    %20 = arith.mulf %6, %18 : vector<1x128xf32>
    %21 = arith.subf %19, %20 : vector<1x128xf32>
    %22 = vector.broadcast %18 : vector<1x128xf32> to vector<32x128xf32>
    %23 = arith.mulf %2, %22 : vector<32x128xf32>
    %24 = vector.broadcast %21 : vector<1x128xf32> to vector<32x128xf32>
    %25 = arith.addf %23, %24 : vector<32x128xf32>
    %cst_12 = arith.constant 0.000000e+00 : f32
    %26 = vector.broadcast %cst_12 : f32 to vector<32x128xf32>
    %27 = arith.cmpf oge, %25, %26 : vector<32x128xf32>
    %cst_13 = arith.constant 2.000000e-01 : f32
    %28 = vector.broadcast %cst_13 : f32 to vector<32x128xf32>
    %29 = arith.mulf %28, %25 : vector<32x128xf32>
    %30 = arith.select %27, %25, %29 : vector<32x128xi1>, vector<32x128xf32>
    %31 = arith.truncf %30 : vector<32x128xf32> to vector<32x128xbf16>
    %c0_14 = arith.constant 0 : index
    %c0_15 = arith.constant 0 : index
    %32 = vector.load %arg5[%c0_14, %c0_15] : memref<32x128xbf16, #tpu.memory_space<vmem>>, vector<32x128xbf16>
    tpu.vector_store %arg5[%c0_14, %c0_15], %31 {strides = array<i32>} : memref<32x128xbf16, #tpu.memory_space<vmem>>, vector<32x128xbf16>,
    return
  }
  func.func @transform_0(%arg0: i32) -> (i32, i32) {
    %c0_i32 = arith.constant 0 : i32
    %c0_i32_0 = arith.constant 0 : i32
    %c0_i32_1 = arith.constant 0 : i32
    return %c0_i32, %c0_i32_0 : i32, i32
  }
  func.func @transform_1(%arg0: i32) -> (i32, i32) {
    %c0_i32 = arith.constant 0 : i32
    %c0_i32_0 = arith.constant 0 : i32
    %c0_i32_1 = arith.constant 0 : i32
    return %c0_i32, %c0_i32_0 : i32, i32
  }
  func.func @transform_2(%arg0: i32) -> (i32, i32) {
    %c0_i32 = arith.constant 0 : i32
    %c0_i32_0 = arith.constant 0 : i32
    %c0_i32_1 = arith.constant 0 : i32
    return %c0_i32, %c0_i32_0 : i32, i32
  }
  func.func @transform_3(%arg0: i32) -> (i32, i32) {
    %c0_i32 = arith.constant 0 : i32
    %c0_i32_0 = arith.constant 0 : i32
    %c0_i32_1 = arith.constant 0 : i32
    return %c0_i32, %c0_i32_0 : i32, i32
  }
  func.func @transform_4(%arg0: i32) -> (i32, i32) {
    %c0_i32 = arith.constant 0 : i32
    %c0_i32_0 = arith.constant 0 : i32
    %c0_i32_1 = arith.constant 0 : i32
    return %c0_i32, %c0_i32_0 : i32, i32
  }
}

module attributes {stable_mosaic.version = 11 : i64} {
  func.func @_matmul_affine_kernel(%arg0: i32, %arg1: memref<16x2048xbf16, #tpu.memory_space<vmem>>, %arg2: memref<2048x128xbf16, #tpu.memory_space<vmem>>, %arg3: memref<1x128xf32, #tpu.memory_space<vmem>>, %arg4: memref<1x128xf32, #tpu.memory_space<vmem>>, %arg5: memref<16x128xf32, #tpu.memory_space<vmem>>) attributes {dimension_semantics = [#tpu.dimension_semantics<parallel>], iteration_bounds = array<i64: 1>, scalar_prefetch = 0 : i64, scratch_operands = 0 : i64, tpu.core_type = #tpu.core_type<tc>, window_params = [{transform_indices = @transform_0, window_bounds = array<i64: 16, 2048>}, {pipeline_mode = #tpu.pipeline_mode<synchronous>, transform_indices = @transform_1, window_bounds = array<i64: 2048, 128>}, {pipeline_mode = #tpu.pipeline_mode<synchronous>, transform_indices = @transform_2, window_bounds = array<i64: 1, 128>}, {pipeline_mode = #tpu.pipeline_mode<synchronous>, transform_indices = @transform_3, window_bounds = array<i64: 1, 128>}, {transform_indices = @transform_4, window_bounds = array<i64: 16, 128>}]} {
    %c0 = arith.constant 0 : index
    %c0_0 = arith.constant 0 : index
    %0 = vector.load %arg1[%c0, %c0_0] : memref<16x2048xbf16, #tpu.memory_space<vmem>>, vector<16x2048xbf16>
    %c0_1 = arith.constant 0 : index
    %c0_2 = arith.constant 0 : index
    %1 = vector.load %arg2[%c0_1, %c0_2] : memref<2048x128xbf16, #tpu.memory_space<vmem>>, vector<2048x128xbf16>
    %cst = arith.constant dense<0.000000e+00> : vector<16x128xf32>
    %2 = tpu.matmul %0, %1, %cst {dimension_numbers = #tpu.dot_dimension_numbers<[1], [0], [0], [1], [0, 0, 1, 1], [], []>} : vector<16x2048xbf16>, vector<2048x128xbf16>, vector<16x128xf32> -> vector<16x128xf32>
    %c0_3 = arith.constant 0 : index
    %c0_4 = arith.constant 0 : index
    %3 = vector.load %arg3[%c0_3, %c0_4] : memref<1x128xf32, #tpu.memory_space<vmem>>, vector<1x128xf32>
    %4 = vector.broadcast %3 : vector<1x128xf32> to vector<16x128xf32>
    %5 = arith.mulf %2, %4 : vector<16x128xf32>
    %c0_5 = arith.constant 0 : index
    %c0_6 = arith.constant 0 : index
    %6 = vector.load %arg4[%c0_5, %c0_6] : memref<1x128xf32, #tpu.memory_space<vmem>>, vector<1x128xf32>
    %7 = vector.broadcast %6 : vector<1x128xf32> to vector<16x128xf32>
    %8 = arith.addf %5, %7 : vector<16x128xf32>
    %c0_7 = arith.constant 0 : index
    %c0_8 = arith.constant 0 : index
    %9 = vector.load %arg5[%c0_7, %c0_8] : memref<16x128xf32, #tpu.memory_space<vmem>>, vector<16x128xf32>
    tpu.vector_store %arg5[%c0_7, %c0_8], %8 {strides = array<i32>} : memref<16x128xf32, #tpu.memory_space<vmem>>, vector<16x128xf32>,
    return
  }
  func.func @transform_0(%arg0: i32) -> (i32, i32) {
    %c0_i32 = arith.constant 0 : i32
    %c0_i32_0 = arith.constant 0 : i32
    return %arg0, %c0_i32 : i32, i32
  }
  func.func @transform_1(%arg0: i32) -> (i32, i32) {
    %c0_i32 = arith.constant 0 : i32
    %c0_i32_0 = arith.constant 0 : i32
    %c0_i32_1 = arith.constant 0 : i32
    return %c0_i32, %c0_i32_0 : i32, i32
  }
  func.func @transform_2(%arg0: i32) -> (i32, i32) {
    %c0_i32 = arith.constant 0 : i32
    %c0_i32_0 = arith.constant 0 : i32
    %c0_i32_1 = arith.constant 0 : i32
    return %c0_i32, %c0_i32_0 : i32, i32
  }
  func.func @transform_3(%arg0: i32) -> (i32, i32) {
    %c0_i32 = arith.constant 0 : i32
    %c0_i32_0 = arith.constant 0 : i32
    %c0_i32_1 = arith.constant 0 : i32
    return %c0_i32, %c0_i32_0 : i32, i32
  }
  func.func @transform_4(%arg0: i32) -> (i32, i32) {
    %c0_i32 = arith.constant 0 : i32
    %c0_i32_0 = arith.constant 0 : i32
    return %arg0, %c0_i32 : i32, i32
  }
}

</mosaic_0001>

<llo_original>
// kernel: _lambda_.5
$region0: #{_lambda_.5}
  #allocation0 [shape = 'u32[]', space=smem, size = 0x4, offset = 0x4, fixed_abs, tag = 'smem constant byte address 0x4 - core index']
  #allocation1 [shape = 'u32[144,128]{1,0:T(1,128)}', space=vmem, size = 0x12000, scoped, tag = 'internal scratch']
  %s0 = inlined_call_operand.vmem [shape: bf16[512,128], index: 0, kind: input, shape index: {}]
  %s1 = inlined_call_operand.vmem [shape: bf16[128,128], index: 1, kind: input, shape index: {}]
  %s2 = inlined_call_operand.vmem [shape: f32[1,128], index: 2, kind: input, shape index: {}]
  %s3 = inlined_call_operand.vmem [shape: f32[1,128], index: 3, kind: input, shape index: {}]
  %s4 = inlined_call_operand.vmem [shape: bf16[512,128], index: 4, kind: output, shape index: {}]
  %s5 = sld [smem:[#allocation0]]
  $region49: #{_lambda_.5} parent=0
    _
  %s7 = ssub.s32 1, %s5
  %s8 = scalar_select 0, %s7, %s5
  loop: start=0, step=1, limit=4
  $region2: #{_lambda_.5} parent=0 // loop_pre_header
    _
  $region3: #{_lambda_.5} parent=0 // loop_header
    %s10 = sphi 0, %s14
    %p11 = scmp.ge.s32.totalorder %s10, 4
    %s20 = sphi 0, %s22
    %s23 = sphi 0, %s20
    %s24 = sphi 0, %s23
    %s40 = sphi 0, %s24
    %s44 = sphi 0, %s44
    %s46 = sphi 0, %s44
    %s47 = sphi 0, %s46
    %s61 = sphi 0, %s47
    %s65 = sphi 0, %s65
    %s67 = sphi 0, %s65
    %s68 = sphi 0, %s67
    %s82 = sphi 0, %s68
    %s86 = sphi 0, %s86
    %s88 = sphi 0, %s86
    %s89 = sphi 0, %s88
    %s103 = sphi 0, %s89
    %s109 = sphi 0, %s111
    %s112 = sphi 0, %s109
    %s113 = sphi 0, %s112
    %s129 = sphi 0, %s113
  $region4: #{_lambda_.5} parent=0 // loop_header_branch
    %13 = sbr.rel (%p11) target = $region8
  $region5: #{_lambda_.5} parent=0 // loop_body
    %s15 = ssub.s32 %s10, 1
    %s16 = ssub.s32 %s10, 2
    %s17 = sadd.s32 %s10, 1
    %s18 = ssub.s32 %s10, %s17
    %p19 = scmp.eq.s32.totalorder %s18, 0
    %s21 = sadd.s32 %s20, 1
    %s22 = scalar_select %p19, %s20, %s21
    %p25 = pneg %p19
    %p26 = scmp.eq.s32.totalorder %s10, 1
    %p27 = por %p25, %p26
    %p28 = scmp.ne.s32.totalorder %s20, %s23
    %p29 = scmp.eq.s32.totalorder %s10, 0
    %p30 = por %p28, %p29
    %p31 = scmp.ne.s32.totalorder %s20, %s23
    %p32 = scmp.eq.s32.totalorder %s15, 1
    %p33 = por %p31, %p32
    %p34 = scmp.ne.s32.totalorder %s23, %s24
    %p35 = scmp.eq.s32.totalorder %s15, 0
    %p36 = por %p34, %p35
    %p37 = scmp.ne.s32.totalorder %s23, %s24
    %p38 = scmp.eq.s32.totalorder %s16, 1
    %p39 = por %p37, %p38
    %p41 = scmp.ne.s32.totalorder %s24, %s40
    %p42 = scmp.eq.s32.totalorder %s16, 0
    %p43 = por %p41, %p42
    %s45 = sadd.s32 %s44, 1
    %p48 = scmp.eq.s32.totalorder %s10, 1
    %p49 = scmp.ne.s32.totalorder %s44, %s46
    %p50 = scmp.eq.s32.totalorder %s10, 0
    %p51 = por %p49, %p50
    %p52 = scmp.ne.s32.totalorder %s44, %s46
    %p53 = scmp.eq.s32.totalorder %s15, 1
    %p54 = por %p52, %p53
    %p55 = scmp.ne.s32.totalorder %s46, %s47
    %p56 = scmp.eq.s32.totalorder %s15, 0
    %p57 = por %p55, %p56
    %p58 = scmp.ne.s32.totalorder %s46, %s47
    %p59 = scmp.eq.s32.totalorder %s16, 1
    %p60 = por %p58, %p59
    %p62 = scmp.ne.s32.totalorder %s47, %s61
    %p63 = scmp.eq.s32.totalorder %s16, 0
    %p64 = por %p62, %p63
    %s66 = sadd.s32 %s65, 1
    %p69 = scmp.eq.s32.totalorder %s10, 1
    %p70 = scmp.ne.s32.totalorder %s65, %s67
    %p71 = scmp.eq.s32.totalorder %s10, 0
    %p72 = por %p70, %p71
    %p73 = scmp.ne.s32.totalorder %s65, %s67
    %p74 = scmp.eq.s32.totalorder %s15, 1
    %p75 = por %p73, %p74
    %p76 = scmp.ne.s32.totalorder %s67, %s68
    %p77 = scmp.eq.s32.totalorder %s15, 0
    %p78 = por %p76, %p77
    %p79 = scmp.ne.s32.totalorder %s67, %s68
    %p80 = scmp.eq.s32.totalorder %s16, 1
    %p81 = por %p79, %p80
    %p83 = scmp.ne.s32.totalorder %s68, %s82
    %p84 = scmp.eq.s32.totalorder %s16, 0
    %p85 = por %p83, %p84
    %s87 = sadd.s32 %s86, 1
    %p90 = scmp.eq.s32.totalorder %s10, 1
    %p91 = scmp.ne.s32.totalorder %s86, %s88
    %p92 = scmp.eq.s32.totalorder %s10, 0
    %p93 = por %p91, %p92
    %p94 = scmp.ne.s32.totalorder %s86, %s88
    %p95 = scmp.eq.s32.totalorder %s15, 1
    %p96 = por %p94, %p95
    %p97 = scmp.ne.s32.totalorder %s88, %s89
    %p98 = scmp.eq.s32.totalorder %s15, 0
    %p99 = por %p97, %p98
    %p100 = scmp.ne.s32.totalorder %s88, %s89
    %p101 = scmp.eq.s32.totalorder %s16, 1
    %p102 = por %p100, %p101
    %p104 = scmp.ne.s32.totalorder %s89, %s103
    %p105 = scmp.eq.s32.totalorder %s16, 0
    %p106 = por %p104, %p105
    %s107 = ssub.s32 %s10, %s17
    %p108 = scmp.eq.s32.totalorder %s107, 0
    %s110 = sadd.s32 %s109, 1
    %s111 = scalar_select %p108, %s109, %s110
    %p114 = pneg %p108
    %p115 = scmp.eq.s32.totalorder %s10, 1
    %p116 = por %p114, %p115
    %p117 = scmp.ne.s32.totalorder %s109, %s112
    %p118 = scmp.eq.s32.totalorder %s10, 0
    %p119 = por %p117, %p118
    %p120 = scmp.ne.s32.totalorder %s109, %s112
    %p121 = scmp.eq.s32.totalorder %s15, 1
    %p122 = por %p120, %p121
    %p123 = scmp.ne.s32.totalorder %s112, %s113
    %p124 = scmp.eq.s32.totalorder %s15, 0
    %p125 = por %p123, %p124
    %p126 = scmp.ne.s32.totalorder %s112, %s113
    %p127 = scmp.eq.s32.totalorder %s16, 1
    %p128 = por %p126, %p127
    %p130 = scmp.ne.s32.totalorder %s113, %s129
    %p131 = scmp.eq.s32.totalorder %s16, 0
    %p132 = por %p130, %p131
    %p133 = scmp.le.s32.totalorder 1, %s10
    %p134 = scmp.lt.s32.totalorder %s10, 3
    %p135 = pnand %p133, %p134
    %p136 = pneg %p135
    // Predicated region
    $region9: #{_lambda_.5} parent=5 // pred_check
      _
    $region10: #{_lambda_.5} parent=5 // pred_check_branch
      %138 = sbr.rel (%p135) target = $region12
    $region11: #{_lambda_.5} parent=5 // pred_region
      %s139 = ssub.s32 %s10, 1
      // Predicated region
      $region13: #{_lambda_.5} parent=11 // pred_check
        %p140 = pneg %p57
      $region14: #{_lambda_.5} parent=11 // pred_check_branch
        %142 = sbr.rel (%p140) target = $region16
      $region15: #{_lambda_.5} parent=11 // pred_region
        _
      $region16: #{_lambda_.5} parent=11 // pred_fallthru
        _
      // Predicated region
      $region17: #{_lambda_.5} parent=11 // pred_check
        %p143 = pneg %p78
      $region18: #{_lambda_.5} parent=11 // pred_check_branch
        %145 = sbr.rel (%p143) target = $region20
      $region19: #{_lambda_.5} parent=11 // pred_region
        _
      $region20: #{_lambda_.5} parent=11 // pred_fallthru
        _
      // Predicated region
      $region21: #{_lambda_.5} parent=11 // pred_check
        %p146 = pneg %p99
      $region22: #{_lambda_.5} parent=11 // pred_check_branch
        %148 = sbr.rel (%p146) target = $region24
      $region23: #{_lambda_.5} parent=11 // pred_region
        _
      $region24: #{_lambda_.5} parent=11 // pred_fallthru
        _
    $region12: #{_lambda_.5} parent=5 // pred_fallthru
      _
    %p149 = scmp.lt.s32.totalorder %s10, 2
    // Predicated region
    $region25: #{_lambda_.5} parent=5 // pred_check
      %p150 = pneg %p149
    $region26: #{_lambda_.5} parent=5 // pred_check_branch
      %152 = sbr.rel (%p150) target = $region28
    $region27: #{_lambda_.5} parent=5 // pred_region
      // Predicated region
      $region29: #{_lambda_.5} parent=27 // pred_check
        %p153 = pneg %p30
      $region30: #{_lambda_.5} parent=27 // pred_check_branch
        %155 = sbr.rel (%p153) target = $region32
      $region31: #{_lambda_.5} parent=27 // pred_region
        %s156 = smul.u32 32, %s10
        %p157 = scmp.lt.s32.totalorder %s156, 63
        %s158 = scalar_select %p157, %s156, 63
        %s159 = smul.addr %s158, 4
        %s160 = scalar_lea.vmem %s0, %s159
        %s161 = smul.u32 32, %s10
      $region32: #{_lambda_.5} parent=27 // pred_fallthru
        _
    $region28: #{_lambda_.5} parent=5 // pred_fallthru
      _
    %p162 = scmp.le.s32.totalorder 1, %s10
    %p163 = scmp.lt.s32.totalorder %s10, 3
    %p164 = pnand %p162, %p163
    %p165 = pneg %p164
    // Predicated region
    $region33: #{_lambda_.5} parent=5 // pred_check
      _
    $region34: #{_lambda_.5} parent=5 // pred_check_branch
      %167 = sbr.rel (%p164) target = $region36
    $region35: #{_lambda_.5} parent=5 // pred_region
      %s168 = ssub.s32 %s10, 1
      %s169 = smul.u32 32, %s15
      %p170 = scmp.lt.s32.totalorder %s169, 63
      %s171 = scalar_select %p170, %s169, 63
      %s172 = smul.addr %s171, 4
      %s173 = scalar_lea.vmem %s0, %s172
      %p174 = pneg %p36
      %p175 = pneg %p33
      %p176 = pneg %p57
      %p177 = pneg %p54
      %p178 = pneg %p78
      %p179 = pneg %p75
      %p180 = pneg %p99
      %p181 = pneg %p96
      %p182 = pneg %p125
      %p183 = pneg %p122
      %s184 = smul.u32 32, %s15
      %p185 = scmp.lt.s32.totalorder %s184, 63
      %s186 = scalar_select %p185, %s184, 63
      %s187 = smul.addr %s186, 4
      %s188 = scalar_lea.vmem %s4, %s187
      %s189 = smul.u32 32, %s15
      %p190 = scmp.lt.s32.totalorder %s189, 63
      %s191 = scalar_select %p190, %s189, 63
      %s192 = smul.addr %s191, 4
      %s193 = scalar_lea.vmem %s0, %s192
      %s194 = smul.u32 32, %s15
      %s195 = smul.u32 32, %s15
      %p196 = scmp.lt.s32.totalorder %s195, 63
      %s197 = scalar_select %p196, %s195, 63
      %s198 = smul.addr %s197, 4
      %s199 = scalar_lea.vmem %s4, %s198
      %s200 = smul.u32 32, %s15
      %v202 = vld [vmem:[%s193] sm:$0xf]
      %v203 = vld [vmem:[%s193 + $0x4] sm:$0xf]
      %v204 = vld [vmem:[%s193 + $0x8] sm:$0xf]
      %v205 = vld [vmem:[%s193 + $0xc] sm:$0xf]
      %v206 = vld [vmem:[%s193 + $0x10] sm:$0xf]
      %v207 = vld [vmem:[%s193 + $0x14] sm:$0xf]
      %v208 = vld [vmem:[%s193 + $0x18] sm:$0xf]
      %v209 = vld [vmem:[%s193 + $0x1c] sm:$0xf]
      %v210 = vld [vmem:[%s193 + $0x20] sm:$0xf]
      %v211 = vld [vmem:[%s193 + $0x24] sm:$0xf]
      %v212 = vld [vmem:[%s193 + $0x28] sm:$0xf]
      %v213 = vld [vmem:[%s193 + $0x2c] sm:$0xf]
      %v214 = vld [vmem:[%s193 + $0x30] sm:$0xf]
      %v215 = vld [vmem:[%s193 + $0x34] sm:$0xf]
      %v216 = vld [vmem:[%s193 + $0x38] sm:$0xf]
      %v217 = vld [vmem:[%s193 + $0x3c] sm:$0xf]
      %v218 = vld [vmem:[%s193 + $0x40] sm:$0xf]
      %v219 = vld [vmem:[%s193 + $0x44] sm:$0xf]
      %v220 = vld [vmem:[%s193 + $0x48] sm:$0xf]
      %v221 = vld [vmem:[%s193 + $0x4c] sm:$0xf]
      %v222 = vld [vmem:[%s193 + $0x50] sm:$0xf]
      %v223 = vld [vmem:[%s193 + $0x54] sm:$0xf]
      %v224 = vld [vmem:[%s193 + $0x58] sm:$0xf]
      %v225 = vld [vmem:[%s193 + $0x5c] sm:$0xf]
      %v226 = vld [vmem:[%s193 + $0x60] sm:$0xf]
      %v227 = vld [vmem:[%s193 + $0x64] sm:$0xf]
      %v228 = vld [vmem:[%s193 + $0x68] sm:$0xf]
      %v229 = vld [vmem:[%s193 + $0x6c] sm:$0xf]
      %v230 = vld [vmem:[%s193 + $0x70] sm:$0xf]
      %v231 = vld [vmem:[%s193 + $0x74] sm:$0xf]
      %v232 = vld [vmem:[%s193 + $0x78] sm:$0xf]
      %v233 = vld [vmem:[%s193 + $0x7c] sm:$0xf]
      %v234 = vld [vmem:[%s1] sm:$0xf]
      %v235 = vld [vmem:[%s1 + $0x4] sm:$0xf]
      %v236 = vld [vmem:[%s1 + $0x8] sm:$0xf]
      %v237 = vld [vmem:[%s1 + $0xc] sm:$0xf]
      %v238 = vld [vmem:[%s1 + $0x10] sm:$0xf]
      %v239 = vld [vmem:[%s1 + $0x14] sm:$0xf]
      %v240 = vld [vmem:[%s1 + $0x18] sm:$0xf]
      %v241 = vld [vmem:[%s1 + $0x1c] sm:$0xf]
      %v242 = vld [vmem:[%s1 + $0x20] sm:$0xf]
      %v243 = vld [vmem:[%s1 + $0x24] sm:$0xf]
      %v244 = vld [vmem:[%s1 + $0x28] sm:$0xf]
      %v245 = vld [vmem:[%s1 + $0x2c] sm:$0xf]
      %v246 = vld [vmem:[%s1 + $0x30] sm:$0xf]
      %v247 = vld [vmem:[%s1 + $0x34] sm:$0xf]
      %v248 = vld [vmem:[%s1 + $0x38] sm:$0xf]
      %v249 = vld [vmem:[%s1 + $0x3c] sm:$0xf]
      %v282 = vunpack.c.l.b16 %v202
      %v283 = vunpack.c.l.b16 %v203
      %v284 = vunpack.c.l.b16 %v204
      %v285 = vunpack.c.l.b16 %v205
      %v286 = vunpack.c.l.b16 %v206
      %v287 = vunpack.c.l.b16 %v207
      %v288 = vunpack.c.l.b16 %v208
      %v289 = vunpack.c.l.b16 %v209
      %v290 = vunpack.c.l.b16 %v210
      %v291 = vunpack.c.l.b16 %v211
      %v292 = vunpack.c.l.b16 %v212
      %v293 = vunpack.c.l.b16 %v213
      %v294 = vunpack.c.l.b16 %v214
      %v295 = vunpack.c.l.b16 %v215
      %v296 = vunpack.c.l.b16 %v216
      %v297 = vunpack.c.l.b16 %v217
      %v298 = vunpack.c.l.b16 %v218
      %v299 = vunpack.c.l.b16 %v219
      %v300 = vunpack.c.l.b16 %v220
      %v301 = vunpack.c.l.b16 %v221
      %v302 = vunpack.c.l.b16 %v222
      %v303 = vunpack.c.l.b16 %v223
      %v304 = vunpack.c.l.b16 %v224
      %v305 = vunpack.c.l.b16 %v225
      %v306 = vunpack.c.l.b16 %v226
      %v307 = vunpack.c.l.b16 %v227
      %v308 = vunpack.c.l.b16 %v228
      %v309 = vunpack.c.l.b16 %v229
      %v310 = vunpack.c.l.b16 %v230
      %v311 = vunpack.c.l.b16 %v231
      %v312 = vunpack.c.l.b16 %v232
      %v313 = vunpack.c.l.b16 %v233
      %v314 = vpack.c.b16 %v283, %v282
      %v315 = vpack.c.b16 %v285, %v284
      %v316 = vpack.c.b16 %v287, %v286
      %v317 = vpack.c.b16 %v289, %v288
      %v318 = vpack.c.b16 %v291, %v290
      %v319 = vpack.c.b16 %v293, %v292
      %v320 = vpack.c.b16 %v295, %v294
      %v321 = vpack.c.b16 %v297, %v296
      %v322 = vpack.c.b16 %v299, %v298
      %v323 = vpack.c.b16 %v301, %v300
      %v324 = vpack.c.b16 %v303, %v302
      %v325 = vpack.c.b16 %v305, %v304
      %v326 = vpack.c.b16 %v307, %v306
      %v327 = vpack.c.b16 %v309, %v308
      %v328 = vpack.c.b16 %v311, %v310
      %v329 = vpack.c.b16 %v313, %v312
      %v362 = vunpack.c.l.b16 %v234
      %v363 = vunpack.c.l.b16 %v235
      %v364 = vunpack.c.l.b16 %v236
      %v365 = vunpack.c.l.b16 %v237
      %v366 = vunpack.c.l.b16 %v238
      %v367 = vunpack.c.l.b16 %v239
      %v368 = vunpack.c.l.b16 %v240
      %v369 = vunpack.c.l.b16 %v241
      %v370 = vunpack.c.l.b16 %v242
      %v371 = vunpack.c.l.b16 %v243
      %v372 = vunpack.c.l.b16 %v244
      %v373 = vunpack.c.l.b16 %v245
      %v374 = vunpack.c.l.b16 %v246
      %v375 = vunpack.c.l.b16 %v247
      %v376 = vunpack.c.l.b16 %v248
      %v377 = vunpack.c.l.b16 %v249
      %v378 = vpack.c.b16 %v363, %v362
      %v379 = vpack.c.b16 %v365, %v364
      %v380 = vpack.c.b16 %v367, %v366
      %v381 = vpack.c.b16 %v369, %v368
      %v382 = vpack.c.b16 %v371, %v370
      %v383 = vpack.c.b16 %v373, %v372
      %v384 = vpack.c.b16 %v375, %v374
      %v385 = vpack.c.b16 %v377, %v376
      %394 = vmatprep.subr.bf16.mxu0 0
      %395 = vmatpush1.bf16.msra.mxu0 %v378
      %396 = vmatprep.subr.bf16.mxu0 0
      %397 = vmatpush1.bf16.msra.mxu0 %v379
      %398 = vmatprep.subr.bf16.mxu0 0
      %399 = vmatpush1.bf16.msra.mxu0 %v380
      %400 = vmatprep.subr.bf16.mxu0 0
      %401 = vmatpush1.bf16.msra.mxu0 %v381
      %402 = vmatprep.subr.bf16.mxu0 0
      %403 = vmatpush1.bf16.msra.mxu0 %v382
      %404 = vmatprep.subr.bf16.mxu0 0
      %405 = vmatpush1.bf16.msra.mxu0 %v383
      %406 = vmatprep.subr.bf16.mxu0 0
      %407 = vmatpush1.bf16.msra.mxu0 %v384
      %408 = vmatprep.subr.bf16.mxu0 0
      %409 = vmatpush1.bf16.msra.mxu0 %v385
      %410 = vmatprep.subr.bf16.mxu0 0
      %411 = vmatpush1.bf16.msra.mxu0 0
      %412 = vmatprep.subr.bf16.mxu0 0
      %413 = vmatpush1.bf16.msra.mxu0 0
      %414 = vmatprep.subr.bf16.mxu0 0
      %415 = vmatpush1.bf16.msra.mxu0 0
      %416 = vmatprep.subr.bf16.mxu0 0
      %417 = vmatpush1.bf16.msra.mxu0 0
      %418 = vmatprep.subr.bf16.mxu0 0
      %419 = vmatpush1.bf16.msra.mxu0 0
      %420 = vmatprep.subr.bf16.mxu0 0
      %421 = vmatpush1.bf16.msra.mxu0 0
      %422 = vmatprep.subr.bf16.mxu0 0
      %423 = vmatpush1.bf16.msra.mxu0 0
      %424 = vmatprep.subr.bf16.mxu0 0
      %425 = vmatpush1.bf16.msra.mxu0 0
      %426 = vmatprep.mubr.bf16.mxu0 0
      %427 = vmatmul.mubr.bf16.gmra.mrb[0].mxu0 %v314
      %v428 = vpop.f32.mrb[0].mxu0
      %v429 = vadd.f32 0.0, %v428
      %v430 = vpop.f32.mrb[0].mxu0
      %v431 = vpop.f32.mrb[0].mxu0
      %v432 = vadd.f32 0.0, %v431
      %v433 = vpop.f32.mrb[0].mxu0
      %434 = vmatprep.mubr.bf16.mxu0 0
      %435 = vmatmul.mubr.bf16.gmra.mrb[0].mxu0 %v315
      %v436 = vpop.f32.mrb[0].mxu0
      %v437 = vadd.f32 0.0, %v436
      %v438 = vpop.f32.mrb[0].mxu0
      %v439 = vpop.f32.mrb[0].mxu0
      %v440 = vadd.f32 0.0, %v439
      %v441 = vpop.f32.mrb[0].mxu0
      %442 = vmatprep.mubr.bf16.mxu0 0
      %443 = vmatmul.mubr.bf16.gmra.mrb[0].mxu0 %v316
      %v444 = vpop.f32.mrb[0].mxu0
      %v445 = vadd.f32 0.0, %v444
      %v446 = vpop.f32.mrb[0].mxu0
      %v447 = vpop.f32.mrb[0].mxu0
      %v448 = vadd.f32 0.0, %v447
      %v449 = vpop.f32.mrb[0].mxu0
      %450 = vmatprep.mubr.bf16.mxu0 0
      %451 = vmatmul.mubr.bf16.gmra.mrb[0].mxu0 %v317
      %v452 = vpop.f32.mrb[0].mxu0
      %v453 = vadd.f32 0.0, %v452
      %v454 = vpop.f32.mrb[0].mxu0
      %v455 = vpop.f32.mrb[0].mxu0
      %v456 = vadd.f32 0.0, %v455
      %v457 = vpop.f32.mrb[0].mxu0
      %458 = vmatprep.mubr.bf16.mxu0 0
      %459 = vmatmul.mubr.bf16.gmra.mrb[0].mxu0 %v318
      %v460 = vpop.f32.mrb[0].mxu0
      %v461 = vadd.f32 0.0, %v460
      %v462 = vpop.f32.mrb[0].mxu0
      %v463 = vpop.f32.mrb[0].mxu0
      %v464 = vadd.f32 0.0, %v463
      %v465 = vpop.f32.mrb[0].mxu0
      %466 = vmatprep.mubr.bf16.mxu0 0
      %467 = vmatmul.mubr.bf16.gmra.mrb[0].mxu0 %v319
      %v468 = vpop.f32.mrb[0].mxu0
      %v469 = vadd.f32 0.0, %v468
      %v470 = vpop.f32.mrb[0].mxu0
      %v471 = vpop.f32.mrb[0].mxu0
      %v472 = vadd.f32 0.0, %v471
      %v473 = vpop.f32.mrb[0].mxu0
      %474 = vmatprep.mubr.bf16.mxu0 0
      %475 = vmatmul.mubr.bf16.gmra.mrb[0].mxu0 %v320
      %v476 = vpop.f32.mrb[0].mxu0
      %v477 = vadd.f32 0.0, %v476
      %v478 = vpop.f32.mrb[0].mxu0
      %v479 = vpop.f32.mrb[0].mxu0
      %v480 = vadd.f32 0.0, %v479
      %v481 = vpop.f32.mrb[0].mxu0
      %482 = vmatprep.mubr.bf16.mxu0 0
      %483 = vmatmul.mubr.bf16.gmra.mrb[0].mxu0 %v321
      %v484 = vpop.f32.mrb[0].mxu0
      %v485 = vadd.f32 0.0, %v484
      %v486 = vpop.f32.mrb[0].mxu0
      %v487 = vpop.f32.mrb[0].mxu0
      %v488 = vadd.f32 0.0, %v487
      %v489 = vpop.f32.mrb[0].mxu0
      %490 = vmatprep.mubr.bf16.mxu0 0
      %491 = vmatmul.mubr.bf16.gmra.mrb[0].mxu0 %v322
      %v492 = vpop.f32.mrb[0].mxu0
      %v493 = vadd.f32 0.0, %v492
      %v494 = vpop.f32.mrb[0].mxu0
      %v495 = vpop.f32.mrb[0].mxu0
      %v496 = vadd.f32 0.0, %v495
      %v497 = vpop.f32.mrb[0].mxu0
      %498 = vmatprep.mubr.bf16.mxu0 0
      %499 = vmatmul.mubr.bf16.gmra.mrb[0].mxu0 %v323
      %v500 = vpop.f32.mrb[0].mxu0
      %v501 = vadd.f32 0.0, %v500
      %v502 = vpop.f32.mrb[0].mxu0
      %v503 = vpop.f32.mrb[0].mxu0
      %v504 = vadd.f32 0.0, %v503
      %v505 = vpop.f32.mrb[0].mxu0
      %506 = vmatprep.mubr.bf16.mxu0 0
      %507 = vmatmul.mubr.bf16.gmra.mrb[0].mxu0 %v324
      %v508 = vpop.f32.mrb[0].mxu0
      %v509 = vadd.f32 0.0, %v508
      %v510 = vpop.f32.mrb[0].mxu0
      %v511 = vpop.f32.mrb[0].mxu0
      %v512 = vadd.f32 0.0, %v511
      %v513 = vpop.f32.mrb[0].mxu0
      %514 = vmatprep.mubr.bf16.mxu0 0
      %515 = vmatmul.mubr.bf16.gmra.mrb[0].mxu0 %v325
      %v516 = vpop.f32.mrb[0].mxu0
      %v517 = vadd.f32 0.0, %v516
      %v518 = vpop.f32.mrb[0].mxu0
      %v519 = vpop.f32.mrb[0].mxu0
      %v520 = vadd.f32 0.0, %v519
      %v521 = vpop.f32.mrb[0].mxu0
      %522 = vmatprep.mubr.bf16.mxu0 0
      %523 = vmatmul.mubr.bf16.gmra.mrb[0].mxu0 %v326
      %v524 = vpop.f32.mrb[0].mxu0
      %v525 = vadd.f32 0.0, %v524
      %v526 = vpop.f32.mrb[0].mxu0
      %v527 = vpop.f32.mrb[0].mxu0
      %v528 = vadd.f32 0.0, %v527
      %v529 = vpop.f32.mrb[0].mxu0
      %530 = vmatprep.mubr.bf16.mxu0 0
      %531 = vmatmul.mubr.bf16.gmra.mrb[0].mxu0 %v327
      %v532 = vpop.f32.mrb[0].mxu0
      %v533 = vadd.f32 0.0, %v532
      %v534 = vpop.f32.mrb[0].mxu0
      %v535 = vpop.f32.mrb[0].mxu0
      %v536 = vadd.f32 0.0, %v535
      %v537 = vpop.f32.mrb[0].mxu0
      %538 = vmatprep.mubr.bf16.mxu0 0
      %539 = vmatmul.mubr.bf16.gmra.mrb[0].mxu0 %v328
      %v540 = vpop.f32.mrb[0].mxu0
      %v541 = vadd.f32 0.0, %v540
      %v542 = vpop.f32.mrb[0].mxu0
      %v543 = vpop.f32.mrb[0].mxu0
      %v544 = vadd.f32 0.0, %v543
      %v545 = vpop.f32.mrb[0].mxu0
      %546 = vmatprep.mubr.bf16.mxu0 0
      %547 = vmatmul.mubr.bf16.gmra.mrb[0].mxu0 %v329
      %v548 = vpop.f32.mrb[0].mxu0
      %v549 = vadd.f32 0.0, %v548
      %v550 = vpop.f32.mrb[0].mxu0
      %v551 = vpop.f32.mrb[0].mxu0
      %v552 = vadd.f32 0.0, %v551
      %v553 = vpop.f32.mrb[0].mxu0
      %554 = vdwg.mxu0
      %v555 = vld [vmem:[%s2] sm:$0x1]
      %v557 = vlaneseq
      %v558 = vshrl.u32 %v557, 7
      %v559 = vsub.s32 0, %v558
      %v560 = vrot.slane %v555, %v559
      %v562 = vmul.f32 %v429, %v560
      %v563 = vmul.f32 %v432, %v560
      %v564 = vmul.f32 %v437, %v560
      %v565 = vmul.f32 %v440, %v560
      %v566 = vmul.f32 %v445, %v560
      %v567 = vmul.f32 %v448, %v560
      %v568 = vmul.f32 %v453, %v560
      %v569 = vmul.f32 %v456, %v560
      %v570 = vmul.f32 %v461, %v560
      %v571 = vmul.f32 %v464, %v560
      %v572 = vmul.f32 %v469, %v560
      %v573 = vmul.f32 %v472, %v560
      %v574 = vmul.f32 %v477, %v560
      %v575 = vmul.f32 %v480, %v560
      %v576 = vmul.f32 %v485, %v560
      %v577 = vmul.f32 %v488, %v560
      %v578 = vmul.f32 %v493, %v560
      %v579 = vmul.f32 %v496, %v560
      %v580 = vmul.f32 %v501, %v560
      %v581 = vmul.f32 %v504, %v560
      %v582 = vmul.f32 %v509, %v560
      %v583 = vmul.f32 %v512, %v560
      %v584 = vmul.f32 %v517, %v560
      %v585 = vmul.f32 %v520, %v560
      %v586 = vmul.f32 %v525, %v560
      %v587 = vmul.f32 %v528, %v560
      %v588 = vmul.f32 %v533, %v560
      %v589 = vmul.f32 %v536, %v560
      %v590 = vmul.f32 %v541, %v560
      %v591 = vmul.f32 %v544, %v560
      %v592 = vmul.f32 %v549, %v560
      %v593 = vmul.f32 %v552, %v560
      %v594 = vld [vmem:[%s3] sm:$0x1]
      %v596 = vlaneseq
      %v597 = vshrl.u32 %v596, 7
      %v598 = vsub.s32 0, %v597
      %v599 = vrot.slane %v594, %v598
      %v601 = vadd.f32 %v562, %v599
      %v602 = vadd.f32 %v563, %v599
      %v603 = vadd.f32 %v564, %v599
      %v604 = vadd.f32 %v565, %v599
      %v605 = vadd.f32 %v566, %v599
      %v606 = vadd.f32 %v567, %v599
      %v607 = vadd.f32 %v568, %v599
      %v608 = vadd.f32 %v569, %v599
      %v609 = vadd.f32 %v570, %v599
      %v610 = vadd.f32 %v571, %v599
      %v611 = vadd.f32 %v572, %v599
      %v612 = vadd.f32 %v573, %v599
      %v613 = vadd.f32 %v574, %v599
      %v614 = vadd.f32 %v575, %v599
      %v615 = vadd.f32 %v576, %v599
      %v616 = vadd.f32 %v577, %v599
      %v617 = vadd.f32 %v578, %v599
      %v618 = vadd.f32 %v579, %v599
      %v619 = vadd.f32 %v580, %v599
      %v620 = vadd.f32 %v581, %v599
      %v621 = vadd.f32 %v582, %v599
      %v622 = vadd.f32 %v583, %v599
      %v623 = vadd.f32 %v584, %v599
      %v624 = vadd.f32 %v585, %v599
      %v625 = vadd.f32 %v586, %v599
      %v626 = vadd.f32 %v587, %v599
      %v627 = vadd.f32 %v588, %v599
      %v628 = vadd.f32 %v589, %v599
      %v629 = vadd.f32 %v590, %v599
      %v630 = vadd.f32 %v591, %v599
      %v631 = vadd.f32 %v592, %v599
      %v632 = vadd.f32 %v593, %v599
      %vm633 = vcmp.ge.f32.partialorder %v601, 0.0
      %vm634 = vcmp.ge.f32.partialorder %v602, 0.0
      %vm635 = vcmp.ge.f32.partialorder %v603, 0.0
      %vm636 = vcmp.ge.f32.partialorder %v604, 0.0
      %vm637 = vcmp.ge.f32.partialorder %v605, 0.0
      %vm638 = vcmp.ge.f32.partialorder %v606, 0.0
      %vm639 = vcmp.ge.f32.partialorder %v607, 0.0
      %vm640 = vcmp.ge.f32.partialorder %v608, 0.0
      %vm641 = vcmp.ge.f32.partialorder %v609, 0.0
      %vm642 = vcmp.ge.f32.partialorder %v610, 0.0
      %vm643 = vcmp.ge.f32.partialorder %v611, 0.0
      %vm644 = vcmp.ge.f32.partialorder %v612, 0.0
      %vm645 = vcmp.ge.f32.partialorder %v613, 0.0
      %vm646 = vcmp.ge.f32.partialorder %v614, 0.0
      %vm647 = vcmp.ge.f32.partialorder %v615, 0.0
      %vm648 = vcmp.ge.f32.partialorder %v616, 0.0
      %vm649 = vcmp.ge.f32.partialorder %v617, 0.0
      %vm650 = vcmp.ge.f32.partialorder %v618, 0.0
      %vm651 = vcmp.ge.f32.partialorder %v619, 0.0
      %vm652 = vcmp.ge.f32.partialorder %v620, 0.0
      %vm653 = vcmp.ge.f32.partialorder %v621, 0.0
      %vm654 = vcmp.ge.f32.partialorder %v622, 0.0
      %vm655 = vcmp.ge.f32.partialorder %v623, 0.0
      %vm656 = vcmp.ge.f32.partialorder %v624, 0.0
      %vm657 = vcmp.ge.f32.partialorder %v625, 0.0
      %vm658 = vcmp.ge.f32.partialorder %v626, 0.0
      %vm659 = vcmp.ge.f32.partialorder %v627, 0.0
      %vm660 = vcmp.ge.f32.partialorder %v628, 0.0
      %vm661 = vcmp.ge.f32.partialorder %v629, 0.0
      %vm662 = vcmp.ge.f32.partialorder %v630, 0.0
      %vm663 = vcmp.ge.f32.partialorder %v631, 0.0
      %vm664 = vcmp.ge.f32.partialorder %v632, 0.0
      %v665 = vmul.f32 %v601, 0.2
      %v666 = vmul.f32 %v602, 0.2
      %v667 = vmul.f32 %v603, 0.2
      %v668 = vmul.f32 %v604, 0.2
      %v669 = vmul.f32 %v605, 0.2
      %v670 = vmul.f32 %v606, 0.2
      %v671 = vmul.f32 %v607, 0.2
      %v672 = vmul.f32 %v608, 0.2
      %v673 = vmul.f32 %v609, 0.2
      %v674 = vmul.f32 %v610, 0.2
      %v675 = vmul.f32 %v611, 0.2
      %v676 = vmul.f32 %v612, 0.2
      %v677 = vmul.f32 %v613, 0.2
      %v678 = vmul.f32 %v614, 0.2
      %v679 = vmul.f32 %v615, 0.2
      %v680 = vmul.f32 %v616, 0.2
      %v681 = vmul.f32 %v617, 0.2
      %v682 = vmul.f32 %v618, 0.2
      %v683 = vmul.f32 %v619, 0.2
      %v684 = vmul.f32 %v620, 0.2
      %v685 = vmul.f32 %v621, 0.2
      %v686 = vmul.f32 %v622, 0.2
      %v687 = vmul.f32 %v623, 0.2
      %v688 = vmul.f32 %v624, 0.2
      %v689 = vmul.f32 %v625, 0.2
      %v690 = vmul.f32 %v626, 0.2
      %v691 = vmul.f32 %v627, 0.2
      %v692 = vmul.f32 %v628, 0.2
      %v693 = vmul.f32 %v629, 0.2
      %v694 = vmul.f32 %v630, 0.2
      %v695 = vmul.f32 %v631, 0.2
      %v696 = vmul.f32 %v632, 0.2
      %v697 = vsel %vm633, %v601, %v665
      %v698 = vsel %vm634, %v602, %v666
      %v699 = vsel %vm635, %v603, %v667
      %v700 = vsel %vm636, %v604, %v668
      %v701 = vsel %vm637, %v605, %v669
      %v702 = vsel %vm638, %v606, %v670
      %v703 = vsel %vm639, %v607, %v671
      %v704 = vsel %vm640, %v608, %v672
      %v705 = vsel %vm641, %v609, %v673
      %v706 = vsel %vm642, %v610, %v674
      %v707 = vsel %vm643, %v611, %v675
      %v708 = vsel %vm644, %v612, %v676
      %v709 = vsel %vm645, %v613, %v677
      %v710 = vsel %vm646, %v614, %v678
      %v711 = vsel %vm647, %v615, %v679
      %v712 = vsel %vm648, %v616, %v680
      %v713 = vsel %vm649, %v617, %v681
      %v714 = vsel %vm650, %v618, %v682
      %v715 = vsel %vm651, %v619, %v683
      %v716 = vsel %vm652, %v620, %v684
      %v717 = vsel %vm653, %v621, %v685
      %v718 = vsel %vm654, %v622, %v686
      %v719 = vsel %vm655, %v623, %v687
      %v720 = vsel %vm656, %v624, %v688
      %v721 = vsel %vm657, %v625, %v689
      %v722 = vsel %vm658, %v626, %v690
      %v723 = vsel %vm659, %v627, %v691
      %v724 = vsel %vm660, %v628, %v692
      %v725 = vsel %vm661, %v629, %v693
      %v726 = vsel %vm662, %v630, %v694
      %v727 = vsel %vm663, %v631, %v695
      %v728 = vsel %vm664, %v632, %v696
      %v729 = vpack.c.bf16 %v698, %v697
      %v730 = vpack.c.bf16 %v700, %v699
      %v731 = vpack.c.bf16 %v702, %v701
      %v732 = vpack.c.bf16 %v704, %v703
      %v733 = vpack.c.bf16 %v706, %v705
      %v734 = vpack.c.bf16 %v708, %v707
      %v735 = vpack.c.bf16 %v710, %v709
      %v736 = vpack.c.bf16 %v712, %v711
      %v737 = vpack.c.bf16 %v714, %v713
      %v738 = vpack.c.bf16 %v716, %v715
      %v739 = vpack.c.bf16 %v718, %v717
      %v740 = vpack.c.bf16 %v720, %v719
      %v741 = vpack.c.bf16 %v722, %v721
      %v742 = vpack.c.bf16 %v724, %v723
      %v743 = vpack.c.bf16 %v726, %v725
      %v744 = vpack.c.bf16 %v728, %v727
      %v761 = vunpack.c.l.b16 %v729
      %v762 = vunpack.c.h.b16 %v729
      %v763 = vunpack.c.l.b16 %v730
      %v764 = vunpack.c.h.b16 %v730
      %v765 = vunpack.c.l.b16 %v731
      %v766 = vunpack.c.h.b16 %v731
      %v767 = vunpack.c.l.b16 %v732
      %v768 = vunpack.c.h.b16 %v732
      %v769 = vunpack.c.l.b16 %v733
      %v770 = vunpack.c.h.b16 %v733
      %v771 = vunpack.c.l.b16 %v734
      %v772 = vunpack.c.h.b16 %v734
      %v773 = vunpack.c.l.b16 %v735
      %v774 = vunpack.c.h.b16 %v735
      %v775 = vunpack.c.l.b16 %v736
      %v776 = vunpack.c.h.b16 %v736
      %v777 = vunpack.c.l.b16 %v737
      %v778 = vunpack.c.h.b16 %v737
      %v779 = vunpack.c.l.b16 %v738
      %v780 = vunpack.c.h.b16 %v738
      %v781 = vunpack.c.l.b16 %v739
      %v782 = vunpack.c.h.b16 %v739
      %v783 = vunpack.c.l.b16 %v740
      %v784 = vunpack.c.h.b16 %v740
      %v785 = vunpack.c.l.b16 %v741
      %v786 = vunpack.c.h.b16 %v741
      %v787 = vunpack.c.l.b16 %v742
      %v788 = vunpack.c.h.b16 %v742
      %v789 = vunpack.c.l.b16 %v743
      %v790 = vunpack.c.h.b16 %v743
      %v791 = vunpack.c.l.b16 %v744
      %v792 = vunpack.c.h.b16 %v744
      %v793 = vpack.c.b16 %v761, %v761
      %v794 = vpack.c.b16 %v762, %v762
      %v795 = vpack.c.b16 %v763, %v763
      %v796 = vpack.c.b16 %v764, %v764
      %v797 = vpack.c.b16 %v765, %v765
      %v798 = vpack.c.b16 %v766, %v766
      %v799 = vpack.c.b16 %v767, %v767
      %v800 = vpack.c.b16 %v768, %v768
      %v801 = vpack.c.b16 %v769, %v769
      %v802 = vpack.c.b16 %v770, %v770
      %v803 = vpack.c.b16 %v771, %v771
      %v804 = vpack.c.b16 %v772, %v772
      %v805 = vpack.c.b16 %v773, %v773
      %v806 = vpack.c.b16 %v774, %v774
      %v807 = vpack.c.b16 %v775, %v775
      %v808 = vpack.c.b16 %v776, %v776
      %v809 = vpack.c.b16 %v777, %v777
      %v810 = vpack.c.b16 %v778, %v778
      %v811 = vpack.c.b16 %v779, %v779
      %v812 = vpack.c.b16 %v780, %v780
      %v813 = vpack.c.b16 %v781, %v781
      %v814 = vpack.c.b16 %v782, %v782
      %v815 = vpack.c.b16 %v783, %v783
      %v816 = vpack.c.b16 %v784, %v784
      %v817 = vpack.c.b16 %v785, %v785
      %v818 = vpack.c.b16 %v786, %v786
      %v819 = vpack.c.b16 %v787, %v787
      %v820 = vpack.c.b16 %v788, %v788
      %v821 = vpack.c.b16 %v789, %v789
      %v822 = vpack.c.b16 %v790, %v790
      %v823 = vpack.c.b16 %v791, %v791
      %v824 = vpack.c.b16 %v792, %v792
      %857 = vst [vmem:[%s199] sm:$0xf] %v793
      %858 = vst [vmem:[%s199 + $0x4] sm:$0xf] %v794
      %859 = vst [vmem:[%s199 + $0x8] sm:$0xf] %v795
      %860 = vst [vmem:[%s199 + $0xc] sm:$0xf] %v796
      %861 = vst [vmem:[%s199 + $0x10] sm:$0xf] %v797
      %862 = vst [vmem:[%s199 + $0x14] sm:$0xf] %v798
      %863 = vst [vmem:[%s199 + $0x18] sm:$0xf] %v799
      %864 = vst [vmem:[%s199 + $0x1c] sm:$0xf] %v800
      %865 = vst [vmem:[%s199 + $0x20] sm:$0xf] %v801
      %866 = vst [vmem:[%s199 + $0x24] sm:$0xf] %v802
      %867 = vst [vmem:[%s199 + $0x28] sm:$0xf] %v803
      %868 = vst [vmem:[%s199 + $0x2c] sm:$0xf] %v804
      %869 = vst [vmem:[%s199 + $0x30] sm:$0xf] %v805
      %870 = vst [vmem:[%s199 + $0x34] sm:$0xf] %v806
      %871 = vst [vmem:[%s199 + $0x38] sm:$0xf] %v807
      %872 = vst [vmem:[%s199 + $0x3c] sm:$0xf] %v808
      %873 = vst [vmem:[%s199 + $0x40] sm:$0xf] %v809
      %874 = vst [vmem:[%s199 + $0x44] sm:$0xf] %v810
      %875 = vst [vmem:[%s199 + $0x48] sm:$0xf] %v811
      %876 = vst [vmem:[%s199 + $0x4c] sm:$0xf] %v812
      %877 = vst [vmem:[%s199 + $0x50] sm:$0xf] %v813
      %878 = vst [vmem:[%s199 + $0x54] sm:$0xf] %v814
      %879 = vst [vmem:[%s199 + $0x58] sm:$0xf] %v815
      %880 = vst [vmem:[%s199 + $0x5c] sm:$0xf] %v816
      %881 = vst [vmem:[%s199 + $0x60] sm:$0xf] %v817
      %882 = vst [vmem:[%s199 + $0x64] sm:$0xf] %v818
      %883 = vst [vmem:[%s199 + $0x68] sm:$0xf] %v819
      %884 = vst [vmem:[%s199 + $0x6c] sm:$0xf] %v820
      %885 = vst [vmem:[%s199 + $0x70] sm:$0xf] %v821
      %886 = vst [vmem:[%s199 + $0x74] sm:$0xf] %v822
      %887 = vst [vmem:[%s199 + $0x78] sm:$0xf] %v823
      %888 = vst [vmem:[%s199 + $0x7c] sm:$0xf] %v824
      %s889 = smul.u32 32, %s15
      %p890 = scmp.lt.s32.totalorder %s889, 63
      %s891 = scalar_select %p890, %s889, 63
      %s892 = smul.addr %s891, 4
      %s893 = scalar_lea.vmem %s4, %s892
      // Predicated region
      $region37: #{_lambda_.5} parent=35 // pred_check
        %p894 = pneg %p122
      $region38: #{_lambda_.5} parent=35 // pred_check_branch
        %896 = sbr.rel (%p894) target = $region40
      $region39: #{_lambda_.5} parent=35 // pred_region
        %s897 = smul.u32 32, %s15
      $region40: #{_lambda_.5} parent=35 // pred_fallthru
        _
    $region36: #{_lambda_.5} parent=5 // pred_fallthru
      _
    %p898 = scmp.le.s32.totalorder 2, %s10
    // Predicated region
    $region41: #{_lambda_.5} parent=5 // pred_check
      %p899 = pneg %p898
    $region42: #{_lambda_.5} parent=5 // pred_check_branch
      %901 = sbr.rel (%p899) target = $region44
    $region43: #{_lambda_.5} parent=5 // pred_region
      %s902 = ssub.s32 %s10, 2
      // Predicated region
      $region45: #{_lambda_.5} parent=43 // pred_check
        %p903 = pneg %p128
      $region46: #{_lambda_.5} parent=43 // pred_check_branch
        %905 = sbr.rel (%p903) target = $region48
      $region47: #{_lambda_.5} parent=43 // pred_region
        %s906 = smul.u32 32, %s16
        %p907 = scmp.lt.s32.totalorder %s906, 63
        %s908 = scalar_select %p907, %s906, 63
        %s909 = smul.addr %s908, 4
        %s910 = scalar_lea.vmem %s4, %s909
      $region48: #{_lambda_.5} parent=43 // pred_fallthru
        _
    $region44: #{_lambda_.5} parent=5 // pred_fallthru
      _
  $region6: #{_lambda_.5} parent=0 // loop_footer
    %s14 = sadd.s32 1, %s10
  $region7: #{_lambda_.5} parent=0 // loop_footer_branch
    %9 = sbr.rel target = $region3
  $region8: #{_lambda_.5} parent=0 // loop_exit
    _

// kernel: _lambda_.6
$region0: #{_lambda_.6}
  #allocation0 [shape = 'u32[]', space=smem, size = 0x4, offset = 0x4, fixed_abs, tag = 'smem constant byte address 0x4 - core index']
  #allocation1 [shape = 'u32[144,128]{1,0:T(1,128)}', space=vmem, size = 0x12000, scoped, tag = 'internal scratch']
  %s0 = inlined_call_operand.vmem [shape: bf16[128,256], index: 0, kind: input, shape index: {}]
  %s1 = inlined_call_operand.vmem [shape: bf16[256,128], index: 1, kind: input, shape index: {}]
  %s2 = inlined_call_operand.vmem [shape: f32[1,128], index: 2, kind: input, shape index: {}]
  %s3 = inlined_call_operand.vmem [shape: f32[1,128], index: 3, kind: input, shape index: {}]
  %s4 = inlined_call_operand.vmem [shape: bf16[128,128], index: 4, kind: output, shape index: {}]
  %s5 = sld [smem:[#allocation0]]
  $region26: #{_lambda_.6} parent=0
    _
  %s7 = ssub.s32 1, %s5
  %s8 = scalar_select 0, %s7, %s5
  // Predicated region
  $region2: #{_lambda_.6} parent=0 // pred_check
    _
  $region3: #{_lambda_.6} parent=0 // pred_check_branch
    %10 = sbr.rel (0) target = $region5
  $region4: #{_lambda_.6} parent=0 // pred_region
    _
  $region5: #{_lambda_.6} parent=0 // pred_fallthru
    _
  // Predicated region
  $region6: #{_lambda_.6} parent=0 // pred_check
    _
  $region7: #{_lambda_.6} parent=0 // pred_check_branch
    %12 = sbr.rel (0) target = $region9
  $region8: #{_lambda_.6} parent=0 // pred_region
    _
  $region9: #{_lambda_.6} parent=0 // pred_fallthru
    _
  // Predicated region
  $region10: #{_lambda_.6} parent=0 // pred_check
    _
  $region11: #{_lambda_.6} parent=0 // pred_check_branch
    %14 = sbr.rel (0) target = $region13
  $region12: #{_lambda_.6} parent=0 // pred_region
    _
  $region13: #{_lambda_.6} parent=0 // pred_fallthru
    _
  // Predicated region
  $region14: #{_lambda_.6} parent=0 // pred_check
    _
  $region15: #{_lambda_.6} parent=0 // pred_check_branch
    %16 = sbr.rel (0) target = $region17
  $region16: #{_lambda_.6} parent=0 // pred_region
    _
  $region17: #{_lambda_.6} parent=0 // pred_fallthru
    _
  %v18 = vld [vmem:[%s0] sm:$0xff]
  %v19 = vld [vmem:[%s0 + $0x8] sm:$0xff]
  %v20 = vld [vmem:[%s0 + $0x10] sm:$0xff]
  %v21 = vld [vmem:[%s0 + $0x18] sm:$0xff]
  %v22 = vld [vmem:[%s0 + $0x20] sm:$0xff]
  %v23 = vld [vmem:[%s0 + $0x28] sm:$0xff]
  %v24 = vld [vmem:[%s0 + $0x30] sm:$0xff]
  %v25 = vld [vmem:[%s0 + $0x38] sm:$0xff]
  %v26 = vld [vmem:[%s0 + $0x40] sm:$0xff]
  %v27 = vld [vmem:[%s0 + $0x48] sm:$0xff]
  %v28 = vld [vmem:[%s0 + $0x50] sm:$0xff]
  %v29 = vld [vmem:[%s0 + $0x58] sm:$0xff]
  %v30 = vld [vmem:[%s0 + $0x60] sm:$0xff]
  %v31 = vld [vmem:[%s0 + $0x68] sm:$0xff]
  %v32 = vld [vmem:[%s0 + $0x70] sm:$0xff]
  %v33 = vld [vmem:[%s0 + $0x78] sm:$0xff]
  %v34 = vld [vmem:[%s1] sm:$0xf]
  %v35 = vld [vmem:[%s1 + $0x4] sm:$0xf]
  %v36 = vld [vmem:[%s1 + $0x8] sm:$0xf]
  %v37 = vld [vmem:[%s1 + $0xc] sm:$0xf]
  %v38 = vld [vmem:[%s1 + $0x10] sm:$0xf]
  %v39 = vld [vmem:[%s1 + $0x14] sm:$0xf]
  %v40 = vld [vmem:[%s1 + $0x18] sm:$0xf]
  %v41 = vld [vmem:[%s1 + $0x1c] sm:$0xf]
  %v42 = vld [vmem:[%s1 + $0x20] sm:$0xf]
  %v43 = vld [vmem:[%s1 + $0x24] sm:$0xf]
  %v44 = vld [vmem:[%s1 + $0x28] sm:$0xf]
  %v45 = vld [vmem:[%s1 + $0x2c] sm:$0xf]
  %v46 = vld [vmem:[%s1 + $0x30] sm:$0xf]
  %v47 = vld [vmem:[%s1 + $0x34] sm:$0xf]
  %v48 = vld [vmem:[%s1 + $0x38] sm:$0xf]
  %v49 = vld [vmem:[%s1 + $0x3c] sm:$0xf]
  %v50 = vld [vmem:[%s1 + $0x40] sm:$0xf]
  %v51 = vld [vmem:[%s1 + $0x44] sm:$0xf]
  %v52 = vld [vmem:[%s1 + $0x48] sm:$0xf]
  %v53 = vld [vmem:[%s1 + $0x4c] sm:$0xf]
  %v54 = vld [vmem:[%s1 + $0x50] sm:$0xf]
  %v55 = vld [vmem:[%s1 + $0x54] sm:$0xf]
  %v56 = vld [vmem:[%s1 + $0x58] sm:$0xf]
  %v57 = vld [vmem:[%s1 + $0x5c] sm:$0xf]
  %v58 = vld [vmem:[%s1 + $0x60] sm:$0xf]
  %v59 = vld [vmem:[%s1 + $0x64] sm:$0xf]
  %v60 = vld [vmem:[%s1 + $0x68] sm:$0xf]
  %v61 = vld [vmem:[%s1 + $0x6c] sm:$0xf]
  %v62 = vld [vmem:[%s1 + $0x70] sm:$0xf]
  %v63 = vld [vmem:[%s1 + $0x74] sm:$0xf]
  %v64 = vld [vmem:[%s1 + $0x78] sm:$0xf]
  %v65 = vld [vmem:[%s1 + $0x7c] sm:$0xf]
  %v82 = vunpack.c.l.b16 %v18
  %v83 = vunpack.c.h.b16 %v18
  %v84 = vunpack.c.l.b16 %v19
  %v85 = vunpack.c.h.b16 %v19
  %v86 = vunpack.c.l.b16 %v20
  %v87 = vunpack.c.h.b16 %v20
  %v88 = vunpack.c.l.b16 %v21
  %v89 = vunpack.c.h.b16 %v21
  %v90 = vunpack.c.l.b16 %v22
  %v91 = vunpack.c.h.b16 %v22
  %v92 = vunpack.c.l.b16 %v23
  %v93 = vunpack.c.h.b16 %v23
  %v94 = vunpack.c.l.b16 %v24
  %v95 = vunpack.c.h.b16 %v24
  %v96 = vunpack.c.l.b16 %v25
  %v97 = vunpack.c.h.b16 %v25
  %v98 = vunpack.c.l.b16 %v26
  %v99 = vunpack.c.h.b16 %v26
  %v100 = vunpack.c.l.b16 %v27
  %v101 = vunpack.c.h.b16 %v27
  %v102 = vunpack.c.l.b16 %v28
  %v103 = vunpack.c.h.b16 %v28
  %v104 = vunpack.c.l.b16 %v29
  %v105 = vunpack.c.h.b16 %v29
  %v106 = vunpack.c.l.b16 %v30
  %v107 = vunpack.c.h.b16 %v30
  %v108 = vunpack.c.l.b16 %v31
  %v109 = vunpack.c.h.b16 %v31
  %v110 = vunpack.c.l.b16 %v32
  %v111 = vunpack.c.h.b16 %v32
  %v112 = vunpack.c.l.b16 %v33
  %v113 = vunpack.c.h.b16 %v33
  %v114 = vpack.c.b16 %v84, %v82
  %v115 = vpack.c.b16 %v85, %v83
  %v116 = vpack.c.b16 %v88, %v86
  %v117 = vpack.c.b16 %v89, %v87
  %v118 = vpack.c.b16 %v92, %v90
  %v119 = vpack.c.b16 %v93, %v91
  %v120 = vpack.c.b16 %v96, %v94
  %v121 = vpack.c.b16 %v97, %v95
  %v122 = vpack.c.b16 %v100, %v98
  %v123 = vpack.c.b16 %v101, %v99
  %v124 = vpack.c.b16 %v104, %v102
  %v125 = vpack.c.b16 %v105, %v103
  %v126 = vpack.c.b16 %v108, %v106
  %v127 = vpack.c.b16 %v109, %v107
  %v128 = vpack.c.b16 %v112, %v110
  %v129 = vpack.c.b16 %v113, %v111
  %v178 = vunpack.c.l.b16 %v34
  %v179 = vunpack.c.l.b16 %v35
  %v180 = vunpack.c.l.b16 %v36
  %v181 = vunpack.c.l.b16 %v37
  %v182 = vunpack.c.l.b16 %v38
  %v183 = vunpack.c.l.b16 %v39
  %v184 = vunpack.c.l.b16 %v40
  %v185 = vunpack.c.l.b16 %v41
  %v186 = vunpack.c.l.b16 %v42
  %v187 = vunpack.c.l.b16 %v43
  %v188 = vunpack.c.l.b16 %v44
  %v189 = vunpack.c.l.b16 %v45
  %v190 = vunpack.c.l.b16 %v46
  %v191 = vunpack.c.l.b16 %v47
  %v192 = vunpack.c.l.b16 %v48
  %v193 = vunpack.c.l.b16 %v49
  %v194 = vunpack.c.l.b16 %v50
  %v195 = vunpack.c.l.b16 %v51
  %v196 = vunpack.c.l.b16 %v52
  %v197 = vunpack.c.l.b16 %v53
  %v198 = vunpack.c.l.b16 %v54
  %v199 = vunpack.c.l.b16 %v55
  %v200 = vunpack.c.l.b16 %v56
  %v201 = vunpack.c.l.b16 %v57
  %v202 = vunpack.c.l.b16 %v58
  %v203 = vunpack.c.l.b16 %v59
  %v204 = vunpack.c.l.b16 %v60
  %v205 = vunpack.c.l.b16 %v61
  %v206 = vunpack.c.l.b16 %v62
  %v207 = vunpack.c.l.b16 %v63
  %v208 = vunpack.c.l.b16 %v64
  %v209 = vunpack.c.l.b16 %v65
  %v210 = vpack.c.b16 %v179, %v178
  %v211 = vpack.c.b16 %v181, %v180
  %v212 = vpack.c.b16 %v183, %v182
  %v213 = vpack.c.b16 %v185, %v184
  %v214 = vpack.c.b16 %v187, %v186
  %v215 = vpack.c.b16 %v189, %v188
  %v216 = vpack.c.b16 %v191, %v190
  %v217 = vpack.c.b16 %v193, %v192
  %v218 = vpack.c.b16 %v195, %v194
  %v219 = vpack.c.b16 %v197, %v196
  %v220 = vpack.c.b16 %v199, %v198
  %v221 = vpack.c.b16 %v201, %v200
  %v222 = vpack.c.b16 %v203, %v202
  %v223 = vpack.c.b16 %v205, %v204
  %v224 = vpack.c.b16 %v207, %v206
  %v225 = vpack.c.b16 %v209, %v208
  %242 = vmatprep.subr.bf16.mxu0 0
  %243 = vmatpush1.bf16.msra.mxu0 %v210
  %244 = vmatprep.subr.bf16.mxu0 0
  %245 = vmatpush1.bf16.msra.mxu0 %v211
  %246 = vmatprep.subr.bf16.mxu0 0
  %247 = vmatpush1.bf16.msra.mxu0 %v212
  %248 = vmatprep.subr.bf16.mxu0 0
  %249 = vmatpush1.bf16.msra.mxu0 %v213
  %250 = vmatprep.subr.bf16.mxu0 0
  %251 = vmatpush1.bf16.msra.mxu0 %v214
  %252 = vmatprep.subr.bf16.mxu0 0
  %253 = vmatpush1.bf16.msra.mxu0 %v215
  %254 = vmatprep.subr.bf16.mxu0 0
  %255 = vmatpush1.bf16.msra.mxu0 %v216
  %256 = vmatprep.subr.bf16.mxu0 0
  %257 = vmatpush1.bf16.msra.mxu0 %v217
  %258 = vmatprep.subr.bf16.mxu0 0
  %259 = vmatpush1.bf16.msra.mxu0 %v218
  %260 = vmatprep.subr.bf16.mxu0 0
  %261 = vmatpush1.bf16.msra.mxu0 %v219
  %262 = vmatprep.subr.bf16.mxu0 0
  %263 = vmatpush1.bf16.msra.mxu0 %v220
  %264 = vmatprep.subr.bf16.mxu0 0
  %265 = vmatpush1.bf16.msra.mxu0 %v221
  %266 = vmatprep.subr.bf16.mxu0 0
  %267 = vmatpush1.bf16.msra.mxu0 %v222
  %268 = vmatprep.subr.bf16.mxu0 0
  %269 = vmatpush1.bf16.msra.mxu0 %v223
  %270 = vmatprep.subr.bf16.mxu0 0
  %271 = vmatpush1.bf16.msra.mxu0 %v224
  %272 = vmatprep.subr.bf16.mxu0 0
  %273 = vmatpush1.bf16.msra.mxu0 %v225
  %274 = vmatprep.mubr.bf16.mxu0 %v115
  %275 = vmatmul.mubr.bf16.gmra.mrb[0].mxu0 %v114
  %v276 = vpop.f32.mrb[0].mxu0
  %v277 = vadd.f32 0.0, %v276
  %v278 = vpop.f32.mrb[0].mxu0
  %v279 = vpop.f32.mrb[0].mxu0
  %v280 = vadd.f32 0.0, %v279
  %v281 = vpop.f32.mrb[0].mxu0
  %282 = vmatprep.mubr.bf16.mxu0 %v117
  %283 = vmatmul.mubr.bf16.gmra.mrb[0].mxu0 %v116
  %v284 = vpop.f32.mrb[0].mxu0
  %v285 = vadd.f32 0.0, %v284
  %v286 = vpop.f32.mrb[0].mxu0
  %v287 = vpop.f32.mrb[0].mxu0
  %v288 = vadd.f32 0.0, %v287
  %v289 = vpop.f32.mrb[0].mxu0
  %290 = vmatprep.mubr.bf16.mxu0 %v119
  %291 = vmatmul.mubr.bf16.gmra.mrb[0].mxu0 %v118
  %v292 = vpop.f32.mrb[0].mxu0
  %v293 = vadd.f32 0.0, %v292
  %v294 = vpop.f32.mrb[0].mxu0
  %v295 = vpop.f32.mrb[0].mxu0
  %v296 = vadd.f32 0.0, %v295
  %v297 = vpop.f32.mrb[0].mxu0
  %298 = vmatprep.mubr.bf16.mxu0 %v121
  %299 = vmatmul.mubr.bf16.gmra.mrb[0].mxu0 %v120
  %v300 = vpop.f32.mrb[0].mxu0
  %v301 = vadd.f32 0.0, %v300
  %v302 = vpop.f32.mrb[0].mxu0
  %v303 = vpop.f32.mrb[0].mxu0
  %v304 = vadd.f32 0.0, %v303
  %v305 = vpop.f32.mrb[0].mxu0
  %306 = vmatprep.mubr.bf16.mxu0 %v123
  %307 = vmatmul.mubr.bf16.gmra.mrb[0].mxu0 %v122
  %v308 = vpop.f32.mrb[0].mxu0
  %v309 = vadd.f32 0.0, %v308
  %v310 = vpop.f32.mrb[0].mxu0
  %v311 = vpop.f32.mrb[0].mxu0
  %v312 = vadd.f32 0.0, %v311
  %v313 = vpop.f32.mrb[0].mxu0
  %314 = vmatprep.mubr.bf16.mxu0 %v125
  %315 = vmatmul.mubr.bf16.gmra.mrb[0].mxu0 %v124
  %v316 = vpop.f32.mrb[0].mxu0
  %v317 = vadd.f32 0.0, %v316
  %v318 = vpop.f32.mrb[0].mxu0
  %v319 = vpop.f32.mrb[0].mxu0
  %v320 = vadd.f32 0.0, %v319
  %v321 = vpop.f32.mrb[0].mxu0
  %322 = vmatprep.mubr.bf16.mxu0 %v127
  %323 = vmatmul.mubr.bf16.gmra.mrb[0].mxu0 %v126
  %v324 = vpop.f32.mrb[0].mxu0
  %v325 = vadd.f32 0.0, %v324
  %v326 = vpop.f32.mrb[0].mxu0
  %v327 = vpop.f32.mrb[0].mxu0
  %v328 = vadd.f32 0.0, %v327
  %v329 = vpop.f32.mrb[0].mxu0
  %330 = vmatprep.mubr.bf16.mxu0 %v129
  %331 = vmatmul.mubr.bf16.gmra.mrb[0].mxu0 %v128
  %v332 = vpop.f32.mrb[0].mxu0
  %v333 = vadd.f32 0.0, %v332
  %v334 = vpop.f32.mrb[0].mxu0
  %v335 = vpop.f32.mrb[0].mxu0
  %v336 = vadd.f32 0.0, %v335
  %v337 = vpop.f32.mrb[0].mxu0
  %338 = vdwg.mxu0
  %v339 = vadd.f32 %v277, %v280
  %v340 = vadd.f32 %v339, %v285
  %v341 = vadd.f32 %v340, %v288
  %v342 = vadd.f32 %v341, %v293
  %v343 = vadd.f32 %v342, %v296
  %v344 = vadd.f32 %v343, %v301
  %v345 = vadd.f32 %v344, %v304
  %v346 = vadd.f32 %v345, %v309
  %v347 = vadd.f32 %v346, %v312
  %v348 = vadd.f32 %v347, %v317
  %v349 = vadd.f32 %v348, %v320
  %v350 = vadd.f32 %v349, %v325
  %v351 = vadd.f32 %v350, %v328
  %v352 = vadd.f32 %v351, %v333
  %v353 = vadd.f32 %v352, %v336
  %v354 = vrot.slane %v353, 4
  %v355 = vadd.f32 %v353, %v354
  %v356 = vrot.slane %v355, 2
  %v357 = vadd.f32 %v355, %v356
  %v358 = vrot.slane %v357, 1
  %v359 = vadd.f32 %v357, %v358
  %v360 = vmul.f32 %v359, 0.0078125
  %v361 = vmul.f32 %v277, %v277
  %v362 = vmul.f32 %v280, %v280
  %v363 = vmul.f32 %v285, %v285
  %v364 = vmul.f32 %v288, %v288
  %v365 = vmul.f32 %v293, %v293
  %v366 = vmul.f32 %v296, %v296
  %v367 = vmul.f32 %v301, %v301
  %v368 = vmul.f32 %v304, %v304
  %v369 = vmul.f32 %v309, %v309
  %v370 = vmul.f32 %v312, %v312
  %v371 = vmul.f32 %v317, %v317
  %v372 = vmul.f32 %v320, %v320
  %v373 = vmul.f32 %v325, %v325
  %v374 = vmul.f32 %v328, %v328
  %v375 = vmul.f32 %v333, %v333
  %v376 = vmul.f32 %v336, %v336
  %v377 = vadd.f32 %v361, %v362
  %v378 = vadd.f32 %v377, %v363
  %v379 = vadd.f32 %v378, %v364
  %v380 = vadd.f32 %v379, %v365
  %v381 = vadd.f32 %v380, %v366
  %v382 = vadd.f32 %v381, %v367
  %v383 = vadd.f32 %v382, %v368
  %v384 = vadd.f32 %v383, %v369
  %v385 = vadd.f32 %v384, %v370
  %v386 = vadd.f32 %v385, %v371
  %v387 = vadd.f32 %v386, %v372
  %v388 = vadd.f32 %v387, %v373
  %v389 = vadd.f32 %v388, %v374
  %v390 = vadd.f32 %v389, %v375
  %v391 = vadd.f32 %v390, %v376
  %v392 = vrot.slane %v391, 4
  %v393 = vadd.f32 %v391, %v392
  %v394 = vrot.slane %v393, 2
  %v395 = vadd.f32 %v393, %v394
  %v396 = vrot.slane %v395, 1
  %v397 = vadd.f32 %v395, %v396
  %v398 = vmul.f32 %v397, 0.0078125
  %v399 = vmul.f32 %v360, %v360
  %v400 = vsub.f32 %v398, %v399
  %v401 = vadd.f32 %v400, 1e-05
  %v402 = vrsqrt.pop %v401
  %v403 = vld [vmem:[%s2] sm:$0x1]
  %v404 = vmul.f32 %v403, %v402
  %v405 = vld [vmem:[%s3] sm:$0x1]
  %v406 = vmul.f32 %v360, %v404
  %v407 = vsub.f32 %v405, %v406
  %v409 = vlaneseq
  %v410 = vshrl.u32 %v409, 7
  %v411 = vsub.s32 0, %v410
  %v412 = vrot.slane %v404, %v411
  %v414 = vmul.f32 %v277, %v412
  %v415 = vmul.f32 %v280, %v412
  %v416 = vmul.f32 %v285, %v412
  %v417 = vmul.f32 %v288, %v412
  %v418 = vmul.f32 %v293, %v412
  %v419 = vmul.f32 %v296, %v412
  %v420 = vmul.f32 %v301, %v412
  %v421 = vmul.f32 %v304, %v412
  %v422 = vmul.f32 %v309, %v412
  %v423 = vmul.f32 %v312, %v412
  %v424 = vmul.f32 %v317, %v412
  %v425 = vmul.f32 %v320, %v412
  %v426 = vmul.f32 %v325, %v412
  %v427 = vmul.f32 %v328, %v412
  %v428 = vmul.f32 %v333, %v412
  %v429 = vmul.f32 %v336, %v412
  %v431 = vlaneseq
  %v432 = vshrl.u32 %v431, 7
  %v433 = vsub.s32 0, %v432
  %v434 = vrot.slane %v407, %v433
  %v436 = vadd.f32 %v414, %v434
  %v437 = vadd.f32 %v415, %v434
  %v438 = vadd.f32 %v416, %v434
  %v439 = vadd.f32 %v417, %v434
  %v440 = vadd.f32 %v418, %v434
  %v441 = vadd.f32 %v419, %v434
  %v442 = vadd.f32 %v420, %v434
  %v443 = vadd.f32 %v421, %v434
  %v444 = vadd.f32 %v422, %v434
  %v445 = vadd.f32 %v423, %v434
  %v446 = vadd.f32 %v424, %v434
  %v447 = vadd.f32 %v425, %v434
  %v448 = vadd.f32 %v426, %v434
  %v449 = vadd.f32 %v427, %v434
  %v450 = vadd.f32 %v428, %v434
  %v451 = vadd.f32 %v429, %v434
  %vm452 = vcmp.ge.f32.partialorder %v436, 0.0
  %vm453 = vcmp.ge.f32.partialorder %v437, 0.0
  %vm454 = vcmp.ge.f32.partialorder %v438, 0.0
  %vm455 = vcmp.ge.f32.partialorder %v439, 0.0
  %vm456 = vcmp.ge.f32.partialorder %v440, 0.0
  %vm457 = vcmp.ge.f32.partialorder %v441, 0.0
  %vm458 = vcmp.ge.f32.partialorder %v442, 0.0
  %vm459 = vcmp.ge.f32.partialorder %v443, 0.0
  %vm460 = vcmp.ge.f32.partialorder %v444, 0.0
  %vm461 = vcmp.ge.f32.partialorder %v445, 0.0
  %vm462 = vcmp.ge.f32.partialorder %v446, 0.0
  %vm463 = vcmp.ge.f32.partialorder %v447, 0.0
  %vm464 = vcmp.ge.f32.partialorder %v448, 0.0
  %vm465 = vcmp.ge.f32.partialorder %v449, 0.0
  %vm466 = vcmp.ge.f32.partialorder %v450, 0.0
  %vm467 = vcmp.ge.f32.partialorder %v451, 0.0
  %v468 = vmul.f32 %v436, 0.2
  %v469 = vmul.f32 %v437, 0.2
  %v470 = vmul.f32 %v438, 0.2
  %v471 = vmul.f32 %v439, 0.2
  %v472 = vmul.f32 %v440, 0.2
  %v473 = vmul.f32 %v441, 0.2
  %v474 = vmul.f32 %v442, 0.2
  %v475 = vmul.f32 %v443, 0.2
  %v476 = vmul.f32 %v444, 0.2
  %v477 = vmul.f32 %v445, 0.2
  %v478 = vmul.f32 %v446, 0.2
  %v479 = vmul.f32 %v447, 0.2
  %v480 = vmul.f32 %v448, 0.2
  %v481 = vmul.f32 %v449, 0.2
  %v482 = vmul.f32 %v450, 0.2
  %v483 = vmul.f32 %v451, 0.2
  %v484 = vsel %vm452, %v436, %v468
  %v485 = vsel %vm453, %v437, %v469
  %v486 = vsel %vm454, %v438, %v470
  %v487 = vsel %vm455, %v439, %v471
  %v488 = vsel %vm456, %v440, %v472
  %v489 = vsel %vm457, %v441, %v473
  %v490 = vsel %vm458, %v442, %v474
  %v491 = vsel %vm459, %v443, %v475
  %v492 = vsel %vm460, %v444, %v476
  %v493 = vsel %vm461, %v445, %v477
  %v494 = vsel %vm462, %v446, %v478
  %v495 = vsel %vm463, %v447, %v479
  %v496 = vsel %vm464, %v448, %v480
  %v497 = vsel %vm465, %v449, %v481
  %v498 = vsel %vm466, %v450, %v482
  %v499 = vsel %vm467, %v451, %v483
  %v500 = vpack.c.bf16 %v485, %v484
  %v501 = vpack.c.bf16 %v487, %v486
  %v502 = vpack.c.bf16 %v489, %v488
  %v503 = vpack.c.bf16 %v491, %v490
  %v504 = vpack.c.bf16 %v493, %v492
  %v505 = vpack.c.bf16 %v495, %v494
  %v506 = vpack.c.bf16 %v497, %v496
  %v507 = vpack.c.bf16 %v499, %v498
  %v516 = vunpack.c.l.b16 %v500
  %v517 = vunpack.c.h.b16 %v500
  %v518 = vunpack.c.l.b16 %v501
  %v519 = vunpack.c.h.b16 %v501
  %v520 = vunpack.c.l.b16 %v502
  %v521 = vunpack.c.h.b16 %v502
  %v522 = vunpack.c.l.b16 %v503
  %v523 = vunpack.c.h.b16 %v503
  %v524 = vunpack.c.l.b16 %v504
  %v525 = vunpack.c.h.b16 %v504
  %v526 = vunpack.c.l.b16 %v505
  %v527 = vunpack.c.h.b16 %v505
  %v528 = vunpack.c.l.b16 %v506
  %v529 = vunpack.c.h.b16 %v506
  %v530 = vunpack.c.l.b16 %v507
  %v531 = vunpack.c.h.b16 %v507
  %v532 = vpack.c.b16 %v516, %v516
  %v533 = vpack.c.b16 %v517, %v517
  %v534 = vpack.c.b16 %v518, %v518
  %v535 = vpack.c.b16 %v519, %v519
  %v536 = vpack.c.b16 %v520, %v520
  %v537 = vpack.c.b16 %v521, %v521
  %v538 = vpack.c.b16 %v522, %v522
  %v539 = vpack.c.b16 %v523, %v523
  %v540 = vpack.c.b16 %v524, %v524
  %v541 = vpack.c.b16 %v525, %v525
  %v542 = vpack.c.b16 %v526, %v526
  %v543 = vpack.c.b16 %v527, %v527
  %v544 = vpack.c.b16 %v528, %v528
  %v545 = vpack.c.b16 %v529, %v529
  %v546 = vpack.c.b16 %v530, %v530
  %v547 = vpack.c.b16 %v531, %v531
  %564 = vst [vmem:[%s4] sm:$0xf] %v532
  %565 = vst [vmem:[%s4 + $0x4] sm:$0xf] %v533
  %566 = vst [vmem:[%s4 + $0x8] sm:$0xf] %v534
  %567 = vst [vmem:[%s4 + $0xc] sm:$0xf] %v535
  %568 = vst [vmem:[%s4 + $0x10] sm:$0xf] %v536
  %569 = vst [vmem:[%s4 + $0x14] sm:$0xf] %v537
  %570 = vst [vmem:[%s4 + $0x18] sm:$0xf] %v538
  %571 = vst [vmem:[%s4 + $0x1c] sm:$0xf] %v539
  %572 = vst [vmem:[%s4 + $0x20] sm:$0xf] %v540
  %573 = vst [vmem:[%s4 + $0x24] sm:$0xf] %v541
  %574 = vst [vmem:[%s4 + $0x28] sm:$0xf] %v542
  %575 = vst [vmem:[%s4 + $0x2c] sm:$0xf] %v543
  %576 = vst [vmem:[%s4 + $0x30] sm:$0xf] %v544
  %577 = vst [vmem:[%s4 + $0x34] sm:$0xf] %v545
  %578 = vst [vmem:[%s4 + $0x38] sm:$0xf] %v546
  %579 = vst [vmem:[%s4 + $0x3c] sm:$0xf] %v547
  // Predicated region
  $region18: #{_lambda_.6} parent=0 // pred_check
    _
  $region19: #{_lambda_.6} parent=0 // pred_check_branch
    %581 = sbr.rel (0) target = $region21
  $region20: #{_lambda_.6} parent=0 // pred_region
    _
  $region21: #{_lambda_.6} parent=0 // pred_fallthru
    _
  // Predicated region
  $region22: #{_lambda_.6} parent=0 // pred_check
    _
  $region23: #{_lambda_.6} parent=0 // pred_check_branch
    %583 = sbr.rel (0) target = $region25
  $region24: #{_lambda_.6} parent=0 // pred_region
    _
  $region25: #{_lambda_.6} parent=0 // pred_fallthru
    _

// kernel: _lambda_.7
$region0: #{_lambda_.7}
  #allocation0 [shape = 'u32[]', space=smem, size = 0x4, offset = 0x4, fixed_abs, tag = 'smem constant byte address 0x4 - core index']
  #allocation1 [shape = 'u32[144,128]{1,0:T(1,128)}', space=vmem, size = 0x12000, scoped, tag = 'internal scratch']
  %s0 = inlined_call_operand.vmem [shape: bf16[32,512], index: 0, kind: input, shape index: {}]
  %s1 = inlined_call_operand.vmem [shape: bf16[512,128], index: 1, kind: input, shape index: {}]
  %s2 = inlined_call_operand.vmem [shape: f32[1,128], index: 2, kind: input, shape index: {}]
  %s3 = inlined_call_operand.vmem [shape: f32[1,128], index: 3, kind: input, shape index: {}]
  %s4 = inlined_call_operand.vmem [shape: bf16[32,128], index: 4, kind: output, shape index: {}]
  %s5 = sld [smem:[#allocation0]]
  $region26: #{_lambda_.7} parent=0
    _
  %s7 = ssub.s32 1, %s5
  %s8 = scalar_select 0, %s7, %s5
  // Predicated region
  $region2: #{_lambda_.7} parent=0 // pred_check
    _
  $region3: #{_lambda_.7} parent=0 // pred_check_branch
    %10 = sbr.rel (0) target = $region5
  $region4: #{_lambda_.7} parent=0 // pred_region
    _
  $region5: #{_lambda_.7} parent=0 // pred_fallthru
    _
  // Predicated region
  $region6: #{_lambda_.7} parent=0 // pred_check
    _
  $region7: #{_lambda_.7} parent=0 // pred_check_branch
    %12 = sbr.rel (0) target = $region9
  $region8: #{_lambda_.7} parent=0 // pred_region
    _
  $region9: #{_lambda_.7} parent=0 // pred_fallthru
    _
  // Predicated region
  $region10: #{_lambda_.7} parent=0 // pred_check
    _
  $region11: #{_lambda_.7} parent=0 // pred_check_branch
    %14 = sbr.rel (0) target = $region13
  $region12: #{_lambda_.7} parent=0 // pred_region
    _
  $region13: #{_lambda_.7} parent=0 // pred_fallthru
    _
  // Predicated region
  $region14: #{_lambda_.7} parent=0 // pred_check
    _
  $region15: #{_lambda_.7} parent=0 // pred_check_branch
    %16 = sbr.rel (0) target = $region17
  $region16: #{_lambda_.7} parent=0 // pred_region
    _
  $region17: #{_lambda_.7} parent=0 // pred_fallthru
    _
  %v18 = vld [vmem:[%s0] sm:$0xff]
  %v19 = vld [vmem:[%s0 + $0x8] sm:$0xff]
  %v20 = vld [vmem:[%s0 + $0x10] sm:$0xff]
  %v21 = vld [vmem:[%s0 + $0x18] sm:$0xff]
  %v22 = vld [vmem:[%s0 + $0x20] sm:$0xff]
  %v23 = vld [vmem:[%s0 + $0x28] sm:$0xff]
  %v24 = vld [vmem:[%s0 + $0x30] sm:$0xff]
  %v25 = vld [vmem:[%s0 + $0x38] sm:$0xff]
  %v26 = vld [vmem:[%s1] sm:$0xf]
  %v27 = vld [vmem:[%s1 + $0x4] sm:$0xf]
  %v28 = vld [vmem:[%s1 + $0x8] sm:$0xf]
  %v29 = vld [vmem:[%s1 + $0xc] sm:$0xf]
  %v30 = vld [vmem:[%s1 + $0x10] sm:$0xf]
  %v31 = vld [vmem:[%s1 + $0x14] sm:$0xf]
  %v32 = vld [vmem:[%s1 + $0x18] sm:$0xf]
  %v33 = vld [vmem:[%s1 + $0x1c] sm:$0xf]
  %v34 = vld [vmem:[%s1 + $0x20] sm:$0xf]
  %v35 = vld [vmem:[%s1 + $0x24] sm:$0xf]
  %v36 = vld [vmem:[%s1 + $0x28] sm:$0xf]
  %v37 = vld [vmem:[%s1 + $0x2c] sm:$0xf]
  %v38 = vld [vmem:[%s1 + $0x30] sm:$0xf]
  %v39 = vld [vmem:[%s1 + $0x34] sm:$0xf]
  %v40 = vld [vmem:[%s1 + $0x38] sm:$0xf]
  %v41 = vld [vmem:[%s1 + $0x3c] sm:$0xf]
  %v42 = vld [vmem:[%s1 + $0x40] sm:$0xf]
  %v43 = vld [vmem:[%s1 + $0x44] sm:$0xf]
  %v44 = vld [vmem:[%s1 + $0x48] sm:$0xf]
  %v45 = vld [vmem:[%s1 + $0x4c] sm:$0xf]
  %v46 = vld [vmem:[%s1 + $0x50] sm:$0xf]
  %v47 = vld [vmem:[%s1 + $0x54] sm:$0xf]
  %v48 = vld [vmem:[%s1 + $0x58] sm:$0xf]
  %v49 = vld [vmem:[%s1 + $0x5c] sm:$0xf]
  %v50 = vld [vmem:[%s1 + $0x60] sm:$0xf]
  %v51 = vld [vmem:[%s1 + $0x64] sm:$0xf]
  %v52 = vld [vmem:[%s1 + $0x68] sm:$0xf]
  %v53 = vld [vmem:[%s1 + $0x6c] sm:$0xf]
  %v54 = vld [vmem:[%s1 + $0x70] sm:$0xf]
  %v55 = vld [vmem:[%s1 + $0x74] sm:$0xf]
  %v56 = vld [vmem:[%s1 + $0x78] sm:$0xf]
  %v57 = vld [vmem:[%s1 + $0x7c] sm:$0xf]
  %v58 = vld [vmem:[%s1 + $0x80] sm:$0xf]
  %v59 = vld [vmem:[%s1 + $0x84] sm:$0xf]
  %v60 = vld [vmem:[%s1 + $0x88] sm:$0xf]
  %v61 = vld [vmem:[%s1 + $0x8c] sm:$0xf]
  %v62 = vld [vmem:[%s1 + $0x90] sm:$0xf]
  %v63 = vld [vmem:[%s1 + $0x94] sm:$0xf]
  %v64 = vld [vmem:[%s1 + $0x98] sm:$0xf]
  %v65 = vld [vmem:[%s1 + $0x9c] sm:$0xf]
  %v66 = vld [vmem:[%s1 + $0xa0] sm:$0xf]
  %v67 = vld [vmem:[%s1 + $0xa4] sm:$0xf]
  %v68 = vld [vmem:[%s1 + $0xa8] sm:$0xf]
  %v69 = vld [vmem:[%s1 + $0xac] sm:$0xf]
  %v70 = vld [vmem:[%s1 + $0xb0] sm:$0xf]
  %v71 = vld [vmem:[%s1 + $0xb4] sm:$0xf]
  %v72 = vld [vmem:[%s1 + $0xb8] sm:$0xf]
  %v73 = vld [vmem:[%s1 + $0xbc] sm:$0xf]
  %v74 = vld [vmem:[%s1 + $0xc0] sm:$0xf]
  %v75 = vld [vmem:[%s1 + $0xc4] sm:$0xf]
  %v76 = vld [vmem:[%s1 + $0xc8] sm:$0xf]
  %v77 = vld [vmem:[%s1 + $0xcc] sm:$0xf]
  %v78 = vld [vmem:[%s1 + $0xd0] sm:$0xf]
  %v79 = vld [vmem:[%s1 + $0xd4] sm:$0xf]
  %v80 = vld [vmem:[%s1 + $0xd8] sm:$0xf]
  %v81 = vld [vmem:[%s1 + $0xdc] sm:$0xf]
  %v82 = vld [vmem:[%s1 + $0xe0] sm:$0xf]
  %v83 = vld [vmem:[%s1 + $0xe4] sm:$0xf]
  %v84 = vld [vmem:[%s1 + $0xe8] sm:$0xf]
  %v85 = vld [vmem:[%s1 + $0xec] sm:$0xf]
  %v86 = vld [vmem:[%s1 + $0xf0] sm:$0xf]
  %v87 = vld [vmem:[%s1 + $0xf4] sm:$0xf]
  %v88 = vld [vmem:[%s1 + $0xf8] sm:$0xf]
  %v89 = vld [vmem:[%s1 + $0xfc] sm:$0xf]
  %v98 = vunpack.c.l.b16 %v18
  %v99 = vunpack.c.h.b16 %v18
  %v100 = vunpack.c.l.b16 %v19
  %v101 = vunpack.c.h.b16 %v19
  %v102 = vunpack.c.l.b16 %v20
  %v103 = vunpack.c.h.b16 %v20
  %v104 = vunpack.c.l.b16 %v21
  %v105 = vunpack.c.h.b16 %v21
  %v106 = vunpack.c.l.b16 %v22
  %v107 = vunpack.c.h.b16 %v22
  %v108 = vunpack.c.l.b16 %v23
  %v109 = vunpack.c.h.b16 %v23
  %v110 = vunpack.c.l.b16 %v24
  %v111 = vunpack.c.h.b16 %v24
  %v112 = vunpack.c.l.b16 %v25
  %v113 = vunpack.c.h.b16 %v25
  %v114 = vpack.c.b16 %v102, %v98
  %v115 = vpack.c.b16 %v103, %v99
  %v116 = vpack.c.b16 %v104, %v100
  %v117 = vpack.c.b16 %v105, %v101
  %v118 = vpack.c.b16 %v110, %v106
  %v119 = vpack.c.b16 %v111, %v107
  %v120 = vpack.c.b16 %v112, %v108
  %v121 = vpack.c.b16 %v113, %v109
  %v194 = vunpack.c.l.b16 %v26
  %v195 = vunpack.c.l.b16 %v27
  %v196 = vunpack.c.l.b16 %v28
  %v197 = vunpack.c.l.b16 %v29
  %v198 = vunpack.c.l.b16 %v30
  %v199 = vunpack.c.l.b16 %v31
  %v200 = vunpack.c.l.b16 %v32
  %v201 = vunpack.c.l.b16 %v33
  %v202 = vunpack.c.l.b16 %v34
  %v203 = vunpack.c.l.b16 %v35
  %v204 = vunpack.c.l.b16 %v36
  %v205 = vunpack.c.l.b16 %v37
  %v206 = vunpack.c.l.b16 %v38
  %v207 = vunpack.c.l.b16 %v39
  %v208 = vunpack.c.l.b16 %v40
  %v209 = vunpack.c.l.b16 %v41
  %v210 = vunpack.c.l.b16 %v42
  %v211 = vunpack.c.l.b16 %v43
  %v212 = vunpack.c.l.b16 %v44
  %v213 = vunpack.c.l.b16 %v45
  %v214 = vunpack.c.l.b16 %v46
  %v215 = vunpack.c.l.b16 %v47
  %v216 = vunpack.c.l.b16 %v48
  %v217 = vunpack.c.l.b16 %v49
  %v218 = vunpack.c.l.b16 %v50
  %v219 = vunpack.c.l.b16 %v51
  %v220 = vunpack.c.l.b16 %v52
  %v221 = vunpack.c.l.b16 %v53
  %v222 = vunpack.c.l.b16 %v54
  %v223 = vunpack.c.l.b16 %v55
  %v224 = vunpack.c.l.b16 %v56
  %v225 = vunpack.c.l.b16 %v57
  %v226 = vunpack.c.l.b16 %v58
  %v227 = vunpack.c.l.b16 %v59
  %v228 = vunpack.c.l.b16 %v60
  %v229 = vunpack.c.l.b16 %v61
  %v230 = vunpack.c.l.b16 %v62
  %v231 = vunpack.c.l.b16 %v63
  %v232 = vunpack.c.l.b16 %v64
  %v233 = vunpack.c.l.b16 %v65
  %v234 = vunpack.c.l.b16 %v66
  %v235 = vunpack.c.l.b16 %v67
  %v236 = vunpack.c.l.b16 %v68
  %v237 = vunpack.c.l.b16 %v69
  %v238 = vunpack.c.l.b16 %v70
  %v239 = vunpack.c.l.b16 %v71
  %v240 = vunpack.c.l.b16 %v72
  %v241 = vunpack.c.l.b16 %v73
  %v242 = vunpack.c.l.b16 %v74
  %v243 = vunpack.c.l.b16 %v75
  %v244 = vunpack.c.l.b16 %v76
  %v245 = vunpack.c.l.b16 %v77
  %v246 = vunpack.c.l.b16 %v78
  %v247 = vunpack.c.l.b16 %v79
  %v248 = vunpack.c.l.b16 %v80
  %v249 = vunpack.c.l.b16 %v81
  %v250 = vunpack.c.l.b16 %v82
  %v251 = vunpack.c.l.b16 %v83
  %v252 = vunpack.c.l.b16 %v84
  %v253 = vunpack.c.l.b16 %v85
  %v254 = vunpack.c.l.b16 %v86
  %v255 = vunpack.c.l.b16 %v87
  %v256 = vunpack.c.l.b16 %v88
  %v257 = vunpack.c.l.b16 %v89
  %v258 = vpack.c.b16 %v195, %v194
  %v259 = vpack.c.b16 %v197, %v196
  %v260 = vpack.c.b16 %v199, %v198
  %v261 = vpack.c.b16 %v201, %v200
  %v262 = vpack.c.b16 %v203, %v202
  %v263 = vpack.c.b16 %v205, %v204
  %v264 = vpack.c.b16 %v207, %v206
  %v265 = vpack.c.b16 %v209, %v208
  %v266 = vpack.c.b16 %v211, %v210
  %v267 = vpack.c.b16 %v213, %v212
  %v268 = vpack.c.b16 %v215, %v214
  %v269 = vpack.c.b16 %v217, %v216
  %v270 = vpack.c.b16 %v219, %v218
  %v271 = vpack.c.b16 %v221, %v220
  %v272 = vpack.c.b16 %v223, %v222
  %v273 = vpack.c.b16 %v225, %v224
  %v274 = vpack.c.b16 %v227, %v226
  %v275 = vpack.c.b16 %v229, %v228
  %v276 = vpack.c.b16 %v231, %v230
  %v277 = vpack.c.b16 %v233, %v232
  %v278 = vpack.c.b16 %v235, %v234
  %v279 = vpack.c.b16 %v237, %v236
  %v280 = vpack.c.b16 %v239, %v238
  %v281 = vpack.c.b16 %v241, %v240
  %v282 = vpack.c.b16 %v243, %v242
  %v283 = vpack.c.b16 %v245, %v244
  %v284 = vpack.c.b16 %v247, %v246
  %v285 = vpack.c.b16 %v249, %v248
  %v286 = vpack.c.b16 %v251, %v250
  %v287 = vpack.c.b16 %v253, %v252
  %v288 = vpack.c.b16 %v255, %v254
  %v289 = vpack.c.b16 %v257, %v256
  %322 = vmatprep.subr.bf16.mxu0 0
  %323 = vmatpush1.bf16.msra.mxu0 %v258
  %324 = vmatprep.subr.bf16.mxu0 0
  %325 = vmatpush1.bf16.msra.mxu0 %v259
  %326 = vmatprep.subr.bf16.mxu0 0
  %327 = vmatpush1.bf16.msra.mxu0 %v260
  %328 = vmatprep.subr.bf16.mxu0 0
  %329 = vmatpush1.bf16.msra.mxu0 %v261
  %330 = vmatprep.subr.bf16.mxu0 0
  %331 = vmatpush1.bf16.msra.mxu0 %v262
  %332 = vmatprep.subr.bf16.mxu0 0
  %333 = vmatpush1.bf16.msra.mxu0 %v263
  %334 = vmatprep.subr.bf16.mxu0 0
  %335 = vmatpush1.bf16.msra.mxu0 %v264
  %336 = vmatprep.subr.bf16.mxu0 0
  %337 = vmatpush1.bf16.msra.mxu0 %v265
  %338 = vmatprep.subr.bf16.mxu0 0
  %339 = vmatpush1.bf16.msra.mxu0 %v266
  %340 = vmatprep.subr.bf16.mxu0 0
  %341 = vmatpush1.bf16.msra.mxu0 %v267
  %342 = vmatprep.subr.bf16.mxu0 0
  %343 = vmatpush1.bf16.msra.mxu0 %v268
  %344 = vmatprep.subr.bf16.mxu0 0
  %345 = vmatpush1.bf16.msra.mxu0 %v269
  %346 = vmatprep.subr.bf16.mxu0 0
  %347 = vmatpush1.bf16.msra.mxu0 %v270
  %348 = vmatprep.subr.bf16.mxu0 0
  %349 = vmatpush1.bf16.msra.mxu0 %v271
  %350 = vmatprep.subr.bf16.mxu0 0
  %351 = vmatpush1.bf16.msra.mxu0 %v272
  %352 = vmatprep.subr.bf16.mxu0 0
  %353 = vmatpush1.bf16.msra.mxu0 %v273
  %354 = vmatprep.mubr.bf16.mxu0 %v115
  %355 = vmatmul.mubr.bf16.gmra.mrb[0].mxu0 %v114
  %v356 = vpop.f32.mrb[0].mxu0
  %v357 = vadd.f32 0.0, %v356
  %v358 = vpop.f32.mrb[0].mxu0
  %v359 = vpop.f32.mrb[0].mxu0
  %v360 = vadd.f32 0.0, %v359
  %v361 = vpop.f32.mrb[0].mxu0
  %362 = vmatprep.mubr.bf16.mxu0 %v119
  %363 = vmatmul.mubr.bf16.gmra.mrb[0].mxu0 %v118
  %v364 = vpop.f32.mrb[0].mxu0
  %v365 = vadd.f32 0.0, %v364
  %v366 = vpop.f32.mrb[0].mxu0
  %v367 = vpop.f32.mrb[0].mxu0
  %v368 = vadd.f32 0.0, %v367
  %v369 = vpop.f32.mrb[0].mxu0
  %370 = vdwg.mxu0
  %371 = vmatprep.subr.bf16.mxu0 0
  %372 = vmatpush1.bf16.msra.mxu0 %v274
  %373 = vmatprep.subr.bf16.mxu0 0
  %374 = vmatpush1.bf16.msra.mxu0 %v275
  %375 = vmatprep.subr.bf16.mxu0 0
  %376 = vmatpush1.bf16.msra.mxu0 %v276
  %377 = vmatprep.subr.bf16.mxu0 0
  %378 = vmatpush1.bf16.msra.mxu0 %v277
  %379 = vmatprep.subr.bf16.mxu0 0
  %380 = vmatpush1.bf16.msra.mxu0 %v278
  %381 = vmatprep.subr.bf16.mxu0 0
  %382 = vmatpush1.bf16.msra.mxu0 %v279
  %383 = vmatprep.subr.bf16.mxu0 0
  %384 = vmatpush1.bf16.msra.mxu0 %v280
  %385 = vmatprep.subr.bf16.mxu0 0
  %386 = vmatpush1.bf16.msra.mxu0 %v281
  %387 = vmatprep.subr.bf16.mxu0 0
  %388 = vmatpush1.bf16.msra.mxu0 %v282
  %389 = vmatprep.subr.bf16.mxu0 0
  %390 = vmatpush1.bf16.msra.mxu0 %v283
  %391 = vmatprep.subr.bf16.mxu0 0
  %392 = vmatpush1.bf16.msra.mxu0 %v284
  %393 = vmatprep.subr.bf16.mxu0 0
  %394 = vmatpush1.bf16.msra.mxu0 %v285
  %395 = vmatprep.subr.bf16.mxu0 0
  %396 = vmatpush1.bf16.msra.mxu0 %v286
  %397 = vmatprep.subr.bf16.mxu0 0
  %398 = vmatpush1.bf16.msra.mxu0 %v287
  %399 = vmatprep.subr.bf16.mxu0 0
  %400 = vmatpush1.bf16.msra.mxu0 %v288
  %401 = vmatprep.subr.bf16.mxu0 0
  %402 = vmatpush1.bf16.msra.mxu0 %v289
  %403 = vmatprep.mubr.bf16.mxu0 %v117
  %404 = vmatmul.mubr.bf16.gmra.mrb[0].mxu0 %v116
  %v405 = vpop.f32.mrb[0].mxu0
  %v406 = vadd.f32 %v357, %v405
  %v407 = vpop.f32.mrb[0].mxu0
  %v408 = vpop.f32.mrb[0].mxu0
  %v409 = vadd.f32 %v360, %v408
  %v410 = vpop.f32.mrb[0].mxu0
  %411 = vmatprep.mubr.bf16.mxu0 %v121
  %412 = vmatmul.mubr.bf16.gmra.mrb[0].mxu0 %v120
  %v413 = vpop.f32.mrb[0].mxu0
  %v414 = vadd.f32 %v365, %v413
  %v415 = vpop.f32.mrb[0].mxu0
  %v416 = vpop.f32.mrb[0].mxu0
  %v417 = vadd.f32 %v368, %v416
  %v418 = vpop.f32.mrb[0].mxu0
  %419 = vdwg.mxu0
  %v420 = vadd.f32 %v406, %v409
  %v421 = vadd.f32 %v420, %v414
  %v422 = vadd.f32 %v421, %v417
  %v423 = vrot.slane %v422, 4
  %v424 = vadd.f32 %v422, %v423
  %v425 = vrot.slane %v424, 2
  %v426 = vadd.f32 %v424, %v425
  %v427 = vrot.slane %v426, 1
  %v428 = vadd.f32 %v426, %v427
  %v429 = vmul.f32 %v428, 0.03125
  %v430 = vmul.f32 %v406, %v406
  %v431 = vmul.f32 %v409, %v409
  %v432 = vmul.f32 %v414, %v414
  %v433 = vmul.f32 %v417, %v417
  %v434 = vadd.f32 %v430, %v431
  %v435 = vadd.f32 %v434, %v432
  %v436 = vadd.f32 %v435, %v433
  %v437 = vrot.slane %v436, 4
  %v438 = vadd.f32 %v436, %v437
  %v439 = vrot.slane %v438, 2
  %v440 = vadd.f32 %v438, %v439
  %v441 = vrot.slane %v440, 1
  %v442 = vadd.f32 %v440, %v441
  %v443 = vmul.f32 %v442, 0.03125
  %v444 = vmul.f32 %v429, %v429
  %v445 = vsub.f32 %v443, %v444
  %v446 = vadd.f32 %v445, 1e-05
  %v447 = vrsqrt.pop %v446
  %v448 = vld [vmem:[%s2] sm:$0x1]
  %v449 = vmul.f32 %v448, %v447
  %v450 = vld [vmem:[%s3] sm:$0x1]
  %v451 = vmul.f32 %v429, %v449
  %v452 = vsub.f32 %v450, %v451
  %v454 = vlaneseq
  %v455 = vshrl.u32 %v454, 7
  %v456 = vsub.s32 0, %v455
  %v457 = vrot.slane %v449, %v456
  %v459 = vmul.f32 %v406, %v457
  %v460 = vmul.f32 %v409, %v457
  %v461 = vmul.f32 %v414, %v457
  %v462 = vmul.f32 %v417, %v457
  %v464 = vlaneseq
  %v465 = vshrl.u32 %v464, 7
  %v466 = vsub.s32 0, %v465
  %v467 = vrot.slane %v452, %v466
  %v469 = vadd.f32 %v459, %v467
  %v470 = vadd.f32 %v460, %v467
  %v471 = vadd.f32 %v461, %v467
  %v472 = vadd.f32 %v462, %v467
  %vm473 = vcmp.ge.f32.partialorder %v469, 0.0
  %vm474 = vcmp.ge.f32.partialorder %v470, 0.0
  %vm475 = vcmp.ge.f32.partialorder %v471, 0.0
  %vm476 = vcmp.ge.f32.partialorder %v472, 0.0
  %v477 = vmul.f32 %v469, 0.2
  %v478 = vmul.f32 %v470, 0.2
  %v479 = vmul.f32 %v471, 0.2
  %v480 = vmul.f32 %v472, 0.2
  %v481 = vsel %vm473, %v469, %v477
  %v482 = vsel %vm474, %v470, %v478
  %v483 = vsel %vm475, %v471, %v479
  %v484 = vsel %vm476, %v472, %v480
  %v485 = vpack.c.bf16 %v482, %v481
  %v486 = vpack.c.bf16 %v484, %v483
  %v489 = vunpack.c.l.b16 %v485
  %v490 = vunpack.c.h.b16 %v485
  %v491 = vunpack.c.l.b16 %v486
  %v492 = vunpack.c.h.b16 %v486
  %v493 = vpack.c.b16 %v489, %v489
  %v494 = vpack.c.b16 %v490, %v490
  %v495 = vpack.c.b16 %v491, %v491
  %v496 = vpack.c.b16 %v492, %v492
  %501 = vst [vmem:[%s4] sm:$0xf] %v493
  %502 = vst [vmem:[%s4 + $0x4] sm:$0xf] %v494
  %503 = vst [vmem:[%s4 + $0x8] sm:$0xf] %v495
  %504 = vst [vmem:[%s4 + $0xc] sm:$0xf] %v496
  // Predicated region
  $region18: #{_lambda_.7} parent=0 // pred_check
    _
  $region19: #{_lambda_.7} parent=0 // pred_check_branch
    %506 = sbr.rel (0) target = $region21
  $region20: #{_lambda_.7} parent=0 // pred_region
    _
  $region21: #{_lambda_.7} parent=0 // pred_fallthru
    _
  // Predicated region
  $region22: #{_lambda_.7} parent=0 // pred_check
    _
  $region23: #{_lambda_.7} parent=0 // pred_check_branch
    %508 = sbr.rel (0) target = $region25
  $region24: #{_lambda_.7} parent=0 // pred_region
    _
  $region25: #{_lambda_.7} parent=0 // pred_fallthru
    _

// kernel: _lambda_.8
$region0: #{_lambda_.8}
  #allocation0 [shape = 'u32[]', space=smem, size = 0x4, offset = 0x4, fixed_abs, tag = 'smem constant byte address 0x4 - core index']
  #allocation1 [shape = 'u32[144,128]{1,0:T(1,128)}', space=vmem, size = 0x12000, scoped, tag = 'internal scratch']
  %s0 = inlined_call_operand.vmem [shape: bf16[32,1024], index: 0, kind: input, shape index: {}]
  %s1 = inlined_call_operand.vmem [shape: bf16[1024,128], index: 1, kind: input, shape index: {}]
  %s2 = inlined_call_operand.vmem [shape: f32[1,128], index: 2, kind: input, shape index: {}]
  %s3 = inlined_call_operand.vmem [shape: f32[1,128], index: 3, kind: input, shape index: {}]
  %s4 = inlined_call_operand.vmem [shape: bf16[32,128], index: 4, kind: output, shape index: {}]
  %s5 = sld [smem:[#allocation0]]
  $region26: #{_lambda_.8} parent=0
    _
  %s7 = ssub.s32 1, %s5
  %s8 = scalar_select 0, %s7, %s5
  // Predicated region
  $region2: #{_lambda_.8} parent=0 // pred_check
    _
  $region3: #{_lambda_.8} parent=0 // pred_check_branch
    %10 = sbr.rel (0) target = $region5
  $region4: #{_lambda_.8} parent=0 // pred_region
    _
  $region5: #{_lambda_.8} parent=0 // pred_fallthru
    _
  // Predicated region
  $region6: #{_lambda_.8} parent=0 // pred_check
    _
  $region7: #{_lambda_.8} parent=0 // pred_check_branch
    %12 = sbr.rel (0) target = $region9
  $region8: #{_lambda_.8} parent=0 // pred_region
    _
  $region9: #{_lambda_.8} parent=0 // pred_fallthru
    _
  // Predicated region
  $region10: #{_lambda_.8} parent=0 // pred_check
    _
  $region11: #{_lambda_.8} parent=0 // pred_check_branch
    %14 = sbr.rel (0) target = $region13
  $region12: #{_lambda_.8} parent=0 // pred_region
    _
  $region13: #{_lambda_.8} parent=0 // pred_fallthru
    _
  // Predicated region
  $region14: #{_lambda_.8} parent=0 // pred_check
    _
  $region15: #{_lambda_.8} parent=0 // pred_check_branch
    %16 = sbr.rel (0) target = $region17
  $region16: #{_lambda_.8} parent=0 // pred_region
    _
  $region17: #{_lambda_.8} parent=0 // pred_fallthru
    _
  %v18 = vld [vmem:[%s0] sm:$0xff]
  %v19 = vld [vmem:[%s0 + $0x8] sm:$0xff]
  %v20 = vld [vmem:[%s0 + $0x10] sm:$0xff]
  %v21 = vld [vmem:[%s0 + $0x18] sm:$0xff]
  %v22 = vld [vmem:[%s0 + $0x20] sm:$0xff]
  %v23 = vld [vmem:[%s0 + $0x28] sm:$0xff]
  %v24 = vld [vmem:[%s0 + $0x30] sm:$0xff]
  %v25 = vld [vmem:[%s0 + $0x38] sm:$0xff]
  %v26 = vld [vmem:[%s0 + $0x40] sm:$0xff]
  %v27 = vld [vmem:[%s0 + $0x48] sm:$0xff]
  %v28 = vld [vmem:[%s0 + $0x50] sm:$0xff]
  %v29 = vld [vmem:[%s0 + $0x58] sm:$0xff]
  %v30 = vld [vmem:[%s0 + $0x60] sm:$0xff]
  %v31 = vld [vmem:[%s0 + $0x68] sm:$0xff]
  %v32 = vld [vmem:[%s0 + $0x70] sm:$0xff]
  %v33 = vld [vmem:[%s0 + $0x78] sm:$0xff]
  %v34 = vld [vmem:[%s1] sm:$0xf]
  %v35 = vld [vmem:[%s1 + $0x4] sm:$0xf]
  %v36 = vld [vmem:[%s1 + $0x8] sm:$0xf]
  %v37 = vld [vmem:[%s1 + $0xc] sm:$0xf]
  %v38 = vld [vmem:[%s1 + $0x10] sm:$0xf]
  %v39 = vld [vmem:[%s1 + $0x14] sm:$0xf]
  %v40 = vld [vmem:[%s1 + $0x18] sm:$0xf]
  %v41 = vld [vmem:[%s1 + $0x1c] sm:$0xf]
  %v42 = vld [vmem:[%s1 + $0x20] sm:$0xf]
  %v43 = vld [vmem:[%s1 + $0x24] sm:$0xf]
  %v44 = vld [vmem:[%s1 + $0x28] sm:$0xf]
  %v45 = vld [vmem:[%s1 + $0x2c] sm:$0xf]
  %v46 = vld [vmem:[%s1 + $0x30] sm:$0xf]
  %v47 = vld [vmem:[%s1 + $0x34] sm:$0xf]
  %v48 = vld [vmem:[%s1 + $0x38] sm:$0xf]
  %v49 = vld [vmem:[%s1 + $0x3c] sm:$0xf]
  %v50 = vld [vmem:[%s1 + $0x40] sm:$0xf]
  %v51 = vld [vmem:[%s1 + $0x44] sm:$0xf]
  %v52 = vld [vmem:[%s1 + $0x48] sm:$0xf]
  %v53 = vld [vmem:[%s1 + $0x4c] sm:$0xf]
  %v54 = vld [vmem:[%s1 + $0x50] sm:$0xf]
  %v55 = vld [vmem:[%s1 + $0x54] sm:$0xf]
  %v56 = vld [vmem:[%s1 + $0x58] sm:$0xf]
  %v57 = vld [vmem:[%s1 + $0x5c] sm:$0xf]
  %v58 = vld [vmem:[%s1 + $0x60] sm:$0xf]
  %v59 = vld [vmem:[%s1 + $0x64] sm:$0xf]
  %v60 = vld [vmem:[%s1 + $0x68] sm:$0xf]
  %v61 = vld [vmem:[%s1 + $0x6c] sm:$0xf]
  %v62 = vld [vmem:[%s1 + $0x70] sm:$0xf]
  %v63 = vld [vmem:[%s1 + $0x74] sm:$0xf]
  %v64 = vld [vmem:[%s1 + $0x78] sm:$0xf]
  %v65 = vld [vmem:[%s1 + $0x7c] sm:$0xf]
  %v66 = vld [vmem:[%s1 + $0x80] sm:$0xf]
  %v67 = vld [vmem:[%s1 + $0x84] sm:$0xf]
  %v68 = vld [vmem:[%s1 + $0x88] sm:$0xf]
  %v69 = vld [vmem:[%s1 + $0x8c] sm:$0xf]
  %v70 = vld [vmem:[%s1 + $0x90] sm:$0xf]
  %v71 = vld [vmem:[%s1 + $0x94] sm:$0xf]
  %v72 = vld [vmem:[%s1 + $0x98] sm:$0xf]
  %v73 = vld [vmem:[%s1 + $0x9c] sm:$0xf]
  %v74 = vld [vmem:[%s1 + $0xa0] sm:$0xf]
  %v75 = vld [vmem:[%s1 + $0xa4] sm:$0xf]
  %v76 = vld [vmem:[%s1 + $0xa8] sm:$0xf]
  %v77 = vld [vmem:[%s1 + $0xac] sm:$0xf]
  %v78 = vld [vmem:[%s1 + $0xb0] sm:$0xf]
  %v79 = vld [vmem:[%s1 + $0xb4] sm:$0xf]
  %v80 = vld [vmem:[%s1 + $0xb8] sm:$0xf]
  %v81 = vld [vmem:[%s1 + $0xbc] sm:$0xf]
  %v82 = vld [vmem:[%s1 + $0xc0] sm:$0xf]
  %v83 = vld [vmem:[%s1 + $0xc4] sm:$0xf]
  %v84 = vld [vmem:[%s1 + $0xc8] sm:$0xf]
  %v85 = vld [vmem:[%s1 + $0xcc] sm:$0xf]
  %v86 = vld [vmem:[%s1 + $0xd0] sm:$0xf]
  %v87 = vld [vmem:[%s1 + $0xd4] sm:$0xf]
  %v88 = vld [vmem:[%s1 + $0xd8] sm:$0xf]
  %v89 = vld [vmem:[%s1 + $0xdc] sm:$0xf]
  %v90 = vld [vmem:[%s1 + $0xe0] sm:$0xf]
  %v91 = vld [vmem:[%s1 + $0xe4] sm:$0xf]
  %v92 = vld [vmem:[%s1 + $0xe8] sm:$0xf]
  %v93 = vld [vmem:[%s1 + $0xec] sm:$0xf]
  %v94 = vld [vmem:[%s1 + $0xf0] sm:$0xf]
  %v95 = vld [vmem:[%s1 + $0xf4] sm:$0xf]
  %v96 = vld [vmem:[%s1 + $0xf8] sm:$0xf]
  %v97 = vld [vmem:[%s1 + $0xfc] sm:$0xf]
  %v98 = vld [vmem:[%s1 + $0x100] sm:$0xf]
  %v99 = vld [vmem:[%s1 + $0x104] sm:$0xf]
  %v100 = vld [vmem:[%s1 + $0x108] sm:$0xf]
  %v101 = vld [vmem:[%s1 + $0x10c] sm:$0xf]
  %v102 = vld [vmem:[%s1 + $0x110] sm:$0xf]
  %v103 = vld [vmem:[%s1 + $0x114] sm:$0xf]
  %v104 = vld [vmem:[%s1 + $0x118] sm:$0xf]
  %v105 = vld [vmem:[%s1 + $0x11c] sm:$0xf]
  %v106 = vld [vmem:[%s1 + $0x120] sm:$0xf]
  %v107 = vld [vmem:[%s1 + $0x124] sm:$0xf]
  %v108 = vld [vmem:[%s1 + $0x128] sm:$0xf]
  %v109 = vld [vmem:[%s1 + $0x12c] sm:$0xf]
  %v110 = vld [vmem:[%s1 + $0x130] sm:$0xf]
  %v111 = vld [vmem:[%s1 + $0x134] sm:$0xf]
  %v112 = vld [vmem:[%s1 + $0x138] sm:$0xf]
  %v113 = vld [vmem:[%s1 + $0x13c] sm:$0xf]
  %v114 = vld [vmem:[%s1 + $0x140] sm:$0xf]
  %v115 = vld [vmem:[%s1 + $0x144] sm:$0xf]
  %v116 = vld [vmem:[%s1 + $0x148] sm:$0xf]
  %v117 = vld [vmem:[%s1 + $0x14c] sm:$0xf]
  %v118 = vld [vmem:[%s1 + $0x150] sm:$0xf]
  %v119 = vld [vmem:[%s1 + $0x154] sm:$0xf]
  %v120 = vld [vmem:[%s1 + $0x158] sm:$0xf]
  %v121 = vld [vmem:[%s1 + $0x15c] sm:$0xf]
  %v122 = vld [vmem:[%s1 + $0x160] sm:$0xf]
  %v123 = vld [vmem:[%s1 + $0x164] sm:$0xf]
  %v124 = vld [vmem:[%s1 + $0x168] sm:$0xf]
  %v125 = vld [vmem:[%s1 + $0x16c] sm:$0xf]
  %v126 = vld [vmem:[%s1 + $0x170] sm:$0xf]
  %v127 = vld [vmem:[%s1 + $0x174] sm:$0xf]
  %v128 = vld [vmem:[%s1 + $0x178] sm:$0xf]
  %v129 = vld [vmem:[%s1 + $0x17c] sm:$0xf]
  %v130 = vld [vmem:[%s1 + $0x180] sm:$0xf]
  %v131 = vld [vmem:[%s1 + $0x184] sm:$0xf]
  %v132 = vld [vmem:[%s1 + $0x188] sm:$0xf]
  %v133 = vld [vmem:[%s1 + $0x18c] sm:$0xf]
  %v134 = vld [vmem:[%s1 + $0x190] sm:$0xf]
  %v135 = vld [vmem:[%s1 + $0x194] sm:$0xf]
  %v136 = vld [vmem:[%s1 + $0x198] sm:$0xf]
  %v137 = vld [vmem:[%s1 + $0x19c] sm:$0xf]
  %v138 = vld [vmem:[%s1 + $0x1a0] sm:$0xf]
  %v139 = vld [vmem:[%s1 + $0x1a4] sm:$0xf]
  %v140 = vld [vmem:[%s1 + $0x1a8] sm:$0xf]
  %v141 = vld [vmem:[%s1 + $0x1ac] sm:$0xf]
  %v142 = vld [vmem:[%s1 + $0x1b0] sm:$0xf]
  %v143 = vld [vmem:[%s1 + $0x1b4] sm:$0xf]
  %v144 = vld [vmem:[%s1 + $0x1b8] sm:$0xf]
  %v145 = vld [vmem:[%s1 + $0x1bc] sm:$0xf]
  %v146 = vld [vmem:[%s1 + $0x1c0] sm:$0xf]
  %v147 = vld [vmem:[%s1 + $0x1c4] sm:$0xf]
  %v148 = vld [vmem:[%s1 + $0x1c8] sm:$0xf]
  %v149 = vld [vmem:[%s1 + $0x1cc] sm:$0xf]
  %v150 = vld [vmem:[%s1 + $0x1d0] sm:$0xf]
  %v151 = vld [vmem:[%s1 + $0x1d4] sm:$0xf]
  %v152 = vld [vmem:[%s1 + $0x1d8] sm:$0xf]
  %v153 = vld [vmem:[%s1 + $0x1dc] sm:$0xf]
  %v154 = vld [vmem:[%s1 + $0x1e0] sm:$0xf]
  %v155 = vld [vmem:[%s1 + $0x1e4] sm:$0xf]
  %v156 = vld [vmem:[%s1 + $0x1e8] sm:$0xf]
  %v157 = vld [vmem:[%s1 + $0x1ec] sm:$0xf]
  %v158 = vld [vmem:[%s1 + $0x1f0] sm:$0xf]
  %v159 = vld [vmem:[%s1 + $0x1f4] sm:$0xf]
  %v160 = vld [vmem:[%s1 + $0x1f8] sm:$0xf]
  %v161 = vld [vmem:[%s1 + $0x1fc] sm:$0xf]
  %v178 = vunpack.c.l.b16 %v18
  %v179 = vunpack.c.h.b16 %v18
  %v180 = vunpack.c.l.b16 %v19
  %v181 = vunpack.c.h.b16 %v19
  %v182 = vunpack.c.l.b16 %v20
  %v183 = vunpack.c.h.b16 %v20
  %v184 = vunpack.c.l.b16 %v21
  %v185 = vunpack.c.h.b16 %v21
  %v186 = vunpack.c.l.b16 %v22
  %v187 = vunpack.c.h.b16 %v22
  %v188 = vunpack.c.l.b16 %v23
  %v189 = vunpack.c.h.b16 %v23
  %v190 = vunpack.c.l.b16 %v24
  %v191 = vunpack.c.h.b16 %v24
  %v192 = vunpack.c.l.b16 %v25
  %v193 = vunpack.c.h.b16 %v25
  %v194 = vunpack.c.l.b16 %v26
  %v195 = vunpack.c.h.b16 %v26
  %v196 = vunpack.c.l.b16 %v27
  %v197 = vunpack.c.h.b16 %v27
  %v198 = vunpack.c.l.b16 %v28
  %v199 = vunpack.c.h.b16 %v28
  %v200 = vunpack.c.l.b16 %v29
  %v201 = vunpack.c.h.b16 %v29
  %v202 = vunpack.c.l.b16 %v30
  %v203 = vunpack.c.h.b16 %v30
  %v204 = vunpack.c.l.b16 %v31
  %v205 = vunpack.c.h.b16 %v31
  %v206 = vunpack.c.l.b16 %v32
  %v207 = vunpack.c.h.b16 %v32
  %v208 = vunpack.c.l.b16 %v33
  %v209 = vunpack.c.h.b16 %v33
  %v210 = vpack.c.b16 %v186, %v178
  %v211 = vpack.c.b16 %v187, %v179
  %v212 = vpack.c.b16 %v188, %v180
  %v213 = vpack.c.b16 %v189, %v181
  %v214 = vpack.c.b16 %v190, %v182
  %v215 = vpack.c.b16 %v191, %v183
  %v216 = vpack.c.b16 %v192, %v184
  %v217 = vpack.c.b16 %v193, %v185
  %v218 = vpack.c.b16 %v202, %v194
  %v219 = vpack.c.b16 %v203, %v195
  %v220 = vpack.c.b16 %v204, %v196
  %v221 = vpack.c.b16 %v205, %v197
  %v222 = vpack.c.b16 %v206, %v198
  %v223 = vpack.c.b16 %v207, %v199
  %v224 = vpack.c.b16 %v208, %v200
  %v225 = vpack.c.b16 %v209, %v201
  %v370 = vunpack.c.l.b16 %v34
  %v371 = vunpack.c.l.b16 %v35
  %v372 = vunpack.c.l.b16 %v36
  %v373 = vunpack.c.l.b16 %v37
  %v374 = vunpack.c.l.b16 %v38
  %v375 = vunpack.c.l.b16 %v39
  %v376 = vunpack.c.l.b16 %v40
  %v377 = vunpack.c.l.b16 %v41
  %v378 = vunpack.c.l.b16 %v42
  %v379 = vunpack.c.l.b16 %v43
  %v380 = vunpack.c.l.b16 %v44
  %v381 = vunpack.c.l.b16 %v45
  %v382 = vunpack.c.l.b16 %v46
  %v383 = vunpack.c.l.b16 %v47
  %v384 = vunpack.c.l.b16 %v48
  %v385 = vunpack.c.l.b16 %v49
  %v386 = vunpack.c.l.b16 %v50
  %v387 = vunpack.c.l.b16 %v51
  %v388 = vunpack.c.l.b16 %v52
  %v389 = vunpack.c.l.b16 %v53
  %v390 = vunpack.c.l.b16 %v54
  %v391 = vunpack.c.l.b16 %v55
  %v392 = vunpack.c.l.b16 %v56
  %v393 = vunpack.c.l.b16 %v57
  %v394 = vunpack.c.l.b16 %v58
  %v395 = vunpack.c.l.b16 %v59
  %v396 = vunpack.c.l.b16 %v60
  %v397 = vunpack.c.l.b16 %v61
  %v398 = vunpack.c.l.b16 %v62
  %v399 = vunpack.c.l.b16 %v63
  %v400 = vunpack.c.l.b16 %v64
  %v401 = vunpack.c.l.b16 %v65
  %v402 = vunpack.c.l.b16 %v66
  %v403 = vunpack.c.l.b16 %v67
  %v404 = vunpack.c.l.b16 %v68
  %v405 = vunpack.c.l.b16 %v69
  %v406 = vunpack.c.l.b16 %v70
  %v407 = vunpack.c.l.b16 %v71
  %v408 = vunpack.c.l.b16 %v72
  %v409 = vunpack.c.l.b16 %v73
  %v410 = vunpack.c.l.b16 %v74
  %v411 = vunpack.c.l.b16 %v75
  %v412 = vunpack.c.l.b16 %v76
  %v413 = vunpack.c.l.b16 %v77
  %v414 = vunpack.c.l.b16 %v78
  %v415 = vunpack.c.l.b16 %v79
  %v416 = vunpack.c.l.b16 %v80
  %v417 = vunpack.c.l.b16 %v81
  %v418 = vunpack.c.l.b16 %v82
  %v419 = vunpack.c.l.b16 %v83
  %v420 = vunpack.c.l.b16 %v84
  %v421 = vunpack.c.l.b16 %v85
  %v422 = vunpack.c.l.b16 %v86
  %v423 = vunpack.c.l.b16 %v87
  %v424 = vunpack.c.l.b16 %v88
  %v425 = vunpack.c.l.b16 %v89
  %v426 = vunpack.c.l.b16 %v90
  %v427 = vunpack.c.l.b16 %v91
  %v428 = vunpack.c.l.b16 %v92
  %v429 = vunpack.c.l.b16 %v93
  %v430 = vunpack.c.l.b16 %v94
  %v431 = vunpack.c.l.b16 %v95
  %v432 = vunpack.c.l.b16 %v96
  %v433 = vunpack.c.l.b16 %v97
  %v434 = vunpack.c.l.b16 %v98
  %v435 = vunpack.c.l.b16 %v99
  %v436 = vunpack.c.l.b16 %v100
  %v437 = vunpack.c.l.b16 %v101
  %v438 = vunpack.c.l.b16 %v102
  %v439 = vunpack.c.l.b16 %v103
  %v440 = vunpack.c.l.b16 %v104
  %v441 = vunpack.c.l.b16 %v105
  %v442 = vunpack.c.l.b16 %v106
  %v443 = vunpack.c.l.b16 %v107
  %v444 = vunpack.c.l.b16 %v108
  %v445 = vunpack.c.l.b16 %v109
  %v446 = vunpack.c.l.b16 %v110
  %v447 = vunpack.c.l.b16 %v111
  %v448 = vunpack.c.l.b16 %v112
  %v449 = vunpack.c.l.b16 %v113
  %v450 = vunpack.c.l.b16 %v114
  %v451 = vunpack.c.l.b16 %v115
  %v452 = vunpack.c.l.b16 %v116
  %v453 = vunpack.c.l.b16 %v117
  %v454 = vunpack.c.l.b16 %v118
  %v455 = vunpack.c.l.b16 %v119
  %v456 = vunpack.c.l.b16 %v120
  %v457 = vunpack.c.l.b16 %v121
  %v458 = vunpack.c.l.b16 %v122
  %v459 = vunpack.c.l.b16 %v123
  %v460 = vunpack.c.l.b16 %v124
  %v461 = vunpack.c.l.b16 %v125
  %v462 = vunpack.c.l.b16 %v126
  %v463 = vunpack.c.l.b16 %v127
  %v464 = vunpack.c.l.b16 %v128
  %v465 = vunpack.c.l.b16 %v129
  %v466 = vunpack.c.l.b16 %v130
  %v467 = vunpack.c.l.b16 %v131
  %v468 = vunpack.c.l.b16 %v132
  %v469 = vunpack.c.l.b16 %v133
  %v470 = vunpack.c.l.b16 %v134
  %v471 = vunpack.c.l.b16 %v135
  %v472 = vunpack.c.l.b16 %v136
  %v473 = vunpack.c.l.b16 %v137
  %v474 = vunpack.c.l.b16 %v138
  %v475 = vunpack.c.l.b16 %v139
  %v476 = vunpack.c.l.b16 %v140
  %v477 = vunpack.c.l.b16 %v141
  %v478 = vunpack.c.l.b16 %v142
  %v479 = vunpack.c.l.b16 %v143
  %v480 = vunpack.c.l.b16 %v144
  %v481 = vunpack.c.l.b16 %v145
  %v482 = vunpack.c.l.b16 %v146
  %v483 = vunpack.c.l.b16 %v147
  %v484 = vunpack.c.l.b16 %v148
  %v485 = vunpack.c.l.b16 %v149
  %v486 = vunpack.c.l.b16 %v150
  %v487 = vunpack.c.l.b16 %v151
  %v488 = vunpack.c.l.b16 %v152
  %v489 = vunpack.c.l.b16 %v153
  %v490 = vunpack.c.l.b16 %v154
  %v491 = vunpack.c.l.b16 %v155
  %v492 = vunpack.c.l.b16 %v156
  %v493 = vunpack.c.l.b16 %v157
  %v494 = vunpack.c.l.b16 %v158
  %v495 = vunpack.c.l.b16 %v159
  %v496 = vunpack.c.l.b16 %v160
  %v497 = vunpack.c.l.b16 %v161
  %v498 = vpack.c.b16 %v371, %v370
  %v499 = vpack.c.b16 %v373, %v372
  %v500 = vpack.c.b16 %v375, %v374
  %v501 = vpack.c.b16 %v377, %v376
  %v502 = vpack.c.b16 %v379, %v378
  %v503 = vpack.c.b16 %v381, %v380
  %v504 = vpack.c.b16 %v383, %v382
  %v505 = vpack.c.b16 %v385, %v384
  %v506 = vpack.c.b16 %v387, %v386
  %v507 = vpack.c.b16 %v389, %v388
  %v508 = vpack.c.b16 %v391, %v390
  %v509 = vpack.c.b16 %v393, %v392
  %v510 = vpack.c.b16 %v395, %v394
  %v511 = vpack.c.b16 %v397, %v396
  %v512 = vpack.c.b16 %v399, %v398
  %v513 = vpack.c.b16 %v401, %v400
  %v514 = vpack.c.b16 %v403, %v402
  %v515 = vpack.c.b16 %v405, %v404
  %v516 = vpack.c.b16 %v407, %v406
  %v517 = vpack.c.b16 %v409, %v408
  %v518 = vpack.c.b16 %v411, %v410
  %v519 = vpack.c.b16 %v413, %v412
  %v520 = vpack.c.b16 %v415, %v414
  %v521 = vpack.c.b16 %v417, %v416
  %v522 = vpack.c.b16 %v419, %v418
  %v523 = vpack.c.b16 %v421, %v420
  %v524 = vpack.c.b16 %v423, %v422
  %v525 = vpack.c.b16 %v425, %v424
  %v526 = vpack.c.b16 %v427, %v426
  %v527 = vpack.c.b16 %v429, %v428
  %v528 = vpack.c.b16 %v431, %v430
  %v529 = vpack.c.b16 %v433, %v432
  %v530 = vpack.c.b16 %v435, %v434
  %v531 = vpack.c.b16 %v437, %v436
  %v532 = vpack.c.b16 %v439, %v438
  %v533 = vpack.c.b16 %v441, %v440
  %v534 = vpack.c.b16 %v443, %v442
  %v535 = vpack.c.b16 %v445, %v444
  %v536 = vpack.c.b16 %v447, %v446
  %v537 = vpack.c.b16 %v449, %v448
  %v538 = vpack.c.b16 %v451, %v450
  %v539 = vpack.c.b16 %v453, %v452
  %v540 = vpack.c.b16 %v455, %v454
  %v541 = vpack.c.b16 %v457, %v456
  %v542 = vpack.c.b16 %v459, %v458
  %v543 = vpack.c.b16 %v461, %v460
  %v544 = vpack.c.b16 %v463, %v462
  %v545 = vpack.c.b16 %v465, %v464
  %v546 = vpack.c.b16 %v467, %v466
  %v547 = vpack.c.b16 %v469, %v468
  %v548 = vpack.c.b16 %v471, %v470
  %v549 = vpack.c.b16 %v473, %v472
  %v550 = vpack.c.b16 %v475, %v474
  %v551 = vpack.c.b16 %v477, %v476
  %v552 = vpack.c.b16 %v479, %v478
  %v553 = vpack.c.b16 %v481, %v480
  %v554 = vpack.c.b16 %v483, %v482
  %v555 = vpack.c.b16 %v485, %v484
  %v556 = vpack.c.b16 %v487, %v486
  %v557 = vpack.c.b16 %v489, %v488
  %v558 = vpack.c.b16 %v491, %v490
  %v559 = vpack.c.b16 %v493, %v492
  %v560 = vpack.c.b16 %v495, %v494
  %v561 = vpack.c.b16 %v497, %v496
  %626 = vmatprep.subr.bf16.mxu0 0
  %627 = vmatpush1.bf16.msra.mxu0 %v498
  %628 = vmatprep.subr.bf16.mxu0 0
  %629 = vmatpush1.bf16.msra.mxu0 %v499
  %630 = vmatprep.subr.bf16.mxu0 0
  %631 = vmatpush1.bf16.msra.mxu0 %v500
  %632 = vmatprep.subr.bf16.mxu0 0
  %633 = vmatpush1.bf16.msra.mxu0 %v501
  %634 = vmatprep.subr.bf16.mxu0 0
  %635 = vmatpush1.bf16.msra.mxu0 %v502
  %636 = vmatprep.subr.bf16.mxu0 0
  %637 = vmatpush1.bf16.msra.mxu0 %v503
  %638 = vmatprep.subr.bf16.mxu0 0
  %639 = vmatpush1.bf16.msra.mxu0 %v504
  %640 = vmatprep.subr.bf16.mxu0 0
  %641 = vmatpush1.bf16.msra.mxu0 %v505
  %642 = vmatprep.subr.bf16.mxu0 0
  %643 = vmatpush1.bf16.msra.mxu0 %v506
  %644 = vmatprep.subr.bf16.mxu0 0
  %645 = vmatpush1.bf16.msra.mxu0 %v507
  %646 = vmatprep.subr.bf16.mxu0 0
  %647 = vmatpush1.bf16.msra.mxu0 %v508
  %648 = vmatprep.subr.bf16.mxu0 0
  %649 = vmatpush1.bf16.msra.mxu0 %v509
  %650 = vmatprep.subr.bf16.mxu0 0
  %651 = vmatpush1.bf16.msra.mxu0 %v510
  %652 = vmatprep.subr.bf16.mxu0 0
  %653 = vmatpush1.bf16.msra.mxu0 %v511
  %654 = vmatprep.subr.bf16.mxu0 0
  %655 = vmatpush1.bf16.msra.mxu0 %v512
  %656 = vmatprep.subr.bf16.mxu0 0
  %657 = vmatpush1.bf16.msra.mxu0 %v513
  %658 = vmatprep.mubr.bf16.mxu0 %v211
  %659 = vmatmul.mubr.bf16.gmra.mrb[0].mxu0 %v210
  %v660 = vpop.f32.mrb[0].mxu0
  %v661 = vadd.f32 0.0, %v660
  %v662 = vpop.f32.mrb[0].mxu0
  %v663 = vpop.f32.mrb[0].mxu0
  %v664 = vadd.f32 0.0, %v663
  %v665 = vpop.f32.mrb[0].mxu0
  %666 = vmatprep.mubr.bf16.mxu0 %v219
  %667 = vmatmul.mubr.bf16.gmra.mrb[0].mxu0 %v218
  %v668 = vpop.f32.mrb[0].mxu0
  %v669 = vadd.f32 0.0, %v668
  %v670 = vpop.f32.mrb[0].mxu0
  %v671 = vpop.f32.mrb[0].mxu0
  %v672 = vadd.f32 0.0, %v671
  %v673 = vpop.f32.mrb[0].mxu0
  %674 = vdwg.mxu0
  %675 = vmatprep.subr.bf16.mxu0 0
  %676 = vmatpush1.bf16.msra.mxu0 %v514
  %677 = vmatprep.subr.bf16.mxu0 0
  %678 = vmatpush1.bf16.msra.mxu0 %v515
  %679 = vmatprep.subr.bf16.mxu0 0
  %680 = vmatpush1.bf16.msra.mxu0 %v516
  %681 = vmatprep.subr.bf16.mxu0 0
  %682 = vmatpush1.bf16.msra.mxu0 %v517
  %683 = vmatprep.subr.bf16.mxu0 0
  %684 = vmatpush1.bf16.msra.mxu0 %v518
  %685 = vmatprep.subr.bf16.mxu0 0
  %686 = vmatpush1.bf16.msra.mxu0 %v519
  %687 = vmatprep.subr.bf16.mxu0 0
  %688 = vmatpush1.bf16.msra.mxu0 %v520
  %689 = vmatprep.subr.bf16.mxu0 0
  %690 = vmatpush1.bf16.msra.mxu0 %v521
  %691 = vmatprep.subr.bf16.mxu0 0
  %692 = vmatpush1.bf16.msra.mxu0 %v522
  %693 = vmatprep.subr.bf16.mxu0 0
  %694 = vmatpush1.bf16.msra.mxu0 %v523
  %695 = vmatprep.subr.bf16.mxu0 0
  %696 = vmatpush1.bf16.msra.mxu0 %v524
  %697 = vmatprep.subr.bf16.mxu0 0
  %698 = vmatpush1.bf16.msra.mxu0 %v525
  %699 = vmatprep.subr.bf16.mxu0 0
  %700 = vmatpush1.bf16.msra.mxu0 %v526
  %701 = vmatprep.subr.bf16.mxu0 0
  %702 = vmatpush1.bf16.msra.mxu0 %v527
  %703 = vmatprep.subr.bf16.mxu0 0
  %704 = vmatpush1.bf16.msra.mxu0 %v528
  %705 = vmatprep.subr.bf16.mxu0 0
  %706 = vmatpush1.bf16.msra.mxu0 %v529
  %707 = vmatprep.mubr.bf16.mxu0 %v213
  %708 = vmatmul.mubr.bf16.gmra.mrb[0].mxu0 %v212
  %v709 = vpop.f32.mrb[0].mxu0
  %v710 = vadd.f32 %v661, %v709
  %v711 = vpop.f32.mrb[0].mxu0
  %v712 = vpop.f32.mrb[0].mxu0
  %v713 = vadd.f32 %v664, %v712
  %v714 = vpop.f32.mrb[0].mxu0
  %715 = vmatprep.mubr.bf16.mxu0 %v221
  %716 = vmatmul.mubr.bf16.gmra.mrb[0].mxu0 %v220
  %v717 = vpop.f32.mrb[0].mxu0
  %v718 = vadd.f32 %v669, %v717
  %v719 = vpop.f32.mrb[0].mxu0
  %v720 = vpop.f32.mrb[0].mxu0
  %v721 = vadd.f32 %v672, %v720
  %v722 = vpop.f32.mrb[0].mxu0
  %723 = vdwg.mxu0
  %724 = vmatprep.subr.bf16.mxu0 0
  %725 = vmatpush1.bf16.msra.mxu0 %v530
  %726 = vmatprep.subr.bf16.mxu0 0
  %727 = vmatpush1.bf16.msra.mxu0 %v531
  %728 = vmatprep.subr.bf16.mxu0 0
  %729 = vmatpush1.bf16.msra.mxu0 %v532
  %730 = vmatprep.subr.bf16.mxu0 0
  %731 = vmatpush1.bf16.msra.mxu0 %v533
  %732 = vmatprep.subr.bf16.mxu0 0
  %733 = vmatpush1.bf16.msra.mxu0 %v534
  %734 = vmatprep.subr.bf16.mxu0 0
  %735 = vmatpush1.bf16.msra.mxu0 %v535
  %736 = vmatprep.subr.bf16.mxu0 0
  %737 = vmatpush1.bf16.msra.mxu0 %v536
  %738 = vmatprep.subr.bf16.mxu0 0
  %739 = vmatpush1.bf16.msra.mxu0 %v537
  %740 = vmatprep.subr.bf16.mxu0 0
  %741 = vmatpush1.bf16.msra.mxu0 %v538
  %742 = vmatprep.subr.bf16.mxu0 0
  %743 = vmatpush1.bf16.msra.mxu0 %v539
  %744 = vmatprep.subr.bf16.mxu0 0
  %745 = vmatpush1.bf16.msra.mxu0 %v540
  %746 = vmatprep.subr.bf16.mxu0 0
  %747 = vmatpush1.bf16.msra.mxu0 %v541
  %748 = vmatprep.subr.bf16.mxu0 0
  %749 = vmatpush1.bf16.msra.mxu0 %v542
  %750 = vmatprep.subr.bf16.mxu0 0
  %751 = vmatpush1.bf16.msra.mxu0 %v543
  %752 = vmatprep.subr.bf16.mxu0 0
  %753 = vmatpush1.bf16.msra.mxu0 %v544
  %754 = vmatprep.subr.bf16.mxu0 0
  %755 = vmatpush1.bf16.msra.mxu0 %v545
  %756 = vmatprep.mubr.bf16.mxu0 %v215
  %757 = vmatmul.mubr.bf16.gmra.mrb[0].mxu0 %v214
  %v758 = vpop.f32.mrb[0].mxu0
  %v759 = vadd.f32 %v710, %v758
  %v760 = vpop.f32.mrb[0].mxu0
  %v761 = vpop.f32.mrb[0].mxu0
  %v762 = vadd.f32 %v713, %v761
  %v763 = vpop.f32.mrb[0].mxu0
  %764 = vmatprep.mubr.bf16.mxu0 %v223
  %765 = vmatmul.mubr.bf16.gmra.mrb[0].mxu0 %v222
  %v766 = vpop.f32.mrb[0].mxu0
  %v767 = vadd.f32 %v718, %v766
  %v768 = vpop.f32.mrb[0].mxu0
  %v769 = vpop.f32.mrb[0].mxu0
  %v770 = vadd.f32 %v721, %v769
  %v771 = vpop.f32.mrb[0].mxu0
  %772 = vdwg.mxu0
  %773 = vmatprep.subr.bf16.mxu0 0
  %774 = vmatpush1.bf16.msra.mxu0 %v546
  %775 = vmatprep.subr.bf16.mxu0 0
  %776 = vmatpush1.bf16.msra.mxu0 %v547
  %777 = vmatprep.subr.bf16.mxu0 0
  %778 = vmatpush1.bf16.msra.mxu0 %v548
  %779 = vmatprep.subr.bf16.mxu0 0
  %780 = vmatpush1.bf16.msra.mxu0 %v549
  %781 = vmatprep.subr.bf16.mxu0 0
  %782 = vmatpush1.bf16.msra.mxu0 %v550
  %783 = vmatprep.subr.bf16.mxu0 0
  %784 = vmatpush1.bf16.msra.mxu0 %v551
  %785 = vmatprep.subr.bf16.mxu0 0
  %786 = vmatpush1.bf16.msra.mxu0 %v552
  %787 = vmatprep.subr.bf16.mxu0 0
  %788 = vmatpush1.bf16.msra.mxu0 %v553
  %789 = vmatprep.subr.bf16.mxu0 0
  %790 = vmatpush1.bf16.msra.mxu0 %v554
  %791 = vmatprep.subr.bf16.mxu0 0
  %792 = vmatpush1.bf16.msra.mxu0 %v555
  %793 = vmatprep.subr.bf16.mxu0 0
  %794 = vmatpush1.bf16.msra.mxu0 %v556
  %795 = vmatprep.subr.bf16.mxu0 0
  %796 = vmatpush1.bf16.msra.mxu0 %v557
  %797 = vmatprep.subr.bf16.mxu0 0
  %798 = vmatpush1.bf16.msra.mxu0 %v558
  %799 = vmatprep.subr.bf16.mxu0 0
  %800 = vmatpush1.bf16.msra.mxu0 %v559
  %801 = vmatprep.subr.bf16.mxu0 0
  %802 = vmatpush1.bf16.msra.mxu0 %v560
  %803 = vmatprep.subr.bf16.mxu0 0
  %804 = vmatpush1.bf16.msra.mxu0 %v561
  %805 = vmatprep.mubr.bf16.mxu0 %v217
  %806 = vmatmul.mubr.bf16.gmra.mrb[0].mxu0 %v216
  %v807 = vpop.f32.mrb[0].mxu0
  %v808 = vadd.f32 %v759, %v807
  %v809 = vpop.f32.mrb[0].mxu0
  %v810 = vpop.f32.mrb[0].mxu0
  %v811 = vadd.f32 %v762, %v810
  %v812 = vpop.f32.mrb[0].mxu0
  %813 = vmatprep.mubr.bf16.mxu0 %v225
  %814 = vmatmul.mubr.bf16.gmra.mrb[0].mxu0 %v224
  %v815 = vpop.f32.mrb[0].mxu0
  %v816 = vadd.f32 %v767, %v815
  %v817 = vpop.f32.mrb[0].mxu0
  %v818 = vpop.f32.mrb[0].mxu0
  %v819 = vadd.f32 %v770, %v818
  %v820 = vpop.f32.mrb[0].mxu0
  %821 = vdwg.mxu0
  %v822 = vadd.f32 %v808, %v811
  %v823 = vadd.f32 %v822, %v816
  %v824 = vadd.f32 %v823, %v819
  %v825 = vrot.slane %v824, 4
  %v826 = vadd.f32 %v824, %v825
  %v827 = vrot.slane %v826, 2
  %v828 = vadd.f32 %v826, %v827
  %v829 = vrot.slane %v828, 1
  %v830 = vadd.f32 %v828, %v829
  %v831 = vmul.f32 %v830, 0.055555556
  %v832 = vmul.f32 %v808, %v808
  %v833 = vmul.f32 %v811, %v811
  %v834 = vmul.f32 %v816, %v816
  %v835 = vmul.f32 %v819, %v819
  %v836 = vadd.f32 %v832, %v833
  %v837 = vadd.f32 %v836, %v834
  %v838 = vadd.f32 %v837, %v835
  %v839 = vrot.slane %v838, 4
  %v840 = vadd.f32 %v838, %v839
  %v841 = vrot.slane %v840, 2
  %v842 = vadd.f32 %v840, %v841
  %v843 = vrot.slane %v842, 1
  %v844 = vadd.f32 %v842, %v843
  %v845 = vmul.f32 %v844, 0.055555556
  %v846 = vmul.f32 %v831, %v831
  %v847 = vsub.f32 %v845, %v846
  %v848 = vadd.f32 %v847, 1e-05
  %v849 = vrsqrt.pop %v848
  %v850 = vld [vmem:[%s2] sm:$0x1]
  %v851 = vmul.f32 %v850, %v849
  %v852 = vld [vmem:[%s3] sm:$0x1]
  %v853 = vmul.f32 %v831, %v851
  %v854 = vsub.f32 %v852, %v853
  %v856 = vlaneseq
  %v857 = vshrl.u32 %v856, 7
  %v858 = vsub.s32 0, %v857
  %v859 = vrot.slane %v851, %v858
  %v861 = vmul.f32 %v808, %v859
  %v862 = vmul.f32 %v811, %v859
  %v863 = vmul.f32 %v816, %v859
  %v864 = vmul.f32 %v819, %v859
  %v866 = vlaneseq
  %v867 = vshrl.u32 %v866, 7
  %v868 = vsub.s32 0, %v867
  %v869 = vrot.slane %v854, %v868
  %v871 = vadd.f32 %v861, %v869
  %v872 = vadd.f32 %v862, %v869
  %v873 = vadd.f32 %v863, %v869
  %v874 = vadd.f32 %v864, %v869
  %vm875 = vcmp.ge.f32.partialorder %v871, 0.0
  %vm876 = vcmp.ge.f32.partialorder %v872, 0.0
  %vm877 = vcmp.ge.f32.partialorder %v873, 0.0
  %vm878 = vcmp.ge.f32.partialorder %v874, 0.0
  %v879 = vmul.f32 %v871, 0.2
  %v880 = vmul.f32 %v872, 0.2
  %v881 = vmul.f32 %v873, 0.2
  %v882 = vmul.f32 %v874, 0.2
  %v883 = vsel %vm875, %v871, %v879
  %v884 = vsel %vm876, %v872, %v880
  %v885 = vsel %vm877, %v873, %v881
  %v886 = vsel %vm878, %v874, %v882
  %v887 = vpack.c.bf16 %v884, %v883
  %v888 = vpack.c.bf16 %v886, %v885
  %v891 = vunpack.c.l.b16 %v887
  %v892 = vunpack.c.h.b16 %v887
  %v893 = vunpack.c.l.b16 %v888
  %v894 = vunpack.c.h.b16 %v888
  %v895 = vpack.c.b16 %v891, %v891
  %v896 = vpack.c.b16 %v892, %v892
  %v897 = vpack.c.b16 %v893, %v893
  %v898 = vpack.c.b16 %v894, %v894
  %903 = vst [vmem:[%s4] sm:$0xf] %v895
  %904 = vst [vmem:[%s4 + $0x4] sm:$0xf] %v896
  %905 = vst [vmem:[%s4 + $0x8] sm:$0xf] %v897
  %906 = vst [vmem:[%s4 + $0xc] sm:$0xf] %v898
  // Predicated region
  $region18: #{_lambda_.8} parent=0 // pred_check
    _
  $region19: #{_lambda_.8} parent=0 // pred_check_branch
    %908 = sbr.rel (0) target = $region21
  $region20: #{_lambda_.8} parent=0 // pred_region
    _
  $region21: #{_lambda_.8} parent=0 // pred_fallthru
    _
  // Predicated region
  $region22: #{_lambda_.8} parent=0 // pred_check
    _
  $region23: #{_lambda_.8} parent=0 // pred_check_branch
    %910 = sbr.rel (0) target = $region25
  $region24: #{_lambda_.8} parent=0 // pred_region
    _
  $region25: #{_lambda_.8} parent=0 // pred_fallthru
    _

// kernel: _lambda_.9
$region0: #{_lambda_.9}
  #allocation0 [shape = 'u32[]', space=smem, size = 0x4, offset = 0x4, fixed_abs, tag = 'smem constant byte address 0x4 - core index']
  #allocation1 [shape = 'u32[144,128]{1,0:T(1,128)}', space=vmem, size = 0x12000, scoped, tag = 'internal scratch']
  %s0 = inlined_call_operand.vmem [shape: bf16[16,2048], index: 0, kind: input, shape index: {}]
  %s1 = inlined_call_operand.vmem [shape: bf16[2048,128], index: 1, kind: input, shape index: {}]
  %s2 = inlined_call_operand.vmem [shape: f32[1,128], index: 2, kind: input, shape index: {}]
  %s3 = inlined_call_operand.vmem [shape: f32[1,128], index: 3, kind: input, shape index: {}]
  %s4 = inlined_call_operand.vmem [shape: f32[16,128], index: 4, kind: output, shape index: {}]
  %s5 = sld [smem:[#allocation0]]
  $region26: #{_lambda_.9} parent=0
    _
  %s7 = ssub.s32 1, %s5
  %s8 = scalar_select 0, %s7, %s5
  // Predicated region
  $region2: #{_lambda_.9} parent=0 // pred_check
    _
  $region3: #{_lambda_.9} parent=0 // pred_check_branch
    %10 = sbr.rel (0) target = $region5
  $region4: #{_lambda_.9} parent=0 // pred_region
    _
  $region5: #{_lambda_.9} parent=0 // pred_fallthru
    _
  // Predicated region
  $region6: #{_lambda_.9} parent=0 // pred_check
    _
  $region7: #{_lambda_.9} parent=0 // pred_check_branch
    %12 = sbr.rel (0) target = $region9
  $region8: #{_lambda_.9} parent=0 // pred_region
    _
  $region9: #{_lambda_.9} parent=0 // pred_fallthru
    _
  // Predicated region
  $region10: #{_lambda_.9} parent=0 // pred_check
    _
  $region11: #{_lambda_.9} parent=0 // pred_check_branch
    %14 = sbr.rel (0) target = $region13
  $region12: #{_lambda_.9} parent=0 // pred_region
    _
  $region13: #{_lambda_.9} parent=0 // pred_fallthru
    _
  // Predicated region
  $region14: #{_lambda_.9} parent=0 // pred_check
    _
  $region15: #{_lambda_.9} parent=0 // pred_check_branch
    %16 = sbr.rel (0) target = $region17
  $region16: #{_lambda_.9} parent=0 // pred_region
    _
  $region17: #{_lambda_.9} parent=0 // pred_fallthru
    _
  %v18 = vld [vmem:[%s0] sm:$0xff]
  %v19 = vld [vmem:[%s0 + $0x8] sm:$0xff]
  %v20 = vld [vmem:[%s0 + $0x10] sm:$0xff]
  %v21 = vld [vmem:[%s0 + $0x18] sm:$0xff]
  %v22 = vld [vmem:[%s0 + $0x20] sm:$0xff]
  %v23 = vld [vmem:[%s0 + $0x28] sm:$0xff]
  %v24 = vld [vmem:[%s0 + $0x30] sm:$0xff]
  %v25 = vld [vmem:[%s0 + $0x38] sm:$0xff]
  %v26 = vld [vmem:[%s0 + $0x40] sm:$0xff]
  %v27 = vld [vmem:[%s0 + $0x48] sm:$0xff]
  %v28 = vld [vmem:[%s0 + $0x50] sm:$0xff]
  %v29 = vld [vmem:[%s0 + $0x58] sm:$0xff]
  %v30 = vld [vmem:[%s0 + $0x60] sm:$0xff]
  %v31 = vld [vmem:[%s0 + $0x68] sm:$0xff]
  %v32 = vld [vmem:[%s0 + $0x70] sm:$0xff]
  %v33 = vld [vmem:[%s0 + $0x78] sm:$0xff]
  %v34 = vld [vmem:[%s1] sm:$0xf]
  %v35 = vld [vmem:[%s1 + $0x4] sm:$0xf]
  %v36 = vld [vmem:[%s1 + $0x8] sm:$0xf]
  %v37 = vld [vmem:[%s1 + $0xc] sm:$0xf]
  %v38 = vld [vmem:[%s1 + $0x10] sm:$0xf]
  %v39 = vld [vmem:[%s1 + $0x14] sm:$0xf]
  %v40 = vld [vmem:[%s1 + $0x18] sm:$0xf]
  %v41 = vld [vmem:[%s1 + $0x1c] sm:$0xf]
  %v42 = vld [vmem:[%s1 + $0x20] sm:$0xf]
  %v43 = vld [vmem:[%s1 + $0x24] sm:$0xf]
  %v44 = vld [vmem:[%s1 + $0x28] sm:$0xf]
  %v45 = vld [vmem:[%s1 + $0x2c] sm:$0xf]
  %v46 = vld [vmem:[%s1 + $0x30] sm:$0xf]
  %v47 = vld [vmem:[%s1 + $0x34] sm:$0xf]
  %v48 = vld [vmem:[%s1 + $0x38] sm:$0xf]
  %v49 = vld [vmem:[%s1 + $0x3c] sm:$0xf]
  %v50 = vld [vmem:[%s1 + $0x40] sm:$0xf]
  %v51 = vld [vmem:[%s1 + $0x44] sm:$0xf]
  %v52 = vld [vmem:[%s1 + $0x48] sm:$0xf]
  %v53 = vld [vmem:[%s1 + $0x4c] sm:$0xf]
  %v54 = vld [vmem:[%s1 + $0x50] sm:$0xf]
  %v55 = vld [vmem:[%s1 + $0x54] sm:$0xf]
  %v56 = vld [vmem:[%s1 + $0x58] sm:$0xf]
  %v57 = vld [vmem:[%s1 + $0x5c] sm:$0xf]
  %v58 = vld [vmem:[%s1 + $0x60] sm:$0xf]
  %v59 = vld [vmem:[%s1 + $0x64] sm:$0xf]
  %v60 = vld [vmem:[%s1 + $0x68] sm:$0xf]
  %v61 = vld [vmem:[%s1 + $0x6c] sm:$0xf]
  %v62 = vld [vmem:[%s1 + $0x70] sm:$0xf]
  %v63 = vld [vmem:[%s1 + $0x74] sm:$0xf]
  %v64 = vld [vmem:[%s1 + $0x78] sm:$0xf]
  %v65 = vld [vmem:[%s1 + $0x7c] sm:$0xf]
  %v66 = vld [vmem:[%s1 + $0x80] sm:$0xf]
  %v67 = vld [vmem:[%s1 + $0x84] sm:$0xf]
  %v68 = vld [vmem:[%s1 + $0x88] sm:$0xf]
  %v69 = vld [vmem:[%s1 + $0x8c] sm:$0xf]
  %v70 = vld [vmem:[%s1 + $0x90] sm:$0xf]
  %v71 = vld [vmem:[%s1 + $0x94] sm:$0xf]
  %v72 = vld [vmem:[%s1 + $0x98] sm:$0xf]
  %v73 = vld [vmem:[%s1 + $0x9c] sm:$0xf]
  %v74 = vld [vmem:[%s1 + $0xa0] sm:$0xf]
  %v75 = vld [vmem:[%s1 + $0xa4] sm:$0xf]
  %v76 = vld [vmem:[%s1 + $0xa8] sm:$0xf]
  %v77 = vld [vmem:[%s1 + $0xac] sm:$0xf]
  %v78 = vld [vmem:[%s1 + $0xb0] sm:$0xf]
  %v79 = vld [vmem:[%s1 + $0xb4] sm:$0xf]
  %v80 = vld [vmem:[%s1 + $0xb8] sm:$0xf]
  %v81 = vld [vmem:[%s1 + $0xbc] sm:$0xf]
  %v82 = vld [vmem:[%s1 + $0xc0] sm:$0xf]
  %v83 = vld [vmem:[%s1 + $0xc4] sm:$0xf]
  %v84 = vld [vmem:[%s1 + $0xc8] sm:$0xf]
  %v85 = vld [vmem:[%s1 + $0xcc] sm:$0xf]
  %v86 = vld [vmem:[%s1 + $0xd0] sm:$0xf]
  %v87 = vld [vmem:[%s1 + $0xd4] sm:$0xf]
  %v88 = vld [vmem:[%s1 + $0xd8] sm:$0xf]
  %v89 = vld [vmem:[%s1 + $0xdc] sm:$0xf]
  %v90 = vld [vmem:[%s1 + $0xe0] sm:$0xf]
  %v91 = vld [vmem:[%s1 + $0xe4] sm:$0xf]
  %v92 = vld [vmem:[%s1 + $0xe8] sm:$0xf]
  %v93 = vld [vmem:[%s1 + $0xec] sm:$0xf]
  %v94 = vld [vmem:[%s1 + $0xf0] sm:$0xf]
  %v95 = vld [vmem:[%s1 + $0xf4] sm:$0xf]
  %v96 = vld [vmem:[%s1 + $0xf8] sm:$0xf]
  %v97 = vld [vmem:[%s1 + $0xfc] sm:$0xf]
  %v98 = vld [vmem:[%s1 + $0x100] sm:$0xf]
  %v99 = vld [vmem:[%s1 + $0x104] sm:$0xf]
  %v100 = vld [vmem:[%s1 + $0x108] sm:$0xf]
  %v101 = vld [vmem:[%s1 + $0x10c] sm:$0xf]
  %v102 = vld [vmem:[%s1 + $0x110] sm:$0xf]
  %v103 = vld [vmem:[%s1 + $0x114] sm:$0xf]
  %v104 = vld [vmem:[%s1 + $0x118] sm:$0xf]
  %v105 = vld [vmem:[%s1 + $0x11c] sm:$0xf]
  %v106 = vld [vmem:[%s1 + $0x120] sm:$0xf]
  %v107 = vld [vmem:[%s1 + $0x124] sm:$0xf]
  %v108 = vld [vmem:[%s1 + $0x128] sm:$0xf]
  %v109 = vld [vmem:[%s1 + $0x12c] sm:$0xf]
  %v110 = vld [vmem:[%s1 + $0x130] sm:$0xf]
  %v111 = vld [vmem:[%s1 + $0x134] sm:$0xf]
  %v112 = vld [vmem:[%s1 + $0x138] sm:$0xf]
  %v113 = vld [vmem:[%s1 + $0x13c] sm:$0xf]
  %v114 = vld [vmem:[%s1 + $0x140] sm:$0xf]
  %v115 = vld [vmem:[%s1 + $0x144] sm:$0xf]
  %v116 = vld [vmem:[%s1 + $0x148] sm:$0xf]
  %v117 = vld [vmem:[%s1 + $0x14c] sm:$0xf]
  %v118 = vld [vmem:[%s1 + $0x150] sm:$0xf]
  %v119 = vld [vmem:[%s1 + $0x154] sm:$0xf]
  %v120 = vld [vmem:[%s1 + $0x158] sm:$0xf]
  %v121 = vld [vmem:[%s1 + $0x15c] sm:$0xf]
  %v122 = vld [vmem:[%s1 + $0x160] sm:$0xf]
  %v123 = vld [vmem:[%s1 + $0x164] sm:$0xf]
  %v124 = vld [vmem:[%s1 + $0x168] sm:$0xf]
  %v125 = vld [vmem:[%s1 + $0x16c] sm:$0xf]
  %v126 = vld [vmem:[%s1 + $0x170] sm:$0xf]
  %v127 = vld [vmem:[%s1 + $0x174] sm:$0xf]
  %v128 = vld [vmem:[%s1 + $0x178] sm:$0xf]
  %v129 = vld [vmem:[%s1 + $0x17c] sm:$0xf]
  %v130 = vld [vmem:[%s1 + $0x180] sm:$0xf]
  %v131 = vld [vmem:[%s1 + $0x184] sm:$0xf]
  %v132 = vld [vmem:[%s1 + $0x188] sm:$0xf]
  %v133 = vld [vmem:[%s1 + $0x18c] sm:$0xf]
  %v134 = vld [vmem:[%s1 + $0x190] sm:$0xf]
  %v135 = vld [vmem:[%s1 + $0x194] sm:$0xf]
  %v136 = vld [vmem:[%s1 + $0x198] sm:$0xf]
  %v137 = vld [vmem:[%s1 + $0x19c] sm:$0xf]
  %v138 = vld [vmem:[%s1 + $0x1a0] sm:$0xf]
  %v139 = vld [vmem:[%s1 + $0x1a4] sm:$0xf]
  %v140 = vld [vmem:[%s1 + $0x1a8] sm:$0xf]
  %v141 = vld [vmem:[%s1 + $0x1ac] sm:$0xf]
  %v142 = vld [vmem:[%s1 + $0x1b0] sm:$0xf]
  %v143 = vld [vmem:[%s1 + $0x1b4] sm:$0xf]
  %v144 = vld [vmem:[%s1 + $0x1b8] sm:$0xf]
  %v145 = vld [vmem:[%s1 + $0x1bc] sm:$0xf]
  %v146 = vld [vmem:[%s1 + $0x1c0] sm:$0xf]
  %v147 = vld [vmem:[%s1 + $0x1c4] sm:$0xf]
  %v148 = vld [vmem:[%s1 + $0x1c8] sm:$0xf]
  %v149 = vld [vmem:[%s1 + $0x1cc] sm:$0xf]
  %v150 = vld [vmem:[%s1 + $0x1d0] sm:$0xf]
  %v151 = vld [vmem:[%s1 + $0x1d4] sm:$0xf]
  %v152 = vld [vmem:[%s1 + $0x1d8] sm:$0xf]
  %v153 = vld [vmem:[%s1 + $0x1dc] sm:$0xf]
  %v154 = vld [vmem:[%s1 + $0x1e0] sm:$0xf]
  %v155 = vld [vmem:[%s1 + $0x1e4] sm:$0xf]
  %v156 = vld [vmem:[%s1 + $0x1e8] sm:$0xf]
  %v157 = vld [vmem:[%s1 + $0x1ec] sm:$0xf]
  %v158 = vld [vmem:[%s1 + $0x1f0] sm:$0xf]
  %v159 = vld [vmem:[%s1 + $0x1f4] sm:$0xf]
  %v160 = vld [vmem:[%s1 + $0x1f8] sm:$0xf]
  %v161 = vld [vmem:[%s1 + $0x1fc] sm:$0xf]
  %v162 = vld [vmem:[%s1 + $0x200] sm:$0xf]
  %v163 = vld [vmem:[%s1 + $0x204] sm:$0xf]
  %v164 = vld [vmem:[%s1 + $0x208] sm:$0xf]
  %v165 = vld [vmem:[%s1 + $0x20c] sm:$0xf]
  %v166 = vld [vmem:[%s1 + $0x210] sm:$0xf]
  %v167 = vld [vmem:[%s1 + $0x214] sm:$0xf]
  %v168 = vld [vmem:[%s1 + $0x218] sm:$0xf]
  %v169 = vld [vmem:[%s1 + $0x21c] sm:$0xf]
  %v170 = vld [vmem:[%s1 + $0x220] sm:$0xf]
  %v171 = vld [vmem:[%s1 + $0x224] sm:$0xf]
  %v172 = vld [vmem:[%s1 + $0x228] sm:$0xf]
  %v173 = vld [vmem:[%s1 + $0x22c] sm:$0xf]
  %v174 = vld [vmem:[%s1 + $0x230] sm:$0xf]
  %v175 = vld [vmem:[%s1 + $0x234] sm:$0xf]
  %v176 = vld [vmem:[%s1 + $0x238] sm:$0xf]
  %v177 = vld [vmem:[%s1 + $0x23c] sm:$0xf]
  %v178 = vld [vmem:[%s1 + $0x240] sm:$0xf]
  %v179 = vld [vmem:[%s1 + $0x244] sm:$0xf]
  %v180 = vld [vmem:[%s1 + $0x248] sm:$0xf]
  %v181 = vld [vmem:[%s1 + $0x24c] sm:$0xf]
  %v182 = vld [vmem:[%s1 + $0x250] sm:$0xf]
  %v183 = vld [vmem:[%s1 + $0x254] sm:$0xf]
  %v184 = vld [vmem:[%s1 + $0x258] sm:$0xf]
  %v185 = vld [vmem:[%s1 + $0x25c] sm:$0xf]
  %v186 = vld [vmem:[%s1 + $0x260] sm:$0xf]
  %v187 = vld [vmem:[%s1 + $0x264] sm:$0xf]
  %v188 = vld [vmem:[%s1 + $0x268] sm:$0xf]
  %v189 = vld [vmem:[%s1 + $0x26c] sm:$0xf]
  %v190 = vld [vmem:[%s1 + $0x270] sm:$0xf]
  %v191 = vld [vmem:[%s1 + $0x274] sm:$0xf]
  %v192 = vld [vmem:[%s1 + $0x278] sm:$0xf]
  %v193 = vld [vmem:[%s1 + $0x27c] sm:$0xf]
  %v194 = vld [vmem:[%s1 + $0x280] sm:$0xf]
  %v195 = vld [vmem:[%s1 + $0x284] sm:$0xf]
  %v196 = vld [vmem:[%s1 + $0x288] sm:$0xf]
  %v197 = vld [vmem:[%s1 + $0x28c] sm:$0xf]
  %v198 = vld [vmem:[%s1 + $0x290] sm:$0xf]
  %v199 = vld [vmem:[%s1 + $0x294] sm:$0xf]
  %v200 = vld [vmem:[%s1 + $0x298] sm:$0xf]
  %v201 = vld [vmem:[%s1 + $0x29c] sm:$0xf]
  %v202 = vld [vmem:[%s1 + $0x2a0] sm:$0xf]
  %v203 = vld [vmem:[%s1 + $0x2a4] sm:$0xf]
  %v204 = vld [vmem:[%s1 + $0x2a8] sm:$0xf]
  %v205 = vld [vmem:[%s1 + $0x2ac] sm:$0xf]
  %v206 = vld [vmem:[%s1 + $0x2b0] sm:$0xf]
  %v207 = vld [vmem:[%s1 + $0x2b4] sm:$0xf]
  %v208 = vld [vmem:[%s1 + $0x2b8] sm:$0xf]
  %v209 = vld [vmem:[%s1 + $0x2bc] sm:$0xf]
  %v210 = vld [vmem:[%s1 + $0x2c0] sm:$0xf]
  %v211 = vld [vmem:[%s1 + $0x2c4] sm:$0xf]
  %v212 = vld [vmem:[%s1 + $0x2c8] sm:$0xf]
  %v213 = vld [vmem:[%s1 + $0x2cc] sm:$0xf]
  %v214 = vld [vmem:[%s1 + $0x2d0] sm:$0xf]
  %v215 = vld [vmem:[%s1 + $0x2d4] sm:$0xf]
  %v216 = vld [vmem:[%s1 + $0x2d8] sm:$0xf]
  %v217 = vld [vmem:[%s1 + $0x2dc] sm:$0xf]
  %v218 = vld [vmem:[%s1 + $0x2e0] sm:$0xf]
  %v219 = vld [vmem:[%s1 + $0x2e4] sm:$0xf]
  %v220 = vld [vmem:[%s1 + $0x2e8] sm:$0xf]
  %v221 = vld [vmem:[%s1 + $0x2ec] sm:$0xf]
  %v222 = vld [vmem:[%s1 + $0x2f0] sm:$0xf]
  %v223 = vld [vmem:[%s1 + $0x2f4] sm:$0xf]
  %v224 = vld [vmem:[%s1 + $0x2f8] sm:$0xf]
  %v225 = vld [vmem:[%s1 + $0x2fc] sm:$0xf]
  %v226 = vld [vmem:[%s1 + $0x300] sm:$0xf]
  %v227 = vld [vmem:[%s1 + $0x304] sm:$0xf]
  %v228 = vld [vmem:[%s1 + $0x308] sm:$0xf]
  %v229 = vld [vmem:[%s1 + $0x30c] sm:$0xf]
  %v230 = vld [vmem:[%s1 + $0x310] sm:$0xf]
  %v231 = vld [vmem:[%s1 + $0x314] sm:$0xf]
  %v232 = vld [vmem:[%s1 + $0x318] sm:$0xf]
  %v233 = vld [vmem:[%s1 + $0x31c] sm:$0xf]
  %v234 = vld [vmem:[%s1 + $0x320] sm:$0xf]
  %v235 = vld [vmem:[%s1 + $0x324] sm:$0xf]
  %v236 = vld [vmem:[%s1 + $0x328] sm:$0xf]
  %v237 = vld [vmem:[%s1 + $0x32c] sm:$0xf]
  %v238 = vld [vmem:[%s1 + $0x330] sm:$0xf]
  %v239 = vld [vmem:[%s1 + $0x334] sm:$0xf]
  %v240 = vld [vmem:[%s1 + $0x338] sm:$0xf]
  %v241 = vld [vmem:[%s1 + $0x33c] sm:$0xf]
  %v242 = vld [vmem:[%s1 + $0x340] sm:$0xf]
  %v243 = vld [vmem:[%s1 + $0x344] sm:$0xf]
  %v244 = vld [vmem:[%s1 + $0x348] sm:$0xf]
  %v245 = vld [vmem:[%s1 + $0x34c] sm:$0xf]
  %v246 = vld [vmem:[%s1 + $0x350] sm:$0xf]
  %v247 = vld [vmem:[%s1 + $0x354] sm:$0xf]
  %v248 = vld [vmem:[%s1 + $0x358] sm:$0xf]
  %v249 = vld [vmem:[%s1 + $0x35c] sm:$0xf]
  %v250 = vld [vmem:[%s1 + $0x360] sm:$0xf]
  %v251 = vld [vmem:[%s1 + $0x364] sm:$0xf]
  %v252 = vld [vmem:[%s1 + $0x368] sm:$0xf]
  %v253 = vld [vmem:[%s1 + $0x36c] sm:$0xf]
  %v254 = vld [vmem:[%s1 + $0x370] sm:$0xf]
  %v255 = vld [vmem:[%s1 + $0x374] sm:$0xf]
  %v256 = vld [vmem:[%s1 + $0x378] sm:$0xf]
  %v257 = vld [vmem:[%s1 + $0x37c] sm:$0xf]
  %v258 = vld [vmem:[%s1 + $0x380] sm:$0xf]
  %v259 = vld [vmem:[%s1 + $0x384] sm:$0xf]
  %v260 = vld [vmem:[%s1 + $0x388] sm:$0xf]
  %v261 = vld [vmem:[%s1 + $0x38c] sm:$0xf]
  %v262 = vld [vmem:[%s1 + $0x390] sm:$0xf]
  %v263 = vld [vmem:[%s1 + $0x394] sm:$0xf]
  %v264 = vld [vmem:[%s1 + $0x398] sm:$0xf]
  %v265 = vld [vmem:[%s1 + $0x39c] sm:$0xf]
  %v266 = vld [vmem:[%s1 + $0x3a0] sm:$0xf]
  %v267 = vld [vmem:[%s1 + $0x3a4] sm:$0xf]
  %v268 = vld [vmem:[%s1 + $0x3a8] sm:$0xf]
  %v269 = vld [vmem:[%s1 + $0x3ac] sm:$0xf]
  %v270 = vld [vmem:[%s1 + $0x3b0] sm:$0xf]
  %v271 = vld [vmem:[%s1 + $0x3b4] sm:$0xf]
  %v272 = vld [vmem:[%s1 + $0x3b8] sm:$0xf]
  %v273 = vld [vmem:[%s1 + $0x3bc] sm:$0xf]
  %v274 = vld [vmem:[%s1 + $0x3c0] sm:$0xf]
  %v275 = vld [vmem:[%s1 + $0x3c4] sm:$0xf]
  %v276 = vld [vmem:[%s1 + $0x3c8] sm:$0xf]
  %v277 = vld [vmem:[%s1 + $0x3cc] sm:$0xf]
  %v278 = vld [vmem:[%s1 + $0x3d0] sm:$0xf]
  %v279 = vld [vmem:[%s1 + $0x3d4] sm:$0xf]
  %v280 = vld [vmem:[%s1 + $0x3d8] sm:$0xf]
  %v281 = vld [vmem:[%s1 + $0x3dc] sm:$0xf]
  %v282 = vld [vmem:[%s1 + $0x3e0] sm:$0xf]
  %v283 = vld [vmem:[%s1 + $0x3e4] sm:$0xf]
  %v284 = vld [vmem:[%s1 + $0x3e8] sm:$0xf]
  %v285 = vld [vmem:[%s1 + $0x3ec] sm:$0xf]
  %v286 = vld [vmem:[%s1 + $0x3f0] sm:$0xf]
  %v287 = vld [vmem:[%s1 + $0x3f4] sm:$0xf]
  %v288 = vld [vmem:[%s1 + $0x3f8] sm:$0xf]
  %v289 = vld [vmem:[%s1 + $0x3fc] sm:$0xf]
  %v306 = vunpack.c.l.b16 %v18
  %v307 = vunpack.c.h.b16 %v18
  %v308 = vunpack.c.l.b16 %v19
  %v309 = vunpack.c.h.b16 %v19
  %v310 = vunpack.c.l.b16 %v20
  %v311 = vunpack.c.h.b16 %v20
  %v312 = vunpack.c.l.b16 %v21
  %v313 = vunpack.c.h.b16 %v21
  %v314 = vunpack.c.l.b16 %v22
  %v315 = vunpack.c.h.b16 %v22
  %v316 = vunpack.c.l.b16 %v23
  %v317 = vunpack.c.h.b16 %v23
  %v318 = vunpack.c.l.b16 %v24
  %v319 = vunpack.c.h.b16 %v24
  %v320 = vunpack.c.l.b16 %v25
  %v321 = vunpack.c.h.b16 %v25
  %v322 = vunpack.c.l.b16 %v26
  %v323 = vunpack.c.h.b16 %v26
  %v324 = vunpack.c.l.b16 %v27
  %v325 = vunpack.c.h.b16 %v27
  %v326 = vunpack.c.l.b16 %v28
  %v327 = vunpack.c.h.b16 %v28
  %v328 = vunpack.c.l.b16 %v29
  %v329 = vunpack.c.h.b16 %v29
  %v330 = vunpack.c.l.b16 %v30
  %v331 = vunpack.c.h.b16 %v30
  %v332 = vunpack.c.l.b16 %v31
  %v333 = vunpack.c.h.b16 %v31
  %v334 = vunpack.c.l.b16 %v32
  %v335 = vunpack.c.h.b16 %v32
  %v336 = vunpack.c.l.b16 %v33
  %v337 = vunpack.c.h.b16 %v33
  %v338 = vpack.c.b16 %v322, %v306
  %v339 = vpack.c.b16 %v323, %v307
  %v340 = vpack.c.b16 %v324, %v308
  %v341 = vpack.c.b16 %v325, %v309
  %v342 = vpack.c.b16 %v326, %v310
  %v343 = vpack.c.b16 %v327, %v311
  %v344 = vpack.c.b16 %v328, %v312
  %v345 = vpack.c.b16 %v329, %v313
  %v346 = vpack.c.b16 %v330, %v314
  %v347 = vpack.c.b16 %v331, %v315
  %v348 = vpack.c.b16 %v332, %v316
  %v349 = vpack.c.b16 %v333, %v317
  %v350 = vpack.c.b16 %v334, %v318
  %v351 = vpack.c.b16 %v335, %v319
  %v352 = vpack.c.b16 %v336, %v320
  %v353 = vpack.c.b16 %v337, %v321
  %v626 = vunpack.c.l.b16 %v34
  %v627 = vunpack.c.l.b16 %v35
  %v628 = vunpack.c.l.b16 %v36
  %v629 = vunpack.c.l.b16 %v37
  %v630 = vunpack.c.l.b16 %v38
  %v631 = vunpack.c.l.b16 %v39
  %v632 = vunpack.c.l.b16 %v40
  %v633 = vunpack.c.l.b16 %v41
  %v634 = vunpack.c.l.b16 %v42
  %v635 = vunpack.c.l.b16 %v43
  %v636 = vunpack.c.l.b16 %v44
  %v637 = vunpack.c.l.b16 %v45
  %v638 = vunpack.c.l.b16 %v46
  %v639 = vunpack.c.l.b16 %v47
  %v640 = vunpack.c.l.b16 %v48
  %v641 = vunpack.c.l.b16 %v49
  %v642 = vunpack.c.l.b16 %v50
  %v643 = vunpack.c.l.b16 %v51
  %v644 = vunpack.c.l.b16 %v52
  %v645 = vunpack.c.l.b16 %v53
  %v646 = vunpack.c.l.b16 %v54
  %v647 = vunpack.c.l.b16 %v55
  %v648 = vunpack.c.l.b16 %v56
  %v649 = vunpack.c.l.b16 %v57
  %v650 = vunpack.c.l.b16 %v58
  %v651 = vunpack.c.l.b16 %v59
  %v652 = vunpack.c.l.b16 %v60
  %v653 = vunpack.c.l.b16 %v61
  %v654 = vunpack.c.l.b16 %v62
  %v655 = vunpack.c.l.b16 %v63
  %v656 = vunpack.c.l.b16 %v64
  %v657 = vunpack.c.l.b16 %v65
  %v658 = vunpack.c.l.b16 %v66
  %v659 = vunpack.c.l.b16 %v67
  %v660 = vunpack.c.l.b16 %v68
  %v661 = vunpack.c.l.b16 %v69
  %v662 = vunpack.c.l.b16 %v70
  %v663 = vunpack.c.l.b16 %v71
  %v664 = vunpack.c.l.b16 %v72
  %v665 = vunpack.c.l.b16 %v73
  %v666 = vunpack.c.l.b16 %v74
  %v667 = vunpack.c.l.b16 %v75
  %v668 = vunpack.c.l.b16 %v76
  %v669 = vunpack.c.l.b16 %v77
  %v670 = vunpack.c.l.b16 %v78
  %v671 = vunpack.c.l.b16 %v79
  %v672 = vunpack.c.l.b16 %v80
  %v673 = vunpack.c.l.b16 %v81
  %v674 = vunpack.c.l.b16 %v82
  %v675 = vunpack.c.l.b16 %v83
  %v676 = vunpack.c.l.b16 %v84
  %v677 = vunpack.c.l.b16 %v85
  %v678 = vunpack.c.l.b16 %v86
  %v679 = vunpack.c.l.b16 %v87
  %v680 = vunpack.c.l.b16 %v88
  %v681 = vunpack.c.l.b16 %v89
  %v682 = vunpack.c.l.b16 %v90
  %v683 = vunpack.c.l.b16 %v91
  %v684 = vunpack.c.l.b16 %v92
  %v685 = vunpack.c.l.b16 %v93
  %v686 = vunpack.c.l.b16 %v94
  %v687 = vunpack.c.l.b16 %v95
  %v688 = vunpack.c.l.b16 %v96
  %v689 = vunpack.c.l.b16 %v97
  %v690 = vunpack.c.l.b16 %v98
  %v691 = vunpack.c.l.b16 %v99
  %v692 = vunpack.c.l.b16 %v100
  %v693 = vunpack.c.l.b16 %v101
  %v694 = vunpack.c.l.b16 %v102
  %v695 = vunpack.c.l.b16 %v103
  %v696 = vunpack.c.l.b16 %v104
  %v697 = vunpack.c.l.b16 %v105
  %v698 = vunpack.c.l.b16 %v106
  %v699 = vunpack.c.l.b16 %v107
  %v700 = vunpack.c.l.b16 %v108
  %v701 = vunpack.c.l.b16 %v109
  %v702 = vunpack.c.l.b16 %v110
  %v703 = vunpack.c.l.b16 %v111
  %v704 = vunpack.c.l.b16 %v112
  %v705 = vunpack.c.l.b16 %v113
  %v706 = vunpack.c.l.b16 %v114
  %v707 = vunpack.c.l.b16 %v115
  %v708 = vunpack.c.l.b16 %v116
  %v709 = vunpack.c.l.b16 %v117
  %v710 = vunpack.c.l.b16 %v118
  %v711 = vunpack.c.l.b16 %v119
  %v712 = vunpack.c.l.b16 %v120
  %v713 = vunpack.c.l.b16 %v121
  %v714 = vunpack.c.l.b16 %v122
  %v715 = vunpack.c.l.b16 %v123
  %v716 = vunpack.c.l.b16 %v124
  %v717 = vunpack.c.l.b16 %v125
  %v718 = vunpack.c.l.b16 %v126
  %v719 = vunpack.c.l.b16 %v127
  %v720 = vunpack.c.l.b16 %v128
  %v721 = vunpack.c.l.b16 %v129
  %v722 = vunpack.c.l.b16 %v130
  %v723 = vunpack.c.l.b16 %v131
  %v724 = vunpack.c.l.b16 %v132
  %v725 = vunpack.c.l.b16 %v133
  %v726 = vunpack.c.l.b16 %v134
  %v727 = vunpack.c.l.b16 %v135
  %v728 = vunpack.c.l.b16 %v136
  %v729 = vunpack.c.l.b16 %v137
  %v730 = vunpack.c.l.b16 %v138
  %v731 = vunpack.c.l.b16 %v139
  %v732 = vunpack.c.l.b16 %v140
  %v733 = vunpack.c.l.b16 %v141
  %v734 = vunpack.c.l.b16 %v142
  %v735 = vunpack.c.l.b16 %v143
  %v736 = vunpack.c.l.b16 %v144
  %v737 = vunpack.c.l.b16 %v145
  %v738 = vunpack.c.l.b16 %v146
  %v739 = vunpack.c.l.b16 %v147
  %v740 = vunpack.c.l.b16 %v148
  %v741 = vunpack.c.l.b16 %v149
  %v742 = vunpack.c.l.b16 %v150
  %v743 = vunpack.c.l.b16 %v151
  %v744 = vunpack.c.l.b16 %v152
  %v745 = vunpack.c.l.b16 %v153
  %v746 = vunpack.c.l.b16 %v154
  %v747 = vunpack.c.l.b16 %v155
  %v748 = vunpack.c.l.b16 %v156
  %v749 = vunpack.c.l.b16 %v157
  %v750 = vunpack.c.l.b16 %v158
  %v751 = vunpack.c.l.b16 %v159
  %v752 = vunpack.c.l.b16 %v160
  %v753 = vunpack.c.l.b16 %v161
  %v754 = vunpack.c.l.b16 %v162
  %v755 = vunpack.c.l.b16 %v163
  %v756 = vunpack.c.l.b16 %v164
  %v757 = vunpack.c.l.b16 %v165
  %v758 = vunpack.c.l.b16 %v166
  %v759 = vunpack.c.l.b16 %v167
  %v760 = vunpack.c.l.b16 %v168
  %v761 = vunpack.c.l.b16 %v169
  %v762 = vunpack.c.l.b16 %v170
  %v763 = vunpack.c.l.b16 %v171
  %v764 = vunpack.c.l.b16 %v172
  %v765 = vunpack.c.l.b16 %v173
  %v766 = vunpack.c.l.b16 %v174
  %v767 = vunpack.c.l.b16 %v175
  %v768 = vunpack.c.l.b16 %v176
  %v769 = vunpack.c.l.b16 %v177
  %v770 = vunpack.c.l.b16 %v178
  %v771 = vunpack.c.l.b16 %v179
  %v772 = vunpack.c.l.b16 %v180
  %v773 = vunpack.c.l.b16 %v181
  %v774 = vunpack.c.l.b16 %v182
  %v775 = vunpack.c.l.b16 %v183
  %v776 = vunpack.c.l.b16 %v184
  %v777 = vunpack.c.l.b16 %v185
  %v778 = vunpack.c.l.b16 %v186
  %v779 = vunpack.c.l.b16 %v187
  %v780 = vunpack.c.l.b16 %v188
  %v781 = vunpack.c.l.b16 %v189
  %v782 = vunpack.c.l.b16 %v190
  %v783 = vunpack.c.l.b16 %v191
  %v784 = vunpack.c.l.b16 %v192
  %v785 = vunpack.c.l.b16 %v193
  %v786 = vunpack.c.l.b16 %v194
  %v787 = vunpack.c.l.b16 %v195
  %v788 = vunpack.c.l.b16 %v196
  %v789 = vunpack.c.l.b16 %v197
  %v790 = vunpack.c.l.b16 %v198
  %v791 = vunpack.c.l.b16 %v199
  %v792 = vunpack.c.l.b16 %v200
  %v793 = vunpack.c.l.b16 %v201
  %v794 = vunpack.c.l.b16 %v202
  %v795 = vunpack.c.l.b16 %v203
  %v796 = vunpack.c.l.b16 %v204
  %v797 = vunpack.c.l.b16 %v205
  %v798 = vunpack.c.l.b16 %v206
  %v799 = vunpack.c.l.b16 %v207
  %v800 = vunpack.c.l.b16 %v208
  %v801 = vunpack.c.l.b16 %v209
  %v802 = vunpack.c.l.b16 %v210
  %v803 = vunpack.c.l.b16 %v211
  %v804 = vunpack.c.l.b16 %v212
  %v805 = vunpack.c.l.b16 %v213
  %v806 = vunpack.c.l.b16 %v214
  %v807 = vunpack.c.l.b16 %v215
  %v808 = vunpack.c.l.b16 %v216
  %v809 = vunpack.c.l.b16 %v217
  %v810 = vunpack.c.l.b16 %v218
  %v811 = vunpack.c.l.b16 %v219
  %v812 = vunpack.c.l.b16 %v220
  %v813 = vunpack.c.l.b16 %v221
  %v814 = vunpack.c.l.b16 %v222
  %v815 = vunpack.c.l.b16 %v223
  %v816 = vunpack.c.l.b16 %v224
  %v817 = vunpack.c.l.b16 %v225
  %v818 = vunpack.c.l.b16 %v226
  %v819 = vunpack.c.l.b16 %v227
  %v820 = vunpack.c.l.b16 %v228
  %v821 = vunpack.c.l.b16 %v229
  %v822 = vunpack.c.l.b16 %v230
  %v823 = vunpack.c.l.b16 %v231
  %v824 = vunpack.c.l.b16 %v232
  %v825 = vunpack.c.l.b16 %v233
  %v826 = vunpack.c.l.b16 %v234
  %v827 = vunpack.c.l.b16 %v235
  %v828 = vunpack.c.l.b16 %v236
  %v829 = vunpack.c.l.b16 %v237
  %v830 = vunpack.c.l.b16 %v238
  %v831 = vunpack.c.l.b16 %v239
  %v832 = vunpack.c.l.b16 %v240
  %v833 = vunpack.c.l.b16 %v241
  %v834 = vunpack.c.l.b16 %v242
  %v835 = vunpack.c.l.b16 %v243
  %v836 = vunpack.c.l.b16 %v244
  %v837 = vunpack.c.l.b16 %v245
  %v838 = vunpack.c.l.b16 %v246
  %v839 = vunpack.c.l.b16 %v247
  %v840 = vunpack.c.l.b16 %v248
  %v841 = vunpack.c.l.b16 %v249
  %v842 = vunpack.c.l.b16 %v250
  %v843 = vunpack.c.l.b16 %v251
  %v844 = vunpack.c.l.b16 %v252
  %v845 = vunpack.c.l.b16 %v253
  %v846 = vunpack.c.l.b16 %v254
  %v847 = vunpack.c.l.b16 %v255
  %v848 = vunpack.c.l.b16 %v256
  %v849 = vunpack.c.l.b16 %v257
  %v850 = vunpack.c.l.b16 %v258
  %v851 = vunpack.c.l.b16 %v259
  %v852 = vunpack.c.l.b16 %v260
  %v853 = vunpack.c.l.b16 %v261
  %v854 = vunpack.c.l.b16 %v262
  %v855 = vunpack.c.l.b16 %v263
  %v856 = vunpack.c.l.b16 %v264
  %v857 = vunpack.c.l.b16 %v265
  %v858 = vunpack.c.l.b16 %v266
  %v859 = vunpack.c.l.b16 %v267
  %v860 = vunpack.c.l.b16 %v268
  %v861 = vunpack.c.l.b16 %v269
  %v862 = vunpack.c.l.b16 %v270
  %v863 = vunpack.c.l.b16 %v271
  %v864 = vunpack.c.l.b16 %v272
  %v865 = vunpack.c.l.b16 %v273
  %v866 = vunpack.c.l.b16 %v274
  %v867 = vunpack.c.l.b16 %v275
  %v868 = vunpack.c.l.b16 %v276
  %v869 = vunpack.c.l.b16 %v277
  %v870 = vunpack.c.l.b16 %v278
  %v871 = vunpack.c.l.b16 %v279
  %v872 = vunpack.c.l.b16 %v280
  %v873 = vunpack.c.l.b16 %v281
  %v874 = vunpack.c.l.b16 %v282
  %v875 = vunpack.c.l.b16 %v283
  %v876 = vunpack.c.l.b16 %v284
  %v877 = vunpack.c.l.b16 %v285
  %v878 = vunpack.c.l.b16 %v286
  %v879 = vunpack.c.l.b16 %v287
  %v880 = vunpack.c.l.b16 %v288
  %v881 = vunpack.c.l.b16 %v289
  %v882 = vpack.c.b16 %v627, %v626
  %v883 = vpack.c.b16 %v629, %v628
  %v884 = vpack.c.b16 %v631, %v630
  %v885 = vpack.c.b16 %v633, %v632
  %v886 = vpack.c.b16 %v635, %v634
  %v887 = vpack.c.b16 %v637, %v636
  %v888 = vpack.c.b16 %v639, %v638
  %v889 = vpack.c.b16 %v641, %v640
  %v890 = vpack.c.b16 %v643, %v642
  %v891 = vpack.c.b16 %v645, %v644
  %v892 = vpack.c.b16 %v647, %v646
  %v893 = vpack.c.b16 %v649, %v648
  %v894 = vpack.c.b16 %v651, %v650
  %v895 = vpack.c.b16 %v653, %v652
  %v896 = vpack.c.b16 %v655, %v654
  %v897 = vpack.c.b16 %v657, %v656
  %v898 = vpack.c.b16 %v659, %v658
  %v899 = vpack.c.b16 %v661, %v660
  %v900 = vpack.c.b16 %v663, %v662
  %v901 = vpack.c.b16 %v665, %v664
  %v902 = vpack.c.b16 %v667, %v666
  %v903 = vpack.c.b16 %v669, %v668
  %v904 = vpack.c.b16 %v671, %v670
  %v905 = vpack.c.b16 %v673, %v672
  %v906 = vpack.c.b16 %v675, %v674
  %v907 = vpack.c.b16 %v677, %v676
  %v908 = vpack.c.b16 %v679, %v678
  %v909 = vpack.c.b16 %v681, %v680
  %v910 = vpack.c.b16 %v683, %v682
  %v911 = vpack.c.b16 %v685, %v684
  %v912 = vpack.c.b16 %v687, %v686
  %v913 = vpack.c.b16 %v689, %v688
  %v914 = vpack.c.b16 %v691, %v690
  %v915 = vpack.c.b16 %v693, %v692
  %v916 = vpack.c.b16 %v695, %v694
  %v917 = vpack.c.b16 %v697, %v696
  %v918 = vpack.c.b16 %v699, %v698
  %v919 = vpack.c.b16 %v701, %v700
  %v920 = vpack.c.b16 %v703, %v702
  %v921 = vpack.c.b16 %v705, %v704
  %v922 = vpack.c.b16 %v707, %v706
  %v923 = vpack.c.b16 %v709, %v708
  %v924 = vpack.c.b16 %v711, %v710
  %v925 = vpack.c.b16 %v713, %v712
  %v926 = vpack.c.b16 %v715, %v714
  %v927 = vpack.c.b16 %v717, %v716
  %v928 = vpack.c.b16 %v719, %v718
  %v929 = vpack.c.b16 %v721, %v720
  %v930 = vpack.c.b16 %v723, %v722
  %v931 = vpack.c.b16 %v725, %v724
  %v932 = vpack.c.b16 %v727, %v726
  %v933 = vpack.c.b16 %v729, %v728
  %v934 = vpack.c.b16 %v731, %v730
  %v935 = vpack.c.b16 %v733, %v732
  %v936 = vpack.c.b16 %v735, %v734
  %v937 = vpack.c.b16 %v737, %v736
  %v938 = vpack.c.b16 %v739, %v738
  %v939 = vpack.c.b16 %v741, %v740
  %v940 = vpack.c.b16 %v743, %v742
  %v941 = vpack.c.b16 %v745, %v744
  %v942 = vpack.c.b16 %v747, %v746
  %v943 = vpack.c.b16 %v749, %v748
  %v944 = vpack.c.b16 %v751, %v750
  %v945 = vpack.c.b16 %v753, %v752
  %v946 = vpack.c.b16 %v755, %v754
  %v947 = vpack.c.b16 %v757, %v756
  %v948 = vpack.c.b16 %v759, %v758
  %v949 = vpack.c.b16 %v761, %v760
  %v950 = vpack.c.b16 %v763, %v762
  %v951 = vpack.c.b16 %v765, %v764
  %v952 = vpack.c.b16 %v767, %v766
  %v953 = vpack.c.b16 %v769, %v768
  %v954 = vpack.c.b16 %v771, %v770
  %v955 = vpack.c.b16 %v773, %v772
  %v956 = vpack.c.b16 %v775, %v774
  %v957 = vpack.c.b16 %v777, %v776
  %v958 = vpack.c.b16 %v779, %v778
  %v959 = vpack.c.b16 %v781, %v780
  %v960 = vpack.c.b16 %v783, %v782
  %v961 = vpack.c.b16 %v785, %v784
  %v962 = vpack.c.b16 %v787, %v786
  %v963 = vpack.c.b16 %v789, %v788
  %v964 = vpack.c.b16 %v791, %v790
  %v965 = vpack.c.b16 %v793, %v792
  %v966 = vpack.c.b16 %v795, %v794
  %v967 = vpack.c.b16 %v797, %v796
  %v968 = vpack.c.b16 %v799, %v798
  %v969 = vpack.c.b16 %v801, %v800
  %v970 = vpack.c.b16 %v803, %v802
  %v971 = vpack.c.b16 %v805, %v804
  %v972 = vpack.c.b16 %v807, %v806
  %v973 = vpack.c.b16 %v809, %v808
  %v974 = vpack.c.b16 %v811, %v810
  %v975 = vpack.c.b16 %v813, %v812
  %v976 = vpack.c.b16 %v815, %v814
  %v977 = vpack.c.b16 %v817, %v816
  %v978 = vpack.c.b16 %v819, %v818
  %v979 = vpack.c.b16 %v821, %v820
  %v980 = vpack.c.b16 %v823, %v822
  %v981 = vpack.c.b16 %v825, %v824
  %v982 = vpack.c.b16 %v827, %v826
  %v983 = vpack.c.b16 %v829, %v828
  %v984 = vpack.c.b16 %v831, %v830
  %v985 = vpack.c.b16 %v833, %v832
  %v986 = vpack.c.b16 %v835, %v834
  %v987 = vpack.c.b16 %v837, %v836
  %v988 = vpack.c.b16 %v839, %v838
  %v989 = vpack.c.b16 %v841, %v840
  %v990 = vpack.c.b16 %v843, %v842
  %v991 = vpack.c.b16 %v845, %v844
  %v992 = vpack.c.b16 %v847, %v846
  %v993 = vpack.c.b16 %v849, %v848
  %v994 = vpack.c.b16 %v851, %v850
  %v995 = vpack.c.b16 %v853, %v852
  %v996 = vpack.c.b16 %v855, %v854
  %v997 = vpack.c.b16 %v857, %v856
  %v998 = vpack.c.b16 %v859, %v858
  %v999 = vpack.c.b16 %v861, %v860
  %v1000 = vpack.c.b16 %v863, %v862
  %v1001 = vpack.c.b16 %v865, %v864
  %v1002 = vpack.c.b16 %v867, %v866
  %v1003 = vpack.c.b16 %v869, %v868
  %v1004 = vpack.c.b16 %v871, %v870
  %v1005 = vpack.c.b16 %v873, %v872
  %v1006 = vpack.c.b16 %v875, %v874
  %v1007 = vpack.c.b16 %v877, %v876
  %v1008 = vpack.c.b16 %v879, %v878
  %v1009 = vpack.c.b16 %v881, %v880
  %1138 = vmatprep.subr.bf16.mxu0 0
  %1139 = vmatpush1.bf16.msra.mxu0 %v882
  %1140 = vmatprep.subr.bf16.mxu0 0
  %1141 = vmatpush1.bf16.msra.mxu0 %v883
  %1142 = vmatprep.subr.bf16.mxu0 0
  %1143 = vmatpush1.bf16.msra.mxu0 %v884
  %1144 = vmatprep.subr.bf16.mxu0 0
  %1145 = vmatpush1.bf16.msra.mxu0 %v885
  %1146 = vmatprep.subr.bf16.mxu0 0
  %1147 = vmatpush1.bf16.msra.mxu0 %v886
  %1148 = vmatprep.subr.bf16.mxu0 0
  %1149 = vmatpush1.bf16.msra.mxu0 %v887
  %1150 = vmatprep.subr.bf16.mxu0 0
  %1151 = vmatpush1.bf16.msra.mxu0 %v888
  %1152 = vmatprep.subr.bf16.mxu0 0
  %1153 = vmatpush1.bf16.msra.mxu0 %v889
  %1154 = vmatprep.subr.bf16.mxu0 0
  %1155 = vmatpush1.bf16.msra.mxu0 %v890
  %1156 = vmatprep.subr.bf16.mxu0 0
  %1157 = vmatpush1.bf16.msra.mxu0 %v891
  %1158 = vmatprep.subr.bf16.mxu0 0
  %1159 = vmatpush1.bf16.msra.mxu0 %v892
  %1160 = vmatprep.subr.bf16.mxu0 0
  %1161 = vmatpush1.bf16.msra.mxu0 %v893
  %1162 = vmatprep.subr.bf16.mxu0 0
  %1163 = vmatpush1.bf16.msra.mxu0 %v894
  %1164 = vmatprep.subr.bf16.mxu0 0
  %1165 = vmatpush1.bf16.msra.mxu0 %v895
  %1166 = vmatprep.subr.bf16.mxu0 0
  %1167 = vmatpush1.bf16.msra.mxu0 %v896
  %1168 = vmatprep.subr.bf16.mxu0 0
  %1169 = vmatpush1.bf16.msra.mxu0 %v897
  %1170 = vmatprep.mubr.bf16.mxu0 %v339
  %1171 = vmatmul.mubr.bf16.gmra.mrb[0].mxu0 %v338
  %v1172 = vpop.f32.mrb[0].mxu0
  %v1173 = vadd.f32 0.0, %v1172
  %v1174 = vpop.f32.mrb[0].mxu0
  %v1175 = vpop.f32.mrb[0].mxu0
  %v1176 = vadd.f32 0.0, %v1175
  %v1177 = vpop.f32.mrb[0].mxu0
  %1178 = vdwg.mxu0
  %1179 = vmatprep.subr.bf16.mxu0 0
  %1180 = vmatpush1.bf16.msra.mxu0 %v898
  %1181 = vmatprep.subr.bf16.mxu0 0
  %1182 = vmatpush1.bf16.msra.mxu0 %v899
  %1183 = vmatprep.subr.bf16.mxu0 0
  %1184 = vmatpush1.bf16.msra.mxu0 %v900
  %1185 = vmatprep.subr.bf16.mxu0 0
  %1186 = vmatpush1.bf16.msra.mxu0 %v901
  %1187 = vmatprep.subr.bf16.mxu0 0
  %1188 = vmatpush1.bf16.msra.mxu0 %v902
  %1189 = vmatprep.subr.bf16.mxu0 0
  %1190 = vmatpush1.bf16.msra.mxu0 %v903
  %1191 = vmatprep.subr.bf16.mxu0 0
  %1192 = vmatpush1.bf16.msra.mxu0 %v904
  %1193 = vmatprep.subr.bf16.mxu0 0
  %1194 = vmatpush1.bf16.msra.mxu0 %v905
  %1195 = vmatprep.subr.bf16.mxu0 0
  %1196 = vmatpush1.bf16.msra.mxu0 %v906
  %1197 = vmatprep.subr.bf16.mxu0 0
  %1198 = vmatpush1.bf16.msra.mxu0 %v907
  %1199 = vmatprep.subr.bf16.mxu0 0
  %1200 = vmatpush1.bf16.msra.mxu0 %v908
  %1201 = vmatprep.subr.bf16.mxu0 0
  %1202 = vmatpush1.bf16.msra.mxu0 %v909
  %1203 = vmatprep.subr.bf16.mxu0 0
  %1204 = vmatpush1.bf16.msra.mxu0 %v910
  %1205 = vmatprep.subr.bf16.mxu0 0
  %1206 = vmatpush1.bf16.msra.mxu0 %v911
  %1207 = vmatprep.subr.bf16.mxu0 0
  %1208 = vmatpush1.bf16.msra.mxu0 %v912
  %1209 = vmatprep.subr.bf16.mxu0 0
  %1210 = vmatpush1.bf16.msra.mxu0 %v913
  %1211 = vmatprep.mubr.bf16.mxu0 %v341
  %1212 = vmatmul.mubr.bf16.gmra.mrb[0].mxu0 %v340
  %v1213 = vpop.f32.mrb[0].mxu0
  %v1214 = vadd.f32 %v1173, %v1213
  %v1215 = vpop.f32.mrb[0].mxu0
  %v1216 = vpop.f32.mrb[0].mxu0
  %v1217 = vadd.f32 %v1176, %v1216
  %v1218 = vpop.f32.mrb[0].mxu0
  %1219 = vdwg.mxu0
  %1220 = vmatprep.subr.bf16.mxu0 0
  %1221 = vmatpush1.bf16.msra.mxu0 %v914
  %1222 = vmatprep.subr.bf16.mxu0 0
  %1223 = vmatpush1.bf16.msra.mxu0 %v915
  %1224 = vmatprep.subr.bf16.mxu0 0
  %1225 = vmatpush1.bf16.msra.mxu0 %v916
  %1226 = vmatprep.subr.bf16.mxu0 0
  %1227 = vmatpush1.bf16.msra.mxu0 %v917
  %1228 = vmatprep.subr.bf16.mxu0 0
  %1229 = vmatpush1.bf16.msra.mxu0 %v918
  %1230 = vmatprep.subr.bf16.mxu0 0
  %1231 = vmatpush1.bf16.msra.mxu0 %v919
  %1232 = vmatprep.subr.bf16.mxu0 0
  %1233 = vmatpush1.bf16.msra.mxu0 %v920
  %1234 = vmatprep.subr.bf16.mxu0 0
  %1235 = vmatpush1.bf16.msra.mxu0 %v921
  %1236 = vmatprep.subr.bf16.mxu0 0
  %1237 = vmatpush1.bf16.msra.mxu0 %v922
  %1238 = vmatprep.subr.bf16.mxu0 0
  %1239 = vmatpush1.bf16.msra.mxu0 %v923
  %1240 = vmatprep.subr.bf16.mxu0 0
  %1241 = vmatpush1.bf16.msra.mxu0 %v924
  %1242 = vmatprep.subr.bf16.mxu0 0
  %1243 = vmatpush1.bf16.msra.mxu0 %v925
  %1244 = vmatprep.subr.bf16.mxu0 0
  %1245 = vmatpush1.bf16.msra.mxu0 %v926
  %1246 = vmatprep.subr.bf16.mxu0 0
  %1247 = vmatpush1.bf16.msra.mxu0 %v927
  %1248 = vmatprep.subr.bf16.mxu0 0
  %1249 = vmatpush1.bf16.msra.mxu0 %v928
  %1250 = vmatprep.subr.bf16.mxu0 0
  %1251 = vmatpush1.bf16.msra.mxu0 %v929
  %1252 = vmatprep.mubr.bf16.mxu0 %v343
  %1253 = vmatmul.mubr.bf16.gmra.mrb[0].mxu0 %v342
  %v1254 = vpop.f32.mrb[0].mxu0
  %v1255 = vadd.f32 %v1214, %v1254
  %v1256 = vpop.f32.mrb[0].mxu0
  %v1257 = vpop.f32.mrb[0].mxu0
  %v1258 = vadd.f32 %v1217, %v1257
  %v1259 = vpop.f32.mrb[0].mxu0
  %1260 = vdwg.mxu0
  %1261 = vmatprep.subr.bf16.mxu0 0
  %1262 = vmatpush1.bf16.msra.mxu0 %v930
  %1263 = vmatprep.subr.bf16.mxu0 0
  %1264 = vmatpush1.bf16.msra.mxu0 %v931
  %1265 = vmatprep.subr.bf16.mxu0 0
  %1266 = vmatpush1.bf16.msra.mxu0 %v932
  %1267 = vmatprep.subr.bf16.mxu0 0
  %1268 = vmatpush1.bf16.msra.mxu0 %v933
  %1269 = vmatprep.subr.bf16.mxu0 0
  %1270 = vmatpush1.bf16.msra.mxu0 %v934
  %1271 = vmatprep.subr.bf16.mxu0 0
  %1272 = vmatpush1.bf16.msra.mxu0 %v935
  %1273 = vmatprep.subr.bf16.mxu0 0
  %1274 = vmatpush1.bf16.msra.mxu0 %v936
  %1275 = vmatprep.subr.bf16.mxu0 0
  %1276 = vmatpush1.bf16.msra.mxu0 %v937
  %1277 = vmatprep.subr.bf16.mxu0 0
  %1278 = vmatpush1.bf16.msra.mxu0 %v938
  %1279 = vmatprep.subr.bf16.mxu0 0
  %1280 = vmatpush1.bf16.msra.mxu0 %v939
  %1281 = vmatprep.subr.bf16.mxu0 0
  %1282 = vmatpush1.bf16.msra.mxu0 %v940
  %1283 = vmatprep.subr.bf16.mxu0 0
  %1284 = vmatpush1.bf16.msra.mxu0 %v941
  %1285 = vmatprep.subr.bf16.mxu0 0
  %1286 = vmatpush1.bf16.msra.mxu0 %v942
  %1287 = vmatprep.subr.bf16.mxu0 0
  %1288 = vmatpush1.bf16.msra.mxu0 %v943
  %1289 = vmatprep.subr.bf16.mxu0 0
  %1290 = vmatpush1.bf16.msra.mxu0 %v944
  %1291 = vmatprep.subr.bf16.mxu0 0
  %1292 = vmatpush1.bf16.msra.mxu0 %v945
  %1293 = vmatprep.mubr.bf16.mxu0 %v345
  %1294 = vmatmul.mubr.bf16.gmra.mrb[0].mxu0 %v344
  %v1295 = vpop.f32.mrb[0].mxu0
  %v1296 = vadd.f32 %v1255, %v1295
  %v1297 = vpop.f32.mrb[0].mxu0
  %v1298 = vpop.f32.mrb[0].mxu0
  %v1299 = vadd.f32 %v1258, %v1298
  %v1300 = vpop.f32.mrb[0].mxu0
  %1301 = vdwg.mxu0
  %1302 = vmatprep.subr.bf16.mxu0 0
  %1303 = vmatpush1.bf16.msra.mxu0 %v946
  %1304 = vmatprep.subr.bf16.mxu0 0
  %1305 = vmatpush1.bf16.msra.mxu0 %v947
  %1306 = vmatprep.subr.bf16.mxu0 0
  %1307 = vmatpush1.bf16.msra.mxu0 %v948
  %1308 = vmatprep.subr.bf16.mxu0 0
  %1309 = vmatpush1.bf16.msra.mxu0 %v949
  %1310 = vmatprep.subr.bf16.mxu0 0
  %1311 = vmatpush1.bf16.msra.mxu0 %v950
  %1312 = vmatprep.subr.bf16.mxu0 0
  %1313 = vmatpush1.bf16.msra.mxu0 %v951
  %1314 = vmatprep.subr.bf16.mxu0 0
  %1315 = vmatpush1.bf16.msra.mxu0 %v952
  %1316 = vmatprep.subr.bf16.mxu0 0
  %1317 = vmatpush1.bf16.msra.mxu0 %v953
  %1318 = vmatprep.subr.bf16.mxu0 0
  %1319 = vmatpush1.bf16.msra.mxu0 %v954
  %1320 = vmatprep.subr.bf16.mxu0 0
  %1321 = vmatpush1.bf16.msra.mxu0 %v955
  %1322 = vmatprep.subr.bf16.mxu0 0
  %1323 = vmatpush1.bf16.msra.mxu0 %v956
  %1324 = vmatprep.subr.bf16.mxu0 0
  %1325 = vmatpush1.bf16.msra.mxu0 %v957
  %1326 = vmatprep.subr.bf16.mxu0 0
  %1327 = vmatpush1.bf16.msra.mxu0 %v958
  %1328 = vmatprep.subr.bf16.mxu0 0
  %1329 = vmatpush1.bf16.msra.mxu0 %v959
  %1330 = vmatprep.subr.bf16.mxu0 0
  %1331 = vmatpush1.bf16.msra.mxu0 %v960
  %1332 = vmatprep.subr.bf16.mxu0 0
  %1333 = vmatpush1.bf16.msra.mxu0 %v961
  %1334 = vmatprep.mubr.bf16.mxu0 %v347
  %1335 = vmatmul.mubr.bf16.gmra.mrb[0].mxu0 %v346
  %v1336 = vpop.f32.mrb[0].mxu0
  %v1337 = vadd.f32 %v1296, %v1336
  %v1338 = vpop.f32.mrb[0].mxu0
  %v1339 = vpop.f32.mrb[0].mxu0
  %v1340 = vadd.f32 %v1299, %v1339
  %v1341 = vpop.f32.mrb[0].mxu0
  %1342 = vdwg.mxu0
  %1343 = vmatprep.subr.bf16.mxu0 0
  %1344 = vmatpush1.bf16.msra.mxu0 %v962
  %1345 = vmatprep.subr.bf16.mxu0 0
  %1346 = vmatpush1.bf16.msra.mxu0 %v963
  %1347 = vmatprep.subr.bf16.mxu0 0
  %1348 = vmatpush1.bf16.msra.mxu0 %v964
  %1349 = vmatprep.subr.bf16.mxu0 0
  %1350 = vmatpush1.bf16.msra.mxu0 %v965
  %1351 = vmatprep.subr.bf16.mxu0 0
  %1352 = vmatpush1.bf16.msra.mxu0 %v966
  %1353 = vmatprep.subr.bf16.mxu0 0
  %1354 = vmatpush1.bf16.msra.mxu0 %v967
  %1355 = vmatprep.subr.bf16.mxu0 0
  %1356 = vmatpush1.bf16.msra.mxu0 %v968
  %1357 = vmatprep.subr.bf16.mxu0 0
  %1358 = vmatpush1.bf16.msra.mxu0 %v969
  %1359 = vmatprep.subr.bf16.mxu0 0
  %1360 = vmatpush1.bf16.msra.mxu0 %v970
  %1361 = vmatprep.subr.bf16.mxu0 0
  %1362 = vmatpush1.bf16.msra.mxu0 %v971
  %1363 = vmatprep.subr.bf16.mxu0 0
  %1364 = vmatpush1.bf16.msra.mxu0 %v972
  %1365 = vmatprep.subr.bf16.mxu0 0
  %1366 = vmatpush1.bf16.msra.mxu0 %v973
  %1367 = vmatprep.subr.bf16.mxu0 0
  %1368 = vmatpush1.bf16.msra.mxu0 %v974
  %1369 = vmatprep.subr.bf16.mxu0 0
  %1370 = vmatpush1.bf16.msra.mxu0 %v975
  %1371 = vmatprep.subr.bf16.mxu0 0
  %1372 = vmatpush1.bf16.msra.mxu0 %v976
  %1373 = vmatprep.subr.bf16.mxu0 0
  %1374 = vmatpush1.bf16.msra.mxu0 %v977
  %1375 = vmatprep.mubr.bf16.mxu0 %v349
  %1376 = vmatmul.mubr.bf16.gmra.mrb[0].mxu0 %v348
  %v1377 = vpop.f32.mrb[0].mxu0
  %v1378 = vadd.f32 %v1337, %v1377
  %v1379 = vpop.f32.mrb[0].mxu0
  %v1380 = vpop.f32.mrb[0].mxu0
  %v1381 = vadd.f32 %v1340, %v1380
  %v1382 = vpop.f32.mrb[0].mxu0
  %1383 = vdwg.mxu0
  %1384 = vmatprep.subr.bf16.mxu0 0
  %1385 = vmatpush1.bf16.msra.mxu0 %v978
  %1386 = vmatprep.subr.bf16.mxu0 0
  %1387 = vmatpush1.bf16.msra.mxu0 %v979
  %1388 = vmatprep.subr.bf16.mxu0 0
  %1389 = vmatpush1.bf16.msra.mxu0 %v980
  %1390 = vmatprep.subr.bf16.mxu0 0
  %1391 = vmatpush1.bf16.msra.mxu0 %v981
  %1392 = vmatprep.subr.bf16.mxu0 0
  %1393 = vmatpush1.bf16.msra.mxu0 %v982
  %1394 = vmatprep.subr.bf16.mxu0 0
  %1395 = vmatpush1.bf16.msra.mxu0 %v983
  %1396 = vmatprep.subr.bf16.mxu0 0
  %1397 = vmatpush1.bf16.msra.mxu0 %v984
  %1398 = vmatprep.subr.bf16.mxu0 0
  %1399 = vmatpush1.bf16.msra.mxu0 %v985
  %1400 = vmatprep.subr.bf16.mxu0 0
  %1401 = vmatpush1.bf16.msra.mxu0 %v986
  %1402 = vmatprep.subr.bf16.mxu0 0
  %1403 = vmatpush1.bf16.msra.mxu0 %v987
  %1404 = vmatprep.subr.bf16.mxu0 0
  %1405 = vmatpush1.bf16.msra.mxu0 %v988
  %1406 = vmatprep.subr.bf16.mxu0 0
  %1407 = vmatpush1.bf16.msra.mxu0 %v989
  %1408 = vmatprep.subr.bf16.mxu0 0
  %1409 = vmatpush1.bf16.msra.mxu0 %v990
  %1410 = vmatprep.subr.bf16.mxu0 0
  %1411 = vmatpush1.bf16.msra.mxu0 %v991
  %1412 = vmatprep.subr.bf16.mxu0 0
  %1413 = vmatpush1.bf16.msra.mxu0 %v992
  %1414 = vmatprep.subr.bf16.mxu0 0
  %1415 = vmatpush1.bf16.msra.mxu0 %v993
  %1416 = vmatprep.mubr.bf16.mxu0 %v351
  %1417 = vmatmul.mubr.bf16.gmra.mrb[0].mxu0 %v350
  %v1418 = vpop.f32.mrb[0].mxu0
  %v1419 = vadd.f32 %v1378, %v1418
  %v1420 = vpop.f32.mrb[0].mxu0
  %v1421 = vpop.f32.mrb[0].mxu0
  %v1422 = vadd.f32 %v1381, %v1421
  %v1423 = vpop.f32.mrb[0].mxu0
  %1424 = vdwg.mxu0
  %1425 = vmatprep.subr.bf16.mxu0 0
  %1426 = vmatpush1.bf16.msra.mxu0 %v994
  %1427 = vmatprep.subr.bf16.mxu0 0
  %1428 = vmatpush1.bf16.msra.mxu0 %v995
  %1429 = vmatprep.subr.bf16.mxu0 0
  %1430 = vmatpush1.bf16.msra.mxu0 %v996
  %1431 = vmatprep.subr.bf16.mxu0 0
  %1432 = vmatpush1.bf16.msra.mxu0 %v997
  %1433 = vmatprep.subr.bf16.mxu0 0
  %1434 = vmatpush1.bf16.msra.mxu0 %v998
  %1435 = vmatprep.subr.bf16.mxu0 0
  %1436 = vmatpush1.bf16.msra.mxu0 %v999
  %1437 = vmatprep.subr.bf16.mxu0 0
  %1438 = vmatpush1.bf16.msra.mxu0 %v1000
  %1439 = vmatprep.subr.bf16.mxu0 0
  %1440 = vmatpush1.bf16.msra.mxu0 %v1001
  %1441 = vmatprep.subr.bf16.mxu0 0
  %1442 = vmatpush1.bf16.msra.mxu0 %v1002
  %1443 = vmatprep.subr.bf16.mxu0 0
  %1444 = vmatpush1.bf16.msra.mxu0 %v1003
  %1445 = vmatprep.subr.bf16.mxu0 0
  %1446 = vmatpush1.bf16.msra.mxu0 %v1004
  %1447 = vmatprep.subr.bf16.mxu0 0
  %1448 = vmatpush1.bf16.msra.mxu0 %v1005
  %1449 = vmatprep.subr.bf16.mxu0 0
  %1450 = vmatpush1.bf16.msra.mxu0 %v1006
  %1451 = vmatprep.subr.bf16.mxu0 0
  %1452 = vmatpush1.bf16.msra.mxu0 %v1007
  %1453 = vmatprep.subr.bf16.mxu0 0
  %1454 = vmatpush1.bf16.msra.mxu0 %v1008
  %1455 = vmatprep.subr.bf16.mxu0 0
  %1456 = vmatpush1.bf16.msra.mxu0 %v1009
  %1457 = vmatprep.mubr.bf16.mxu0 %v353
  %1458 = vmatmul.mubr.bf16.gmra.mrb[0].mxu0 %v352
  %v1459 = vpop.f32.mrb[0].mxu0
  %v1460 = vadd.f32 %v1419, %v1459
  %v1461 = vpop.f32.mrb[0].mxu0
  %v1462 = vpop.f32.mrb[0].mxu0
  %v1463 = vadd.f32 %v1422, %v1462
  %v1464 = vpop.f32.mrb[0].mxu0
  %1465 = vdwg.mxu0
  %v1466 = vld [vmem:[%s2] sm:$0x1]
  %v1468 = vlaneseq
  %v1469 = vshrl.u32 %v1468, 7
  %v1470 = vsub.s32 0, %v1469
  %v1471 = vrot.slane %v1466, %v1470
  %v1473 = vmul.f32 %v1460, %v1471
  %v1474 = vmul.f32 %v1463, %v1471
  %v1475 = vld [vmem:[%s3] sm:$0x1]
  %v1477 = vlaneseq
  %v1478 = vshrl.u32 %v1477, 7
  %v1479 = vsub.s32 0, %v1478
  %v1480 = vrot.slane %v1475, %v1479
  %v1482 = vadd.f32 %v1473, %v1480
  %v1483 = vadd.f32 %v1474, %v1480
  %1484 = vst [vmem:[%s4] sm:$0xff] %v1482
  %1485 = vst [vmem:[%s4 + $0x8] sm:$0xff] %v1483
  // Predicated region
  $region18: #{_lambda_.9} parent=0 // pred_check
    _
  $region19: #{_lambda_.9} parent=0 // pred_check_branch
    %1487 = sbr.rel (0) target = $region21
  $region20: #{_lambda_.9} parent=0 // pred_region
    _
  $region21: #{_lambda_.9} parent=0 // pred_fallthru
    _
  // Predicated region
  $region22: #{_lambda_.9} parent=0 // pred_check
    _
  $region23: #{_lambda_.9} parent=0 // pred_check_branch
    %1489 = sbr.rel (0) target = $region25
  $region24: #{_lambda_.9} parent=0 // pred_region
    _
  $region25: #{_lambda_.9} parent=0 // pred_fallthru
    _

</llo_original>
